<compile_context>
chip_gen: v6e
topology: v6e:2x2x1
jax: 0.10.0
libtpu: 0.0.40
codegen_flags: <defaults>
</compile_context>

<pallas_src>
import functools
import numpy as np

import jax
import jax.numpy as jnp
from jax import lax
from jax.experimental import pallas as pl
from jax.experimental.pallas import tpu as pltpu

# ----------------------------- toy config ------------------------------------
B = 2              # batch
S = 16             # sequence length (stand-in for max_length=77, padded to 8k/128)
D = 128            # hidden size (stand-in for 768) -- lane-dense
NUM_HEADS = 4      # stand-in for 12
HD = D // NUM_HEADS
FF = 4 * D         # MLP intermediate (stand-in for 3072)
NUM_LAYERS = 2     # stand-in for 12
VOCAB = 512        # stand-in for 49408 (largest id plays the role of EOS)
EPS = 1e-5
ATTN_SCALE = 1.0 / float(np.sqrt(HD))
BS = B * S

# aux slab row layout (one (8, D) f32 slab per layer):
#   0: ln1_gamma  1: ln1_beta  2: ln2_gamma  3: ln2_beta
#   4: attn_out_bias  5: fc2_bias  6,7: unused (sublane padding)


# ----------------------------- Pallas kernel ---------------------------------
def _layernorm(x, gamma, beta):
    mu = jnp.mean(x, axis=-1, keepdims=True)
    var = jnp.mean(jnp.square(x - mu), axis=-1, keepdims=True)
    return (x - mu) * lax.rsqrt(var + EPS) * gamma + beta


def clip_fused_kernel(eos_ref,                    # SMEM (B,) int32 (scalar prefetch)
                      x_ref,                      # (B, S, D)   f32  embeddings (constant block)
                      mask_ref,                   # (BS, BS)    f32  block-diag causal mask
                      wqkv_ref,                   # (1, D, 3D)  bf16 (layer l)
                      bqkv_ref,                   # (1, 1, 3D)  f32
                      wo_ref,                     # (1, D, D)   bf16
                      wfc1_ref,                   # (1, D, FF)  bf16
                      bfc1_ref,                   # (1, 1, FF)  f32
                      wfc2_ref,                   # (1, FF, D)  bf16
                      aux_ref,                    # (1, 8, D)   f32  LN params + biases
                      fln_ref,                    # (2, D)      f32  final LN gamma/beta
                      proj_ref,                   # (D, D)      f32  text_projection
                      z_ref,                      # (B, S, D)   f32  out (constant block)
                      pooled_ref,                 # (B, D)      f32  out (constant block)
                      x_sc):                      # VMEM (BS, D) f32 resident activations
    l = pl.program_id(0)

    @pl.when(l == 0)
    def _():
        x_sc[...] = x_ref[...].reshape(BS, D)

    x = x_sc[...]                                  # (BS, D) f32
    aux = aux_ref[0]                               # (8, D)  f32

    # ---- LayerNorm 1 + fused QKV projection (one full-width bf16 MXU matmul) ----
    h = _layernorm(x, aux[0:1], aux[1:2])
    qkv = jnp.dot(h.astype(jnp.bfloat16), wqkv_ref[0],
                  preferred_element_type=jnp.float32) + bqkv_ref[0]   # (BS, 3D)
    q = qkv[:, 0:D] * ATTN_SCALE                   # scale applied in f32 (exact)
    k = qkv[:, D:2 * D]
    v = qkv[:, 2 * D:3 * D]

    # ---- causal multi-head attention over the flattened (B*S) axis --------------
    # Cross-batch key positions are removed by the precomputed block-diagonal
    # causal additive mask; per-head slices are 2-D lane slices (no transposes).
    mask = mask_ref[...]                           # (BS, BS) f32, 0 / -1e9
    ctx_heads = []
    for hd in range(NUM_HEADS):
        lo, hi = hd * HD, (hd + 1) * HD
        s = lax.dot_general(q[:, lo:hi], k[:, lo:hi],
                            (((1,), (1,)), ((), ())),
                            preferred_element_type=jnp.float32)       # (BS, BS)
        s = s + mask
        s = s - jnp.max(s, axis=-1, keepdims=True)
        p = jnp.exp(s)
        p = p / jnp.sum(p, axis=-1, keepdims=True)                    # exact softmax
        ctx_heads.append(jnp.dot(p, v[:, lo:hi],
                                 preferred_element_type=jnp.float32))  # (BS, HD)
    ctx = jnp.concatenate(ctx_heads, axis=-1)                          # (BS, D)

    # ---- attention output projection, fused over heads (single (D,D) matmul) ----
    attn = jnp.dot(ctx.astype(jnp.bfloat16), wo_ref[0],
                   preferred_element_type=jnp.float32) + aux[4:5]
    x = x + attn

    # ---- LayerNorm 2 + quick_gelu MLP -------------------------------------------
    h2 = _layernorm(x, aux[2:3], aux[3:4])
    f = jnp.dot(h2.astype(jnp.bfloat16), wfc1_ref[0],
                preferred_element_type=jnp.float32) + bfc1_ref[0]      # (BS, FF)
    f = f * jax.nn.sigmoid(1.702 * f)                                   # quick_gelu (f32)
    m = jnp.dot(f.astype(jnp.bfloat16), wfc2_ref[0],
                preferred_element_type=jnp.float32) + aux[5:6]
    x = x + m
    x_sc[...] = x

    # ---- epilogue: final LayerNorm + EOS pooling + text_projection --------------
    @pl.when(l == pl.num_programs(0) - 1)
    def _():
        fln = fln_ref[...]
        z = _layernorm(x, fln[0:1], fln[1:2])                           # (BS, D)
        z_ref[...] = z.reshape(B, S, D)
        rows = []
        for bi in range(B):
            idx = eos_ref[bi]
            oh = lax.broadcasted_iota(jnp.int32, (S, 1), 0) == idx
            zb = z[bi * S:(bi + 1) * S]
            rows.append(jnp.sum(jnp.where(oh, zb, 0.0), axis=0, keepdims=True))
        pooled = jnp.concatenate(rows, axis=0)                          # (B, D)
        pooled_ref[...] = jnp.dot(pooled, proj_ref[...],
                                  preferred_element_type=jnp.float32)


# ----------------------------- wrapper ----------------------------------------
def _vmem_limit_bytes(packed):
    per_layer = 0
    for name in ("w_qkv", "b_qkv", "w_out", "w_fc1", "b_fc1", "w_fc2", "aux"):
        a = packed[name]
        per_layer += int(np.prod(a.shape[1:])) * a.dtype.itemsize
    acts = (BS * D * 4) * 6 + (BS * FF * 4) * 2 + (BS * BS * 4) * 2
    resident = (BS * D * 4) * 2 + (BS * BS * 4) + (D * D * 4) + (2 * D * 4)
    # 2x per-layer weights (double-buffered) + activations/intermediates + headroom.
    return int(min(2 * per_layer + acts + resident + (8 << 20), 64 << 20))


def _build_mask():
    # Block-diagonal causal additive mask over the flattened (B*S) axis.
    bid = np.arange(BS) // S
    pos = np.arange(BS) % S
    ok = (bid[:, None] == bid[None, :]) & (pos[:, None] >= pos[None, :])
    return jnp.asarray(np.where(ok, 0.0, -1e9).astype(np.float32))


def sd1_clip_forward(tokens, packed):
    """SD1ClipModel.forward with layer='last'.  tokens: (B, S) int32."""
    # Embedding gather (glue, left to XLA).
    x = packed["tok_emb"][tokens] + packed["pos_emb"][None, :S, :]
    x = x.astype(jnp.float32)
    eos_idx = jnp.argmax(tokens, axis=-1).astype(jnp.int32)       # EOS position per row
    mask = _build_mask()

    grid_spec = pltpu.PrefetchScalarGridSpec(
        num_scalar_prefetch=1,                    # eos_idx -> SMEM
        # Layer-only grid: whole batch is one resident block, so each layer's
        # weights are streamed exactly once.  (At large B, add a batch-block grid
        # axis marked "parallel" for megacore sharding.)
        grid=(NUM_LAYERS,),
        in_specs=[
            pl.BlockSpec((B, S, D), lambda l, eos: (0, 0, 0)),
            pl.BlockSpec((BS, BS), lambda l, eos: (0, 0)),
            pl.BlockSpec((1, D, 3 * D), lambda l, eos: (l, 0, 0)),
            pl.BlockSpec((1, 1, 3 * D), lambda l, eos: (l, 0, 0)),
            pl.BlockSpec((1, D, D), lambda l, eos: (l, 0, 0)),
            pl.BlockSpec((1, D, FF), lambda l, eos: (l, 0, 0)),
            pl.BlockSpec((1, 1, FF), lambda l, eos: (l, 0, 0)),
            pl.BlockSpec((1, FF, D), lambda l, eos: (l, 0, 0)),
            pl.BlockSpec((1, 8, D), lambda l, eos: (l, 0, 0)),
            pl.BlockSpec((2, D), lambda l, eos: (0, 0)),
            pl.BlockSpec((D, D), lambda l, eos: (0, 0)),
        ],
        out_specs=[
            pl.BlockSpec((B, S, D), lambda l, eos: (0, 0, 0)),
            pl.BlockSpec((B, D), lambda l, eos: (0, 0)),
        ],
        scratch_shapes=[pltpu.VMEM((BS, D), jnp.float32)],        # resident activations
    )

    z, pooled = pl.pallas_call(
        clip_fused_kernel,
        out_shape=(jax.ShapeDtypeStruct((B, S, D), jnp.float32),
                   jax.ShapeDtypeStruct((B, D), jnp.float32)),
        grid_spec=grid_spec,
        compiler_params=pltpu.CompilerParams(
            dimension_semantics=("arbitrary",),
            vmem_limit_bytes=_vmem_limit_bytes(packed)),
    )(eos_idx, x, mask, packed["w_qkv"], packed["b_qkv"], packed["w_out"],
      packed["w_fc1"], packed["b_fc1"], packed["w_fc2"], packed["aux"],
      packed["final_ln"], packed["text_projection"])

    return z.astype(jnp.float32), pooled.astype(jnp.float32)


# ----------------------------- parameter packing -------------------------------
def pack_params(params):
    """Stack per-layer params into kernel-friendly [L, ...] arrays: fused (D, 3D)
    QKV weight, lane-dense biases, bf16 matmul weights, (8, D) LN/bias slabs."""
    w_qkv, b_qkv, w_out, w_fc1, b_fc1, w_fc2, aux = [], [], [], [], [], [], []
    for lp in params["layers"]:
        w_qkv.append(jnp.concatenate(
            [lp["wq"], lp["wk"], lp["wv"]], axis=1).astype(jnp.bfloat16))      # (D, 3D)
        b_qkv.append(jnp.concatenate(
            [lp["bq"], lp["bk"], lp["bv"]]).reshape(1, 3 * D).astype(jnp.float32))
        w_out.append(lp["wo"].astype(jnp.bfloat16))                            # (D, D)
        w_fc1.append(lp["w1"].astype(jnp.bfloat16))                            # (D, FF)
        b_fc1.append(lp["b1"].reshape(1, FF).astype(jnp.float32))
        w_fc2.append(lp["w2"].astype(jnp.bfloat16))                            # (FF, D)
        a = jnp.zeros((8, D), jnp.float32)
        a = a.at[0].set(lp["ln1_g"]).at[1].set(lp["ln1_b"])
        a = a.at[2].set(lp["ln2_g"]).at[3].set(lp["ln2_b"])
        a = a.at[4].set(lp["bo"]).at[5].set(lp["b2"])
        aux.append(a)

    return {
        "tok_emb": params["tok_emb"],
        "pos_emb": params["pos_emb"],
        "w_qkv": jnp.stack(w_qkv),              # (L, D, 3D)  bf16
        "b_qkv": jnp.stack(b_qkv),              # (L, 1, 3D)  f32
        "w_out": jnp.stack(w_out),              # (L, D, D)   bf16
        "w_fc1": jnp.stack(w_fc1),              # (L, D, FF)  bf16
        "b_fc1": jnp.stack(b_fc1),              # (L, 1, FF)  f32
        "w_fc2": jnp.stack(w_fc2),              # (L, FF, D)  bf16
        "aux": jnp.stack(aux),                  # (L, 8, D)   f32
        "final_ln": jnp.stack([params["final_ln_g"], params["final_ln_b"]]),  # (2, D)
        "text_projection": params["text_projection"],                          # (D, D)
    }


# ----------------------------- pure-JAX reference ------------------------------
def reference_forward(tokens, params):
    x = (params["tok_emb"][tokens] + params["pos_emb"][None, :S, :]).astype(jnp.float32)
    causal = jnp.asarray(np.tril(np.ones((S, S), dtype=bool)))

    def ln(v, g, b):
        mu = jnp.mean(v, -1, keepdims=True)
        var = jnp.mean(jnp.square(v - mu), -1, keepdims=True)
        return (v - mu) * lax.rsqrt(var + EPS) * g + b

    for lp in params["layers"]:
        h = ln(x, lp["ln1_g"], lp["ln1_b"])
        q = h @ lp["wq"].astype(jnp.float32) + lp["bq"]
        k = h @ lp["wk"].astype(jnp.float32) + lp["bk"]
        v = h @ lp["wv"].astype(jnp.float32) + lp["bv"]
        q = (q * ATTN_SCALE).reshape(B, S, NUM_HEADS, HD)
        k = k.reshape(B, S, NUM_HEADS, HD)
        v = v.reshape(B, S, NUM_HEADS, HD)
        s = jnp.einsum("bqhd,bkhd->bhqk", q, k)
        s = jnp.where(causal[None, None], s, -1e9)
        p = jax.nn.softmax(s, axis=-1)
        a = jnp.einsum("bhqk,bkhd->bqhd", p, v).reshape(B, S, D)
        x = x + (a @ lp["wo"].astype(jnp.float32) + lp["bo"])
        h2 = ln(x, lp["ln2_g"], lp["ln2_b"])
        f = h2 @ lp["w1"].astype(jnp.float32) + lp["b1"]
        f = f * jax.nn.sigmoid(1.702 * f)
        x = x + (f @ lp["w2"].astype(jnp.float32) + lp["b2"])

    z = ln(x, params["final_ln_g"], params["final_ln_b"])
    eos_idx = jnp.argmax(tokens, axis=-1)
    pooled = z[jnp.arange(B), eos_idx] @ params["text_projection"]
    return z, pooled


# ----------------------------- deterministic params ----------------------------
def build_params(key):
    def nrm(k, shape, scale=0.05, dtype=jnp.float32):
        return (scale * jax.random.normal(k, shape, jnp.float32)).astype(dtype)

    keys = jax.random.split(key, 3 + NUM_LAYERS)
    k_fg, k_fb = jax.random.split(keys[2])
    params = {
        "tok_emb": nrm(keys[0], (VOCAB, D), 0.02),
        "pos_emb": nrm(keys[1], (S, D), 0.02),
        "final_ln_g": 1.0 + nrm(k_fg, (D,), 0.05),
        "final_ln_b": nrm(k_fb, (D,), 0.05),
        "text_projection": jnp.eye(D, dtype=jnp.float32),   # nn.Parameter(torch.eye(D))
        "logit_scale": jnp.float32(4.6055),                 # unused in forward
        "layers": [],
    }
    bf16 = jnp.bfloat16
    for li in range(NUM_LAYERS):
        lk = jax.random.split(keys[3 + li], 16)
        params["layers"].append({
            "ln1_g": 1.0 + nrm(lk[0], (D,)), "ln1_b": nrm(lk[1], (D,)),
            "wq": nrm(lk[2], (D, D), dtype=bf16), "bq": nrm(lk[3], (D,), 0.02),
            "wk": nrm(lk[4], (D, D), dtype=bf16), "bk": nrm(lk[5], (D,), 0.02),
            "wv": nrm(lk[6], (D, D), dtype=bf16), "bv": nrm(lk[7], (D,), 0.02),
            "wo": nrm(lk[8], (D, D), dtype=bf16), "bo": nrm(lk[9], (D,), 0.02),
            "ln2_g": 1.0 + nrm(lk[10], (D,)), "ln2_b": nrm(lk[11], (D,)),
            "w1": nrm(lk[12], (D, FF), dtype=bf16), "b1": nrm(lk[13], (FF,), 0.02),
            "w2": nrm(lk[14], (FF, D), dtype=bf16), "b2": nrm(lk[15], (D,), 0.02),
        })
    return params


# ----------------------------- main --------------------------------------------
if __name__ == "__main__":
    key = jax.random.PRNGKey(0)
    kp, kt = jax.random.split(key)
    params = build_params(kp)
    packed = pack_params(params)

    # tokens: BOS-analog (id 0) + random content + EOS-analog (highest id, last slot)
    tokens = jax.random.randint(kt, (B, S), 1, VOCAB - 1, dtype=jnp.int32)
    tokens = tokens.at[:, 0].set(0).at[:, -1].set(VOCAB - 1)

    fwd = jax.jit(functools.partial(sd1_clip_forward, packed=packed))
    z, pooled = fwd(tokens)
    jax.block_until_ready((z, pooled))

    assert z.shape == (B, S, D) and z.dtype == jnp.float32
    assert pooled.shape == (B, D) and pooled.dtype == jnp.float32

    # Reference is full f32 (bf16 weights upcast); kernel feeds bf16 activations to
    # the weight matmuls with f32 accumulation, so allow a slightly looser tolerance.
    z_ref, pooled_ref = reference_forward(tokens, params)
    np.testing.assert_allclose(np.asarray(z), np.asarray(z_ref), atol=2e-2, rtol=2e-2)
    np.testing.assert_allclose(np.asarray(pooled), np.asarray(pooled_ref),
                               atol=2e-2, rtol=2e-2)

    print("KERNEL_OK")
</pallas_src>

<mosaic_0001>
module attributes {stable_mosaic.version = 11 : i64} {
  func.func @clip_fused_kernel(%arg0: i32, %arg1: memref<2xi32, #tpu.memory_space<smem>>, %arg2: memref<2x16x128xf32, #tpu.memory_space<vmem>>, %arg3: memref<32x32xf32, #tpu.memory_space<vmem>>, %arg4: memref<1x128x384xbf16, #tpu.memory_space<vmem>>, %arg5: memref<1x1x384xf32, #tpu.memory_space<vmem>>, %arg6: memref<1x128x128xbf16, #tpu.memory_space<vmem>>, %arg7: memref<1x128x512xbf16, #tpu.memory_space<vmem>>, %arg8: memref<1x1x512xf32, #tpu.memory_space<vmem>>, %arg9: memref<1x512x128xbf16, #tpu.memory_space<vmem>>, %arg10: memref<1x8x128xf32, #tpu.memory_space<vmem>>, %arg11: memref<2x128xf32, #tpu.memory_space<vmem>>, %arg12: memref<128x128xf32, #tpu.memory_space<vmem>>, %arg13: memref<2x16x128xf32, #tpu.memory_space<vmem>>, %arg14: memref<2x128xf32, #tpu.memory_space<vmem>>, %arg15: memref<32x128xf32, #tpu.memory_space<vmem>>) attributes {dimension_semantics = [#tpu.dimension_semantics<arbitrary>], iteration_bounds = array<i64: 2>, scalar_prefetch = 1 : i64, scratch_operands = 1 : i64, tpu.core_type = #tpu.core_type<tc>, window_params = [{pipeline_mode = #tpu.pipeline_mode<synchronous>, transform_indices = @transform_0, window_bounds = array<i64: 2, 16, 128>}, {pipeline_mode = #tpu.pipeline_mode<synchronous>, transform_indices = @transform_1, window_bounds = array<i64: 32, 32>}, {transform_indices = @transform_2, window_bounds = array<i64: 1, 128, 384>}, {transform_indices = @transform_3, window_bounds = array<i64: 1, 1, 384>}, {transform_indices = @transform_4, window_bounds = array<i64: 1, 128, 128>}, {transform_indices = @transform_5, window_bounds = array<i64: 1, 128, 512>}, {transform_indices = @transform_6, window_bounds = array<i64: 1, 1, 512>}, {transform_indices = @transform_7, window_bounds = array<i64: 1, 512, 128>}, {transform_indices = @transform_8, window_bounds = array<i64: 1, 8, 128>}, {pipeline_mode = #tpu.pipeline_mode<synchronous>, transform_indices = @transform_9, window_bounds = array<i64: 2, 128>}, {pipeline_mode = #tpu.pipeline_mode<synchronous>, transform_indices = @transform_10, window_bounds = array<i64: 128, 128>}, {pipeline_mode = #tpu.pipeline_mode<synchronous>, transform_indices = @transform_11, window_bounds = array<i64: 2, 16, 128>}, {pipeline_mode = #tpu.pipeline_mode<synchronous>, transform_indices = @transform_12, window_bounds = array<i64: 2, 128>}]} {
    %c0_i32 = arith.constant 0 : i32
    %0 = arith.cmpi eq, %arg0, %c0_i32 : i32
    %1 = arith.extui %0 : i1 to i32
    %c0_i32_0 = arith.constant 0 : i32
    %2 = arith.cmpi ne, %1, %c0_i32_0 : i32
    scf.if %2 {
      %c0_60 = arith.constant 0 : index
      %c0_61 = arith.constant 0 : index
      %c0_62 = arith.constant 0 : index
      %165 = vector.load %arg2[%c0_60, %c0_61, %c0_62] : memref<2x16x128xf32, #tpu.memory_space<vmem>>, vector<2x16x128xf32>
      %166 = vector.shape_cast %165 : vector<2x16x128xf32> to vector<32x128xf32>
      %c0_63 = arith.constant 0 : index
      %c0_64 = arith.constant 0 : index
      %167 = vector.load %arg15[%c0_63, %c0_64] : memref<32x128xf32, #tpu.memory_space<vmem>>, vector<32x128xf32>
      tpu.vector_store %arg15[%c0_63, %c0_64], %166 {strides = array<i32>} : memref<32x128xf32, #tpu.memory_space<vmem>>, vector<32x128xf32>,
    } else {
    }
    %c0 = arith.constant 0 : index
    %c0_1 = arith.constant 0 : index
    %3 = vector.load %arg15[%c0, %c0_1] : memref<32x128xf32, #tpu.memory_space<vmem>>, vector<32x128xf32>
    %c0_2 = arith.constant 0 : index
    %c0_3 = arith.constant 0 : index
    %c0_4 = arith.constant 0 : index
    %4 = vector.load %arg10[%c0_2, %c0_3, %c0_4] : memref<1x8x128xf32, #tpu.memory_space<vmem>>, vector<1x8x128xf32>
    %5 = vector.shape_cast %4 : vector<1x8x128xf32> to vector<8x128xf32>
    %6 = vector.extract_strided_slice %5 {offsets = [0, 0], sizes = [1, 128], strides = [1, 1]} : vector<8x128xf32> to vector<1x128xf32>
    %7 = vector.extract_strided_slice %5 {offsets = [1, 0], sizes = [1, 128], strides = [1, 1]} : vector<8x128xf32> to vector<1x128xf32>
    %cst = arith.constant dense<0.000000e+00> : vector<32xf32>
    %8 = vector.multi_reduction <add>, %3, %cst [1] : vector<32x128xf32> to vector<32xf32>
    %9 = vector.shape_cast %8 : vector<32xf32> to vector<32x1xf32>
    %cst_5 = arith.constant 1.280000e+02 : f32
    %10 = vector.broadcast %cst_5 : f32 to vector<32x1xf32>
    %11 = arith.divf %9, %10 : vector<32x1xf32>
    %12 = vector.broadcast %11 : vector<32x1xf32> to vector<32x128xf32>
    %13 = arith.subf %3, %12 : vector<32x128xf32>
    %14 = arith.mulf %13, %13 : vector<32x128xf32>
    %cst_6 = arith.constant dense<0.000000e+00> : vector<32xf32>
    %15 = vector.multi_reduction <add>, %14, %cst_6 [1] : vector<32x128xf32> to vector<32xf32>
    %16 = vector.shape_cast %15 : vector<32xf32> to vector<32x1xf32>
    %cst_7 = arith.constant 1.280000e+02 : f32
    %17 = vector.broadcast %cst_7 : f32 to vector<32x1xf32>
    %18 = arith.divf %16, %17 : vector<32x1xf32>
    %19 = vector.broadcast %11 : vector<32x1xf32> to vector<32x128xf32>
    %20 = arith.subf %3, %19 : vector<32x128xf32>
    %cst_8 = arith.constant 9.99999974E-6 : f32
    %21 = vector.broadcast %cst_8 : f32 to vector<32x1xf32>
    %22 = arith.addf %18, %21 : vector<32x1xf32>
    %23 = math.rsqrt %22 : vector<32x1xf32>
    %24 = vector.broadcast %23 : vector<32x1xf32> to vector<32x128xf32>
    %25 = arith.mulf %20, %24 : vector<32x128xf32>
    %26 = vector.broadcast %6 : vector<1x128xf32> to vector<32x128xf32>
    %27 = arith.mulf %25, %26 : vector<32x128xf32>
    %28 = vector.broadcast %7 : vector<1x128xf32> to vector<32x128xf32>
    %29 = arith.addf %27, %28 : vector<32x128xf32>
    %30 = arith.truncf %29 : vector<32x128xf32> to vector<32x128xbf16>
    %c0_9 = arith.constant 0 : index
    %c0_10 = arith.constant 0 : index
    %c0_11 = arith.constant 0 : index
    %31 = vector.load %arg4[%c0_9, %c0_10, %c0_11] : memref<1x128x384xbf16, #tpu.memory_space<vmem>>, vector<1x128x384xbf16>
    %32 = vector.shape_cast %31 : vector<1x128x384xbf16> to vector<128x384xbf16>
    %cst_12 = arith.constant dense<0.000000e+00> : vector<32x384xf32>
    %33 = tpu.matmul %30, %32, %cst_12 {dimension_numbers = #tpu.dot_dimension_numbers<[1], [0], [0], [1], [0, 0, 1, 1], [], []>} : vector<32x128xbf16>, vector<128x384xbf16>, vector<32x384xf32> -> vector<32x384xf32>
    %c0_13 = arith.constant 0 : index
    %c0_14 = arith.constant 0 : index
    %c0_15 = arith.constant 0 : index
    %34 = vector.load %arg5[%c0_13, %c0_14, %c0_15] : memref<1x1x384xf32, #tpu.memory_space<vmem>>, vector<1x1x384xf32>
    %35 = vector.shape_cast %34 : vector<1x1x384xf32> to vector<1x384xf32>
    %36 = vector.broadcast %35 : vector<1x384xf32> to vector<32x384xf32>
    %37 = arith.addf %33, %36 : vector<32x384xf32>
    %38 = vector.extract_strided_slice %37 {offsets = [0, 0], sizes = [32, 128], strides = [1, 1]} : vector<32x384xf32> to vector<32x128xf32>
    %cst_16 = arith.constant 0.176776692 : f32
    %39 = vector.broadcast %cst_16 : f32 to vector<32x128xf32>
    %40 = arith.mulf %38, %39 : vector<32x128xf32>
    %41 = vector.extract_strided_slice %37 {offsets = [0, 128], sizes = [32, 128], strides = [1, 1]} : vector<32x384xf32> to vector<32x128xf32>
    %42 = vector.extract_strided_slice %37 {offsets = [0, 256], sizes = [32, 128], strides = [1, 1]} : vector<32x384xf32> to vector<32x128xf32>
    %c0_17 = arith.constant 0 : index
    %c0_18 = arith.constant 0 : index
    %43 = vector.load %arg3[%c0_17, %c0_18] : memref<32x32xf32, #tpu.memory_space<vmem>>, vector<32x32xf32>
    %44 = vector.extract_strided_slice %40 {offsets = [0, 0], sizes = [32, 32], strides = [1, 1]} : vector<32x128xf32> to vector<32x32xf32>
    %45 = vector.extract_strided_slice %41 {offsets = [0, 0], sizes = [32, 32], strides = [1, 1]} : vector<32x128xf32> to vector<32x32xf32>
    %cst_19 = arith.constant dense<0.000000e+00> : vector<32x32xf32>
    %46 = tpu.matmul %44, %45, %cst_19 {dimension_numbers = #tpu.dot_dimension_numbers<[1], [1], [0], [0], [0, 0, 1, 0], [], []>} : vector<32x32xf32>, vector<32x32xf32>, vector<32x32xf32> -> vector<32x32xf32>
    %47 = arith.addf %46, %43 : vector<32x32xf32>
    %cst_20 = arith.constant dense<0xFF800000> : vector<32xf32>
    %48 = vector.multi_reduction <maximumf>, %47, %cst_20 [1] : vector<32x32xf32> to vector<32xf32>
    %49 = vector.shape_cast %48 : vector<32xf32> to vector<32x1xf32>
    %50 = vector.broadcast %49 : vector<32x1xf32> to vector<32x32xf32>
    %51 = arith.subf %47, %50 : vector<32x32xf32>
    %52 = math.exp %51 : vector<32x32xf32>
    %cst_21 = arith.constant dense<0.000000e+00> : vector<32xf32>
    %53 = vector.multi_reduction <add>, %52, %cst_21 [1] : vector<32x32xf32> to vector<32xf32>
    %54 = vector.shape_cast %53 : vector<32xf32> to vector<32x1xf32>
    %55 = vector.broadcast %54 : vector<32x1xf32> to vector<32x32xf32>
    %56 = arith.divf %52, %55 : vector<32x32xf32>
    %57 = vector.extract_strided_slice %42 {offsets = [0, 0], sizes = [32, 32], strides = [1, 1]} : vector<32x128xf32> to vector<32x32xf32>
    %cst_22 = arith.constant dense<0.000000e+00> : vector<32x32xf32>
    %58 = tpu.matmul %56, %57, %cst_22 {dimension_numbers = #tpu.dot_dimension_numbers<[1], [0], [0], [1], [0, 0, 1, 1], [], []>} : vector<32x32xf32>, vector<32x32xf32>, vector<32x32xf32> -> vector<32x32xf32>
    %59 = vector.extract_strided_slice %40 {offsets = [0, 32], sizes = [32, 32], strides = [1, 1]} : vector<32x128xf32> to vector<32x32xf32>
    %60 = vector.extract_strided_slice %41 {offsets = [0, 32], sizes = [32, 32], strides = [1, 1]} : vector<32x128xf32> to vector<32x32xf32>
    %cst_23 = arith.constant dense<0.000000e+00> : vector<32x32xf32>
    %61 = tpu.matmul %59, %60, %cst_23 {dimension_numbers = #tpu.dot_dimension_numbers<[1], [1], [0], [0], [0, 0, 1, 0], [], []>} : vector<32x32xf32>, vector<32x32xf32>, vector<32x32xf32> -> vector<32x32xf32>
    %62 = arith.addf %61, %43 : vector<32x32xf32>
    %cst_24 = arith.constant dense<0xFF800000> : vector<32xf32>
    %63 = vector.multi_reduction <maximumf>, %62, %cst_24 [1] : vector<32x32xf32> to vector<32xf32>
    %64 = vector.shape_cast %63 : vector<32xf32> to vector<32x1xf32>
    %65 = vector.broadcast %64 : vector<32x1xf32> to vector<32x32xf32>
    %66 = arith.subf %62, %65 : vector<32x32xf32>
    %67 = math.exp %66 : vector<32x32xf32>
    %cst_25 = arith.constant dense<0.000000e+00> : vector<32xf32>
    %68 = vector.multi_reduction <add>, %67, %cst_25 [1] : vector<32x32xf32> to vector<32xf32>
    %69 = vector.shape_cast %68 : vector<32xf32> to vector<32x1xf32>
    %70 = vector.broadcast %69 : vector<32x1xf32> to vector<32x32xf32>
    %71 = arith.divf %67, %70 : vector<32x32xf32>
    %72 = vector.extract_strided_slice %42 {offsets = [0, 32], sizes = [32, 32], strides = [1, 1]} : vector<32x128xf32> to vector<32x32xf32>
    %cst_26 = arith.constant dense<0.000000e+00> : vector<32x32xf32>
    %73 = tpu.matmul %71, %72, %cst_26 {dimension_numbers = #tpu.dot_dimension_numbers<[1], [0], [0], [1], [0, 0, 1, 1], [], []>} : vector<32x32xf32>, vector<32x32xf32>, vector<32x32xf32> -> vector<32x32xf32>
    %74 = vector.extract_strided_slice %40 {offsets = [0, 64], sizes = [32, 32], strides = [1, 1]} : vector<32x128xf32> to vector<32x32xf32>
    %75 = vector.extract_strided_slice %41 {offsets = [0, 64], sizes = [32, 32], strides = [1, 1]} : vector<32x128xf32> to vector<32x32xf32>
    %cst_27 = arith.constant dense<0.000000e+00> : vector<32x32xf32>
    %76 = tpu.matmul %74, %75, %cst_27 {dimension_numbers = #tpu.dot_dimension_numbers<[1], [1], [0], [0], [0, 0, 1, 0], [], []>} : vector<32x32xf32>, vector<32x32xf32>, vector<32x32xf32> -> vector<32x32xf32>
    %77 = arith.addf %76, %43 : vector<32x32xf32>
    %cst_28 = arith.constant dense<0xFF800000> : vector<32xf32>
    %78 = vector.multi_reduction <maximumf>, %77, %cst_28 [1] : vector<32x32xf32> to vector<32xf32>
    %79 = vector.shape_cast %78 : vector<32xf32> to vector<32x1xf32>
    %80 = vector.broadcast %79 : vector<32x1xf32> to vector<32x32xf32>
    %81 = arith.subf %77, %80 : vector<32x32xf32>
    %82 = math.exp %81 : vector<32x32xf32>
    %cst_29 = arith.constant dense<0.000000e+00> : vector<32xf32>
    %83 = vector.multi_reduction <add>, %82, %cst_29 [1] : vector<32x32xf32> to vector<32xf32>
    %84 = vector.shape_cast %83 : vector<32xf32> to vector<32x1xf32>
    %85 = vector.broadcast %84 : vector<32x1xf32> to vector<32x32xf32>
    %86 = arith.divf %82, %85 : vector<32x32xf32>
    %87 = vector.extract_strided_slice %42 {offsets = [0, 64], sizes = [32, 32], strides = [1, 1]} : vector<32x128xf32> to vector<32x32xf32>
    %cst_30 = arith.constant dense<0.000000e+00> : vector<32x32xf32>
    %88 = tpu.matmul %86, %87, %cst_30 {dimension_numbers = #tpu.dot_dimension_numbers<[1], [0], [0], [1], [0, 0, 1, 1], [], []>} : vector<32x32xf32>, vector<32x32xf32>, vector<32x32xf32> -> vector<32x32xf32>
    %89 = vector.extract_strided_slice %40 {offsets = [0, 96], sizes = [32, 32], strides = [1, 1]} : vector<32x128xf32> to vector<32x32xf32>
    %90 = vector.extract_strided_slice %41 {offsets = [0, 96], sizes = [32, 32], strides = [1, 1]} : vector<32x128xf32> to vector<32x32xf32>
    %cst_31 = arith.constant dense<0.000000e+00> : vector<32x32xf32>
    %91 = tpu.matmul %89, %90, %cst_31 {dimension_numbers = #tpu.dot_dimension_numbers<[1], [1], [0], [0], [0, 0, 1, 0], [], []>} : vector<32x32xf32>, vector<32x32xf32>, vector<32x32xf32> -> vector<32x32xf32>
    %92 = arith.addf %91, %43 : vector<32x32xf32>
    %cst_32 = arith.constant dense<0xFF800000> : vector<32xf32>
    %93 = vector.multi_reduction <maximumf>, %92, %cst_32 [1] : vector<32x32xf32> to vector<32xf32>
    %94 = vector.shape_cast %93 : vector<32xf32> to vector<32x1xf32>
    %95 = vector.broadcast %94 : vector<32x1xf32> to vector<32x32xf32>
    %96 = arith.subf %92, %95 : vector<32x32xf32>
    %97 = math.exp %96 : vector<32x32xf32>
    %cst_33 = arith.constant dense<0.000000e+00> : vector<32xf32>
    %98 = vector.multi_reduction <add>, %97, %cst_33 [1] : vector<32x32xf32> to vector<32xf32>
    %99 = vector.shape_cast %98 : vector<32xf32> to vector<32x1xf32>
    %100 = vector.broadcast %99 : vector<32x1xf32> to vector<32x32xf32>
    %101 = arith.divf %97, %100 : vector<32x32xf32>
    %102 = vector.extract_strided_slice %42 {offsets = [0, 96], sizes = [32, 32], strides = [1, 1]} : vector<32x128xf32> to vector<32x32xf32>
    %cst_34 = arith.constant dense<0.000000e+00> : vector<32x32xf32>
    %103 = tpu.matmul %101, %102, %cst_34 {dimension_numbers = #tpu.dot_dimension_numbers<[1], [0], [0], [1], [0, 0, 1, 1], [], []>} : vector<32x32xf32>, vector<32x32xf32>, vector<32x32xf32> -> vector<32x32xf32>
    %104 = tpu.concatenate %58, %73, %88, %103 in 1 : vector<32x32xf32>, vector<32x32xf32>, vector<32x32xf32>, vector<32x32xf32> -> vector<32x128xf32>
    %105 = arith.truncf %104 : vector<32x128xf32> to vector<32x128xbf16>
    %c0_35 = arith.constant 0 : index
    %c0_36 = arith.constant 0 : index
    %c0_37 = arith.constant 0 : index
    %106 = vector.load %arg6[%c0_35, %c0_36, %c0_37] : memref<1x128x128xbf16, #tpu.memory_space<vmem>>, vector<1x128x128xbf16>
    %107 = vector.shape_cast %106 : vector<1x128x128xbf16> to vector<128x128xbf16>
    %cst_38 = arith.constant dense<0.000000e+00> : vector<32x128xf32>
    %108 = tpu.matmul %105, %107, %cst_38 {dimension_numbers = #tpu.dot_dimension_numbers<[1], [0], [0], [1], [0, 0, 1, 1], [], []>} : vector<32x128xbf16>, vector<128x128xbf16>, vector<32x128xf32> -> vector<32x128xf32>
    %109 = vector.extract_strided_slice %5 {offsets = [4, 0], sizes = [1, 128], strides = [1, 1]} : vector<8x128xf32> to vector<1x128xf32>
    %110 = vector.broadcast %109 : vector<1x128xf32> to vector<32x128xf32>
    %111 = arith.addf %108, %110 : vector<32x128xf32>
    %112 = arith.addf %3, %111 : vector<32x128xf32>
    %113 = vector.extract_strided_slice %5 {offsets = [2, 0], sizes = [1, 128], strides = [1, 1]} : vector<8x128xf32> to vector<1x128xf32>
    %114 = vector.extract_strided_slice %5 {offsets = [3, 0], sizes = [1, 128], strides = [1, 1]} : vector<8x128xf32> to vector<1x128xf32>
    %cst_39 = arith.constant dense<0.000000e+00> : vector<32xf32>
    %115 = vector.multi_reduction <add>, %112, %cst_39 [1] : vector<32x128xf32> to vector<32xf32>
    %116 = vector.shape_cast %115 : vector<32xf32> to vector<32x1xf32>
    %cst_40 = arith.constant 1.280000e+02 : f32
    %117 = vector.broadcast %cst_40 : f32 to vector<32x1xf32>
    %118 = arith.divf %116, %117 : vector<32x1xf32>
    %119 = vector.broadcast %118 : vector<32x1xf32> to vector<32x128xf32>
    %120 = arith.subf %112, %119 : vector<32x128xf32>
    %121 = arith.mulf %120, %120 : vector<32x128xf32>
    %cst_41 = arith.constant dense<0.000000e+00> : vector<32xf32>
    %122 = vector.multi_reduction <add>, %121, %cst_41 [1] : vector<32x128xf32> to vector<32xf32>
    %123 = vector.shape_cast %122 : vector<32xf32> to vector<32x1xf32>
    %cst_42 = arith.constant 1.280000e+02 : f32
    %124 = vector.broadcast %cst_42 : f32 to vector<32x1xf32>
    %125 = arith.divf %123, %124 : vector<32x1xf32>
    %126 = vector.broadcast %118 : vector<32x1xf32> to vector<32x128xf32>
    %127 = arith.subf %112, %126 : vector<32x128xf32>
    %cst_43 = arith.constant 9.99999974E-6 : f32
    %128 = vector.broadcast %cst_43 : f32 to vector<32x1xf32>
    %129 = arith.addf %125, %128 : vector<32x1xf32>
    %130 = math.rsqrt %129 : vector<32x1xf32>
    %131 = vector.broadcast %130 : vector<32x1xf32> to vector<32x128xf32>
    %132 = arith.mulf %127, %131 : vector<32x128xf32>
    %133 = vector.broadcast %113 : vector<1x128xf32> to vector<32x128xf32>
    %134 = arith.mulf %132, %133 : vector<32x128xf32>
    %135 = vector.broadcast %114 : vector<1x128xf32> to vector<32x128xf32>
    %136 = arith.addf %134, %135 : vector<32x128xf32>
    %137 = arith.truncf %136 : vector<32x128xf32> to vector<32x128xbf16>
    %c0_44 = arith.constant 0 : index
    %c0_45 = arith.constant 0 : index
    %c0_46 = arith.constant 0 : index
    %138 = vector.load %arg7[%c0_44, %c0_45, %c0_46] : memref<1x128x512xbf16, #tpu.memory_space<vmem>>, vector<1x128x512xbf16>
    %139 = vector.shape_cast %138 : vector<1x128x512xbf16> to vector<128x512xbf16>
    %cst_47 = arith.constant dense<0.000000e+00> : vector<32x512xf32>
    %140 = tpu.matmul %137, %139, %cst_47 {dimension_numbers = #tpu.dot_dimension_numbers<[1], [0], [0], [1], [0, 0, 1, 1], [], []>} : vector<32x128xbf16>, vector<128x512xbf16>, vector<32x512xf32> -> vector<32x512xf32>
    %c0_48 = arith.constant 0 : index
    %c0_49 = arith.constant 0 : index
    %c0_50 = arith.constant 0 : index
    %141 = vector.load %arg8[%c0_48, %c0_49, %c0_50] : memref<1x1x512xf32, #tpu.memory_space<vmem>>, vector<1x1x512xf32>
    %142 = vector.shape_cast %141 : vector<1x1x512xf32> to vector<1x512xf32>
    %143 = vector.broadcast %142 : vector<1x512xf32> to vector<32x512xf32>
    %144 = arith.addf %140, %143 : vector<32x512xf32>
    %cst_51 = arith.constant 1.702000e+00 : f32
    %145 = vector.broadcast %cst_51 : f32 to vector<32x512xf32>
    %146 = arith.mulf %145, %144 : vector<32x512xf32>
    %147 = arith.negf %146 : vector<32x512xf32>
    %148 = math.exp %147 : vector<32x512xf32>
    %cst_52 = arith.constant 1.000000e+00 : f32
    %149 = vector.broadcast %cst_52 : f32 to vector<32x512xf32>
    %150 = arith.addf %149, %148 : vector<32x512xf32>
    %151 = arith.divf %149, %150 : vector<32x512xf32>
    %152 = arith.mulf %144, %151 : vector<32x512xf32>
    %153 = arith.truncf %152 : vector<32x512xf32> to vector<32x512xbf16>
    %c0_53 = arith.constant 0 : index
    %c0_54 = arith.constant 0 : index
    %c0_55 = arith.constant 0 : index
    %154 = vector.load %arg9[%c0_53, %c0_54, %c0_55] : memref<1x512x128xbf16, #tpu.memory_space<vmem>>, vector<1x512x128xbf16>
    %155 = vector.shape_cast %154 : vector<1x512x128xbf16> to vector<512x128xbf16>
    %cst_56 = arith.constant dense<0.000000e+00> : vector<32x128xf32>
    %156 = tpu.matmul %153, %155, %cst_56 {dimension_numbers = #tpu.dot_dimension_numbers<[1], [0], [0], [1], [0, 0, 1, 1], [], []>} : vector<32x512xbf16>, vector<512x128xbf16>, vector<32x128xf32> -> vector<32x128xf32>
    %157 = vector.extract_strided_slice %5 {offsets = [5, 0], sizes = [1, 128], strides = [1, 1]} : vector<8x128xf32> to vector<1x128xf32>
    %158 = vector.broadcast %157 : vector<1x128xf32> to vector<32x128xf32>
    %159 = arith.addf %156, %158 : vector<32x128xf32>
    %160 = arith.addf %112, %159 : vector<32x128xf32>
    %c0_57 = arith.constant 0 : index
    %c0_58 = arith.constant 0 : index
    %161 = vector.load %arg15[%c0_57, %c0_58] : memref<32x128xf32, #tpu.memory_space<vmem>>, vector<32x128xf32>
    tpu.vector_store %arg15[%c0_57, %c0_58], %160 {strides = array<i32>} : memref<32x128xf32, #tpu.memory_space<vmem>>, vector<32x128xf32>,
    %c1_i32 = arith.constant 1 : i32
    %162 = arith.cmpi eq, %arg0, %c1_i32 : i32
    %163 = arith.extui %162 : i1 to i32
    %c0_i32_59 = arith.constant 0 : i32
    %164 = arith.cmpi ne, %163, %c0_i32_59 : i32
    scf.if %164 {
      %c0_60 = arith.constant 0 : index
      %c0_61 = arith.constant 0 : index
      %165 = vector.load %arg11[%c0_60, %c0_61] : memref<2x128xf32, #tpu.memory_space<vmem>>, vector<2x128xf32>
      %166 = vector.extract_strided_slice %165 {offsets = [0, 0], sizes = [1, 128], strides = [1, 1]} : vector<2x128xf32> to vector<1x128xf32>
      %167 = vector.extract_strided_slice %165 {offsets = [1, 0], sizes = [1, 128], strides = [1, 1]} : vector<2x128xf32> to vector<1x128xf32>
      %cst_62 = arith.constant dense<0.000000e+00> : vector<32xf32>
      %168 = vector.multi_reduction <add>, %160, %cst_62 [1] : vector<32x128xf32> to vector<32xf32>
      %169 = vector.shape_cast %168 : vector<32xf32> to vector<32x1xf32>
      %cst_63 = arith.constant 1.280000e+02 : f32
      %170 = vector.broadcast %cst_63 : f32 to vector<32x1xf32>
      %171 = arith.divf %169, %170 : vector<32x1xf32>
      %172 = vector.broadcast %171 : vector<32x1xf32> to vector<32x128xf32>
      %173 = arith.subf %160, %172 : vector<32x128xf32>
      %174 = arith.mulf %173, %173 : vector<32x128xf32>
      %cst_64 = arith.constant dense<0.000000e+00> : vector<32xf32>
      %175 = vector.multi_reduction <add>, %174, %cst_64 [1] : vector<32x128xf32> to vector<32xf32>
      %176 = vector.shape_cast %175 : vector<32xf32> to vector<32x1xf32>
      %cst_65 = arith.constant 1.280000e+02 : f32
      %177 = vector.broadcast %cst_65 : f32 to vector<32x1xf32>
      %178 = arith.divf %176, %177 : vector<32x1xf32>
      %179 = vector.broadcast %171 : vector<32x1xf32> to vector<32x128xf32>
      %180 = arith.subf %160, %179 : vector<32x128xf32>
      %cst_66 = arith.constant 9.99999974E-6 : f32
      %181 = vector.broadcast %cst_66 : f32 to vector<32x1xf32>
      %182 = arith.addf %178, %181 : vector<32x1xf32>
      %183 = math.rsqrt %182 : vector<32x1xf32>
      %184 = vector.broadcast %183 : vector<32x1xf32> to vector<32x128xf32>
      %185 = arith.mulf %180, %184 : vector<32x128xf32>
      %186 = vector.broadcast %166 : vector<1x128xf32> to vector<32x128xf32>
      %187 = arith.mulf %185, %186 : vector<32x128xf32>
      %188 = vector.broadcast %167 : vector<1x128xf32> to vector<32x128xf32>
      %189 = arith.addf %187, %188 : vector<32x128xf32>
      %190 = vector.shape_cast %189 : vector<32x128xf32> to vector<2x16x128xf32>
      %c0_67 = arith.constant 0 : index
      %c0_68 = arith.constant 0 : index
      %c0_69 = arith.constant 0 : index
      %191 = vector.load %arg13[%c0_67, %c0_68, %c0_69] : memref<2x16x128xf32, #tpu.memory_space<vmem>>, vector<2x16x128xf32>
      tpu.vector_store %arg13[%c0_67, %c0_68, %c0_69], %190 {strides = array<i32>} : memref<2x16x128xf32, #tpu.memory_space<vmem>>, vector<2x16x128xf32>,
      %c0_70 = arith.constant 0 : index
      %192 = memref.load %arg1[%c0_70] : memref<2xi32, #tpu.memory_space<smem>>
      %193 = tpu.iota {dimensions = array<i32: 0>} : vector<16x1xi32>
      %194 = vector.broadcast %192 : i32 to vector<16x1xi32>
      %195 = arith.cmpi eq, %193, %194 : vector<16x1xi32>
      %196 = vector.extract_strided_slice %189 {offsets = [0, 0], sizes = [16, 128], strides = [1, 1]} : vector<32x128xf32> to vector<16x128xf32>
      %cst_71 = arith.constant 0.000000e+00 : f32
      %197 = vector.shape_cast %195 : vector<16x1xi1> to vector<16x1xi1>
      %198 = vector.broadcast %197 : vector<16x1xi1> to vector<16x128xi1>
      %199 = vector.broadcast %cst_71 : f32 to vector<16x128xf32>
      %200 = arith.select %198, %196, %199 : vector<16x128xi1>, vector<16x128xf32>
      %cst_72 = arith.constant dense<0.000000e+00> : vector<128xf32>
      %201 = vector.multi_reduction <add>, %200, %cst_72 [0] : vector<16x128xf32> to vector<128xf32>
      %202 = vector.shape_cast %201 : vector<128xf32> to vector<1x128xf32>
      %c1 = arith.constant 1 : index
      %203 = memref.load %arg1[%c1] : memref<2xi32, #tpu.memory_space<smem>>
      %204 = tpu.iota {dimensions = array<i32: 0>} : vector<16x1xi32>
      %205 = vector.broadcast %203 : i32 to vector<16x1xi32>
      %206 = arith.cmpi eq, %204, %205 : vector<16x1xi32>
      %207 = vector.extract_strided_slice %189 {offsets = [16, 0], sizes = [16, 128], strides = [1, 1]} : vector<32x128xf32> to vector<16x128xf32>
      %cst_73 = arith.constant 0.000000e+00 : f32
      %208 = vector.shape_cast %206 : vector<16x1xi1> to vector<16x1xi1>
      %209 = vector.broadcast %208 : vector<16x1xi1> to vector<16x128xi1>
      %210 = vector.broadcast %cst_73 : f32 to vector<16x128xf32>
      %211 = arith.select %209, %207, %210 : vector<16x128xi1>, vector<16x128xf32>
      %cst_74 = arith.constant dense<0.000000e+00> : vector<128xf32>
      %212 = vector.multi_reduction <add>, %211, %cst_74 [0] : vector<16x128xf32> to vector<128xf32>
      %213 = vector.shape_cast %212 : vector<128xf32> to vector<1x128xf32>
      %214 = tpu.concatenate %202, %213 in 0 : vector<1x128xf32>, vector<1x128xf32> -> vector<2x128xf32>
      %c0_75 = arith.constant 0 : index
      %c0_76 = arith.constant 0 : index
      %215 = vector.load %arg12[%c0_75, %c0_76] : memref<128x128xf32, #tpu.memory_space<vmem>>, vector<128x128xf32>
      %cst_77 = arith.constant dense<0.000000e+00> : vector<2x128xf32>
      %216 = tpu.matmul %214, %215, %cst_77 {dimension_numbers = #tpu.dot_dimension_numbers<[1], [0], [0], [1], [0, 0, 1, 1], [], []>} : vector<2x128xf32>, vector<128x128xf32>, vector<2x128xf32> -> vector<2x128xf32>
      %c0_78 = arith.constant 0 : index
      %c0_79 = arith.constant 0 : index
      %217 = vector.load %arg14[%c0_78, %c0_79] : memref<2x128xf32, #tpu.memory_space<vmem>>, vector<2x128xf32>
      tpu.vector_store %arg14[%c0_78, %c0_79], %216 {strides = array<i32>} : memref<2x128xf32, #tpu.memory_space<vmem>>, vector<2x128xf32>,
    } else {
    }
    return
  }
  func.func @transform_0(%arg0: i32, %arg1: memref<2xi32, #tpu.memory_space<smem>>) -> (i32, i32, i32) {
    %c0_i32 = arith.constant 0 : i32
    %c0_i32_0 = arith.constant 0 : i32
    %c0_i32_1 = arith.constant 0 : i32
    %c0_i32_2 = arith.constant 0 : i32
    return %c0_i32, %c0_i32_0, %c0_i32_1 : i32, i32, i32
  }
  func.func @transform_1(%arg0: i32, %arg1: memref<2xi32, #tpu.memory_space<smem>>) -> (i32, i32) {
    %c0_i32 = arith.constant 0 : i32
    %c0_i32_0 = arith.constant 0 : i32
    %c0_i32_1 = arith.constant 0 : i32
    return %c0_i32, %c0_i32_0 : i32, i32
  }
  func.func @transform_2(%arg0: i32, %arg1: memref<2xi32, #tpu.memory_space<smem>>) -> (i32, i32, i32) {
    %c0_i32 = arith.constant 0 : i32
    %c0_i32_0 = arith.constant 0 : i32
    %c0_i32_1 = arith.constant 0 : i32
    return %arg0, %c0_i32, %c0_i32_0 : i32, i32, i32
  }
  func.func @transform_3(%arg0: i32, %arg1: memref<2xi32, #tpu.memory_space<smem>>) -> (i32, i32, i32) {
    %c0_i32 = arith.constant 0 : i32
    %c0_i32_0 = arith.constant 0 : i32
    %c0_i32_1 = arith.constant 0 : i32
    return %arg0, %c0_i32, %c0_i32_0 : i32, i32, i32
  }
  func.func @transform_4(%arg0: i32, %arg1: memref<2xi32, #tpu.memory_space<smem>>) -> (i32, i32, i32) {
    %c0_i32 = arith.constant 0 : i32
    %c0_i32_0 = arith.constant 0 : i32
    %c0_i32_1 = arith.constant 0 : i32
    return %arg0, %c0_i32, %c0_i32_0 : i32, i32, i32
  }
  func.func @transform_5(%arg0: i32, %arg1: memref<2xi32, #tpu.memory_space<smem>>) -> (i32, i32, i32) {
    %c0_i32 = arith.constant 0 : i32
    %c0_i32_0 = arith.constant 0 : i32
    %c0_i32_1 = arith.constant 0 : i32
    return %arg0, %c0_i32, %c0_i32_0 : i32, i32, i32
  }
  func.func @transform_6(%arg0: i32, %arg1: memref<2xi32, #tpu.memory_space<smem>>) -> (i32, i32, i32) {
    %c0_i32 = arith.constant 0 : i32
    %c0_i32_0 = arith.constant 0 : i32
    %c0_i32_1 = arith.constant 0 : i32
    return %arg0, %c0_i32, %c0_i32_0 : i32, i32, i32
  }
  func.func @transform_7(%arg0: i32, %arg1: memref<2xi32, #tpu.memory_space<smem>>) -> (i32, i32, i32) {
    %c0_i32 = arith.constant 0 : i32
    %c0_i32_0 = arith.constant 0 : i32
    %c0_i32_1 = arith.constant 0 : i32
    return %arg0, %c0_i32, %c0_i32_0 : i32, i32, i32
  }
  func.func @transform_8(%arg0: i32, %arg1: memref<2xi32, #tpu.memory_space<smem>>) -> (i32, i32, i32) {
    %c0_i32 = arith.constant 0 : i32
    %c0_i32_0 = arith.constant 0 : i32
    %c0_i32_1 = arith.constant 0 : i32
    return %arg0, %c0_i32, %c0_i32_0 : i32, i32, i32
  }
  func.func @transform_9(%arg0: i32, %arg1: memref<2xi32, #tpu.memory_space<smem>>) -> (i32, i32) {
    %c0_i32 = arith.constant 0 : i32
    %c0_i32_0 = arith.constant 0 : i32
    %c0_i32_1 = arith.constant 0 : i32
    return %c0_i32, %c0_i32_0 : i32, i32
  }
  func.func @transform_10(%arg0: i32, %arg1: memref<2xi32, #tpu.memory_space<smem>>) -> (i32, i32) {
    %c0_i32 = arith.constant 0 : i32
    %c0_i32_0 = arith.constant 0 : i32
    %c0_i32_1 = arith.constant 0 : i32
    return %c0_i32, %c0_i32_0 : i32, i32
  }
  func.func @transform_11(%arg0: i32, %arg1: memref<2xi32, #tpu.memory_space<smem>>) -> (i32, i32, i32) {
    %c0_i32 = arith.constant 0 : i32
    %c0_i32_0 = arith.constant 0 : i32
    %c0_i32_1 = arith.constant 0 : i32
    %c0_i32_2 = arith.constant 0 : i32
    return %c0_i32, %c0_i32_0, %c0_i32_1 : i32, i32, i32
  }
  func.func @transform_12(%arg0: i32, %arg1: memref<2xi32, #tpu.memory_space<smem>>) -> (i32, i32) {
    %c0_i32 = arith.constant 0 : i32
    %c0_i32_0 = arith.constant 0 : i32
    %c0_i32_1 = arith.constant 0 : i32
    return %c0_i32, %c0_i32_0 : i32, i32
  }
}

</mosaic_0001>

<llo_original>
// kernel: sd1_clip_forward.1
$region0: #{sd1_clip_forward.1}
  #allocation0 [shape = 'u32[]', space=smem, size = 0x4, offset = 0x4, fixed_abs, tag = 'smem constant byte address 0x4 - core index']
  #allocation1 [shape = 'u32[144,128]{1,0:T(1,128)}', space=vmem, size = 0x12000, scoped, tag = 'internal scratch']
  #allocation2 [shape = 'f32[32,128]{1,0:T(8,128)}', space=vmem, size = 0x4000, scoped, tag = 'scratch operand']
  #allocation3 [shape = 's32[1]{0}', space=sflag, size = 0x4, scoped, tag = 'scoped memory for sd1_clip_forward.1']
  #allocation4 [shape = 'u8[512]{0}', space=smem, size = 0x200, scoped, tag = 'prefetched SMEM operand 0']
  %s0 = inlined_call_operand.vmem [shape: s32[2], index: 0, kind: input, shape index: {}]
  %s1 = inlined_call_operand.vmem [shape: f32[2,16,128], index: 1, kind: input, shape index: {}]
  %s2 = inlined_call_operand.hbm [shape: f32[32,32], index: 2, kind: input, shape index: {}]
  %s3 = inlined_call_operand.vmem [shape: bf16[2,128,384], index: 3, kind: input, shape index: {}]
  %s4 = inlined_call_operand.hbm [shape: f32[2,1,384], index: 4, kind: input, shape index: {}]
  %s5 = inlined_call_operand.hbm [shape: bf16[2,128,128], index: 5, kind: input, shape index: {}]
  %s6 = inlined_call_operand.hbm [shape: bf16[2,128,512], index: 6, kind: input, shape index: {}]
  %s7 = inlined_call_operand.hbm [shape: f32[2,1,512], index: 7, kind: input, shape index: {}]
  %s8 = inlined_call_operand.hbm [shape: bf16[2,512,128], index: 8, kind: input, shape index: {}]
  %s9 = inlined_call_operand.hbm [shape: f32[2,8,128], index: 9, kind: input, shape index: {}]
  %s10 = inlined_call_operand.vmem [shape: f32[2,128], index: 10, kind: input, shape index: {}]
  %s11 = inlined_call_operand.hbm [shape: f32[128,128], index: 11, kind: input, shape index: {}]
  %s12 = inlined_call_operand.hbm [shape: f32[2,16,128], index: 12, kind: output, shape index: {0}]
  %s13 = inlined_call_operand.hbm [shape: f32[2,128], index: 13, kind: output, shape index: {1}]
  %14 = xla_tuple %s12, %s13
  %s15 = sld [smem:[#allocation0]]
  $region125: #{sd1_clip_forward.1} parent=0
    _
  %s17 = ssub.s32 1, %s15
  %s18 = scalar_select 0, %s17, %s15
  %s19 = sshll.u32 %s0, 4
  %s20 = int_to_ptr.vmem [resolvable:$true] %s19
  %22 = dma.vmem_to_smem %s20, 16, [#allocation4], [#allocation3]
  %23 = dma.done [#allocation3], 16
  %24 = sfence
  $region1: #{sd1_clip_forward.1} parent=0
    #allocation5 [shape = 'u8[16384]{0}', space=vmem, size = 0x4000, scoped, tag = 'input window, operand 2, single buffered']
    #allocation6 [shape = 's32[2]{0}', space=sflag, size = 0x8, scoped, tag = 'scoped memory for sd1_clip_forward.1']
    #allocation7 [shape = 's32[2]{0}', space=sflag, size = 0x8, scoped, tag = 'scoped memory for sd1_clip_forward.1']
    #allocation8 [shape = 'u8[3072]{0}', space=vmem, size = 0xc00, scoped, tag = 'input window, operand 4']
    #allocation9 [shape = 's32[2]{0}', space=sflag, size = 0x8, scoped, tag = 'scoped memory for sd1_clip_forward.1']
    #allocation10 [shape = 'u8[65536]{0}', space=vmem, size = 0x10000, scoped, tag = 'input window, operand 5']
    #allocation11 [shape = 'u8[262144]{0}', space=vmem, size = 0x40000, scoped, tag = 'input window, operand 6']
    #allocation12 [shape = 's32[2]{0}', space=sflag, size = 0x8, scoped, tag = 'scoped memory for sd1_clip_forward.1']
    #allocation13 [shape = 'u8[4096]{0}', space=vmem, size = 0x1000, scoped, tag = 'input window, operand 7']
    #allocation14 [shape = 'u8[262144]{0}', space=vmem, size = 0x40000, scoped, tag = 'input window, operand 8']
    #allocation15 [shape = 's32[2]{0}', space=sflag, size = 0x8, scoped, tag = 'scoped memory for sd1_clip_forward.1']
    #allocation16 [shape = 'u8[8192]{0}', space=vmem, size = 0x2000, scoped, tag = 'input window, operand 9']
    #allocation17 [shape = 'u8[65536]{0}', space=vmem, size = 0x10000, scoped, tag = 'input window, operand 11, single buffered']
    #allocation18 [shape = 's32[1]{0}', space=sflag, size = 0x4, scoped, tag = 'scoped memory for sd1_clip_forward.1']
    #allocation19 [shape = 'u8[16384]{0}', space=vmem, size = 0x4000, scoped, tag = 'output window, operand 0, single buffered']
    #allocation20 [shape = 'u8[1024]{0}', space=vmem, size = 0x400, scoped, tag = 'output window, operand 1, single buffered']
    #allocation21 [shape = 's32[1]{0}', space=sflag, size = 0x4, scoped, tag = 'scoped memory for sd1_clip_forward.1']
    %25 = vsyncpa [#allocation6], 0
    %26 = vsyncpa [#allocation9], 0
    %s27 = scalar_lea.sflag [#allocation9], 1
    %28 = vsyncpa %s27, 0
    %29 = vsyncpa [#allocation12], 0
    %s30 = scalar_lea.sflag [#allocation12], 1
    %31 = vsyncpa %s30, 0
    %32 = vsyncpa [#allocation15], 0
    %s33 = scalar_lea.sflag [#allocation15], 1
    %34 = vsyncpa %s33, 0
    %35 = vsyncpa [#allocation18], 0
    %36 = vsyncpa [#allocation7], 0
    %37 = vsyncpa [#allocation21], 0
    loop: start=0, step=1, limit=4
    $region2: #{sd1_clip_forward.1} parent=1 // loop_pre_header
      _
    $region3: #{sd1_clip_forward.1} parent=1 // loop_header
      %s39 = sphi 0, %s43
      %p40 = scmp.ge.s32.totalorder %s39, 4
      %s47 = sphi 0, %s47
      %s49 = sphi 0, %s47
      %s50 = sphi 0, %s49
      %s64 = sphi 0, %s50
      %s68 = sphi 0, %s68
      %s70 = sphi 0, %s68
      %s71 = sphi 0, %s70
      %s85 = sphi 0, %s71
      %s91 = sphi 0, %s93
      %s94 = sphi 0, %s91
      %s95 = sphi 0, %s94
      %s111 = sphi 0, %s95
      %s117 = sphi 0, %s119
      %s120 = sphi 0, %s117
      %s121 = sphi 0, %s120
      %s137 = sphi 0, %s121
      %s143 = sphi 0, %s145
      %s146 = sphi 0, %s143
      %s147 = sphi 0, %s146
      %s163 = sphi 0, %s147
      %s169 = sphi 0, %s171
      %s172 = sphi 0, %s169
      %s173 = sphi 0, %s172
      %s189 = sphi 0, %s173
      %s195 = sphi 0, %s197
      %s198 = sphi 0, %s195
      %s199 = sphi 0, %s198
      %s215 = sphi 0, %s199
      %s221 = sphi 0, %s223
      %s224 = sphi 0, %s221
      %s225 = sphi 0, %s224
      %s241 = sphi 0, %s225
      %s247 = sphi 0, %s249
      %s250 = sphi 0, %s247
      %s251 = sphi 0, %s250
      %s267 = sphi 0, %s251
      %s271 = sphi 0, %s271
      %s273 = sphi 0, %s271
      %s274 = sphi 0, %s273
      %s288 = sphi 0, %s274
      %s292 = sphi 0, %s292
      %s294 = sphi 0, %s292
      %s295 = sphi 0, %s294
      %s309 = sphi 0, %s295
      %s313 = sphi 0, %s313
      %s315 = sphi 0, %s313
      %s316 = sphi 0, %s315
      %s330 = sphi 0, %s316
      %s334 = sphi 0, %s334
      %s336 = sphi 0, %s334
      %s337 = sphi 0, %s336
      %s351 = sphi 0, %s337
    $region4: #{sd1_clip_forward.1} parent=1 // loop_header_branch
      %42 = sbr.rel (%p40) target = $region8
    $region5: #{sd1_clip_forward.1} parent=1 // loop_body
      %s44 = ssub.s32 %s39, 1
      %s45 = ssub.s32 %s39, 2
      %s46 = sadd.s32 %s39, 1
      %s48 = sadd.s32 %s47, 1
      %p51 = scmp.eq.s32.totalorder %s39, 1
      %p52 = scmp.ne.s32.totalorder %s47, %s49
      %p53 = scmp.eq.s32.totalorder %s39, 0
      %p54 = por %p52, %p53
      %p55 = scmp.ne.s32.totalorder %s47, %s49
      %p56 = scmp.eq.s32.totalorder %s44, 1
      %p57 = por %p55, %p56
      %p58 = scmp.ne.s32.totalorder %s49, %s50
      %p59 = scmp.eq.s32.totalorder %s44, 0
      %p60 = por %p58, %p59
      %p61 = scmp.ne.s32.totalorder %s49, %s50
      %p62 = scmp.eq.s32.totalorder %s45, 1
      %p63 = por %p61, %p62
      %p65 = scmp.ne.s32.totalorder %s50, %s64
      %p66 = scmp.eq.s32.totalorder %s45, 0
      %p67 = por %p65, %p66
      %s69 = sadd.s32 %s68, 1
      %p72 = scmp.eq.s32.totalorder %s39, 1
      %p73 = scmp.ne.s32.totalorder %s68, %s70
      %p74 = scmp.eq.s32.totalorder %s39, 0
      %p75 = por %p73, %p74
      %p76 = scmp.ne.s32.totalorder %s68, %s70
      %p77 = scmp.eq.s32.totalorder %s44, 1
      %p78 = por %p76, %p77
      %p79 = scmp.ne.s32.totalorder %s70, %s71
      %p80 = scmp.eq.s32.totalorder %s44, 0
      %p81 = por %p79, %p80
      %p82 = scmp.ne.s32.totalorder %s70, %s71
      %p83 = scmp.eq.s32.totalorder %s45, 1
      %p84 = por %p82, %p83
      %p86 = scmp.ne.s32.totalorder %s71, %s85
      %p87 = scmp.eq.s32.totalorder %s45, 0
      %p88 = por %p86, %p87
      %s89 = ssub.s32 %s39, %s46
      %p90 = scmp.eq.s32.totalorder %s89, 0
      %s92 = sadd.s32 %s91, 1
      %s93 = scalar_select %p90, %s91, %s92
      %p96 = pneg %p90
      %p97 = scmp.eq.s32.totalorder %s39, 1
      %p98 = por %p96, %p97
      %p99 = scmp.ne.s32.totalorder %s91, %s94
      %p100 = scmp.eq.s32.totalorder %s39, 0
      %p101 = por %p99, %p100
      %p102 = scmp.ne.s32.totalorder %s91, %s94
      %p103 = scmp.eq.s32.totalorder %s44, 1
      %p104 = por %p102, %p103
      %p105 = scmp.ne.s32.totalorder %s94, %s95
      %p106 = scmp.eq.s32.totalorder %s44, 0
      %p107 = por %p105, %p106
      %p108 = scmp.ne.s32.totalorder %s94, %s95
      %p109 = scmp.eq.s32.totalorder %s45, 1
      %p110 = por %p108, %p109
      %p112 = scmp.ne.s32.totalorder %s95, %s111
      %p113 = scmp.eq.s32.totalorder %s45, 0
      %p114 = por %p112, %p113
      %s115 = ssub.s32 %s39, %s46
      %p116 = scmp.eq.s32.totalorder %s115, 0
      %s118 = sadd.s32 %s117, 1
      %s119 = scalar_select %p116, %s117, %s118
      %p122 = pneg %p116
      %p123 = scmp.eq.s32.totalorder %s39, 1
      %p124 = por %p122, %p123
      %p125 = scmp.ne.s32.totalorder %s117, %s120
      %p126 = scmp.eq.s32.totalorder %s39, 0
      %p127 = por %p125, %p126
      %p128 = scmp.ne.s32.totalorder %s117, %s120
      %p129 = scmp.eq.s32.totalorder %s44, 1
      %p130 = por %p128, %p129
      %p131 = scmp.ne.s32.totalorder %s120, %s121
      %p132 = scmp.eq.s32.totalorder %s44, 0
      %p133 = por %p131, %p132
      %p134 = scmp.ne.s32.totalorder %s120, %s121
      %p135 = scmp.eq.s32.totalorder %s45, 1
      %p136 = por %p134, %p135
      %p138 = scmp.ne.s32.totalorder %s121, %s137
      %p139 = scmp.eq.s32.totalorder %s45, 0
      %p140 = por %p138, %p139
      %s141 = ssub.s32 %s39, %s46
      %p142 = scmp.eq.s32.totalorder %s141, 0
      %s144 = sadd.s32 %s143, 1
      %s145 = scalar_select %p142, %s143, %s144
      %p148 = pneg %p142
      %p149 = scmp.eq.s32.totalorder %s39, 1
      %p150 = por %p148, %p149
      %p151 = scmp.ne.s32.totalorder %s143, %s146
      %p152 = scmp.eq.s32.totalorder %s39, 0
      %p153 = por %p151, %p152
      %p154 = scmp.ne.s32.totalorder %s143, %s146
      %p155 = scmp.eq.s32.totalorder %s44, 1
      %p156 = por %p154, %p155
      %p157 = scmp.ne.s32.totalorder %s146, %s147
      %p158 = scmp.eq.s32.totalorder %s44, 0
      %p159 = por %p157, %p158
      %p160 = scmp.ne.s32.totalorder %s146, %s147
      %p161 = scmp.eq.s32.totalorder %s45, 1
      %p162 = por %p160, %p161
      %p164 = scmp.ne.s32.totalorder %s147, %s163
      %p165 = scmp.eq.s32.totalorder %s45, 0
      %p166 = por %p164, %p165
      %s167 = ssub.s32 %s39, %s46
      %p168 = scmp.eq.s32.totalorder %s167, 0
      %s170 = sadd.s32 %s169, 1
      %s171 = scalar_select %p168, %s169, %s170
      %p174 = pneg %p168
      %p175 = scmp.eq.s32.totalorder %s39, 1
      %p176 = por %p174, %p175
      %p177 = scmp.ne.s32.totalorder %s169, %s172
      %p178 = scmp.eq.s32.totalorder %s39, 0
      %p179 = por %p177, %p178
      %p180 = scmp.ne.s32.totalorder %s169, %s172
      %p181 = scmp.eq.s32.totalorder %s44, 1
      %p182 = por %p180, %p181
      %p183 = scmp.ne.s32.totalorder %s172, %s173
      %p184 = scmp.eq.s32.totalorder %s44, 0
      %p185 = por %p183, %p184
      %p186 = scmp.ne.s32.totalorder %s172, %s173
      %p187 = scmp.eq.s32.totalorder %s45, 1
      %p188 = por %p186, %p187
      %p190 = scmp.ne.s32.totalorder %s173, %s189
      %p191 = scmp.eq.s32.totalorder %s45, 0
      %p192 = por %p190, %p191
      %s193 = ssub.s32 %s39, %s46
      %p194 = scmp.eq.s32.totalorder %s193, 0
      %s196 = sadd.s32 %s195, 1
      %s197 = scalar_select %p194, %s195, %s196
      %p200 = pneg %p194
      %p201 = scmp.eq.s32.totalorder %s39, 1
      %p202 = por %p200, %p201
      %p203 = scmp.ne.s32.totalorder %s195, %s198
      %p204 = scmp.eq.s32.totalorder %s39, 0
      %p205 = por %p203, %p204
      %p206 = scmp.ne.s32.totalorder %s195, %s198
      %p207 = scmp.eq.s32.totalorder %s44, 1
      %p208 = por %p206, %p207
      %p209 = scmp.ne.s32.totalorder %s198, %s199
      %p210 = scmp.eq.s32.totalorder %s44, 0
      %p211 = por %p209, %p210
      %p212 = scmp.ne.s32.totalorder %s198, %s199
      %p213 = scmp.eq.s32.totalorder %s45, 1
      %p214 = por %p212, %p213
      %p216 = scmp.ne.s32.totalorder %s199, %s215
      %p217 = scmp.eq.s32.totalorder %s45, 0
      %p218 = por %p216, %p217
      %s219 = ssub.s32 %s39, %s46
      %p220 = scmp.eq.s32.totalorder %s219, 0
      %s222 = sadd.s32 %s221, 1
      %s223 = scalar_select %p220, %s221, %s222
      %p226 = pneg %p220
      %p227 = scmp.eq.s32.totalorder %s39, 1
      %p228 = por %p226, %p227
      %p229 = scmp.ne.s32.totalorder %s221, %s224
      %p230 = scmp.eq.s32.totalorder %s39, 0
      %p231 = por %p229, %p230
      %p232 = scmp.ne.s32.totalorder %s221, %s224
      %p233 = scmp.eq.s32.totalorder %s44, 1
      %p234 = por %p232, %p233
      %p235 = scmp.ne.s32.totalorder %s224, %s225
      %p236 = scmp.eq.s32.totalorder %s44, 0
      %p237 = por %p235, %p236
      %p238 = scmp.ne.s32.totalorder %s224, %s225
      %p239 = scmp.eq.s32.totalorder %s45, 1
      %p240 = por %p238, %p239
      %p242 = scmp.ne.s32.totalorder %s225, %s241
      %p243 = scmp.eq.s32.totalorder %s45, 0
      %p244 = por %p242, %p243
      %s245 = ssub.s32 %s39, %s46
      %p246 = scmp.eq.s32.totalorder %s245, 0
      %s248 = sadd.s32 %s247, 1
      %s249 = scalar_select %p246, %s247, %s248
      %p252 = pneg %p246
      %p253 = scmp.eq.s32.totalorder %s39, 1
      %p254 = por %p252, %p253
      %p255 = scmp.ne.s32.totalorder %s247, %s250
      %p256 = scmp.eq.s32.totalorder %s39, 0
      %p257 = por %p255, %p256
      %p258 = scmp.ne.s32.totalorder %s247, %s250
      %p259 = scmp.eq.s32.totalorder %s44, 1
      %p260 = por %p258, %p259
      %p261 = scmp.ne.s32.totalorder %s250, %s251
      %p262 = scmp.eq.s32.totalorder %s44, 0
      %p263 = por %p261, %p262
      %p264 = scmp.ne.s32.totalorder %s250, %s251
      %p265 = scmp.eq.s32.totalorder %s45, 1
      %p266 = por %p264, %p265
      %p268 = scmp.ne.s32.totalorder %s251, %s267
      %p269 = scmp.eq.s32.totalorder %s45, 0
      %p270 = por %p268, %p269
      %s272 = sadd.s32 %s271, 1
      %p275 = scmp.eq.s32.totalorder %s39, 1
      %p276 = scmp.ne.s32.totalorder %s271, %s273
      %p277 = scmp.eq.s32.totalorder %s39, 0
      %p278 = por %p276, %p277
      %p279 = scmp.ne.s32.totalorder %s271, %s273
      %p280 = scmp.eq.s32.totalorder %s44, 1
      %p281 = por %p279, %p280
      %p282 = scmp.ne.s32.totalorder %s273, %s274
      %p283 = scmp.eq.s32.totalorder %s44, 0
      %p284 = por %p282, %p283
      %p285 = scmp.ne.s32.totalorder %s273, %s274
      %p286 = scmp.eq.s32.totalorder %s45, 1
      %p287 = por %p285, %p286
      %p289 = scmp.ne.s32.totalorder %s274, %s288
      %p290 = scmp.eq.s32.totalorder %s45, 0
      %p291 = por %p289, %p290
      %s293 = sadd.s32 %s292, 1
      %p296 = scmp.eq.s32.totalorder %s39, 1
      %p297 = scmp.ne.s32.totalorder %s292, %s294
      %p298 = scmp.eq.s32.totalorder %s39, 0
      %p299 = por %p297, %p298
      %p300 = scmp.ne.s32.totalorder %s292, %s294
      %p301 = scmp.eq.s32.totalorder %s44, 1
      %p302 = por %p300, %p301
      %p303 = scmp.ne.s32.totalorder %s294, %s295
      %p304 = scmp.eq.s32.totalorder %s44, 0
      %p305 = por %p303, %p304
      %p306 = scmp.ne.s32.totalorder %s294, %s295
      %p307 = scmp.eq.s32.totalorder %s45, 1
      %p308 = por %p306, %p307
      %p310 = scmp.ne.s32.totalorder %s295, %s309
      %p311 = scmp.eq.s32.totalorder %s45, 0
      %p312 = por %p310, %p311
      %s314 = sadd.s32 %s313, 1
      %p317 = scmp.eq.s32.totalorder %s39, 1
      %p318 = scmp.ne.s32.totalorder %s313, %s315
      %p319 = scmp.eq.s32.totalorder %s39, 0
      %p320 = por %p318, %p319
      %p321 = scmp.ne.s32.totalorder %s313, %s315
      %p322 = scmp.eq.s32.totalorder %s44, 1
      %p323 = por %p321, %p322
      %p324 = scmp.ne.s32.totalorder %s315, %s316
      %p325 = scmp.eq.s32.totalorder %s44, 0
      %p326 = por %p324, %p325
      %p327 = scmp.ne.s32.totalorder %s315, %s316
      %p328 = scmp.eq.s32.totalorder %s45, 1
      %p329 = por %p327, %p328
      %p331 = scmp.ne.s32.totalorder %s316, %s330
      %p332 = scmp.eq.s32.totalorder %s45, 0
      %p333 = por %p331, %p332
      %s335 = sadd.s32 %s334, 1
      %p338 = scmp.eq.s32.totalorder %s39, 1
      %p339 = scmp.ne.s32.totalorder %s334, %s336
      %p340 = scmp.eq.s32.totalorder %s39, 0
      %p341 = por %p339, %p340
      %p342 = scmp.ne.s32.totalorder %s334, %s336
      %p343 = scmp.eq.s32.totalorder %s44, 1
      %p344 = por %p342, %p343
      %p345 = scmp.ne.s32.totalorder %s336, %s337
      %p346 = scmp.eq.s32.totalorder %s44, 0
      %p347 = por %p345, %p346
      %p348 = scmp.ne.s32.totalorder %s336, %s337
      %p349 = scmp.eq.s32.totalorder %s45, 1
      %p350 = por %p348, %p349
      %p352 = scmp.ne.s32.totalorder %s337, %s351
      %p353 = scmp.eq.s32.totalorder %s45, 0
      %p354 = por %p352, %p353
      %p355 = scmp.le.s32.totalorder 1, %s39
      %p356 = scmp.lt.s32.totalorder %s39, 3
      %p357 = pnand %p355, %p356
      %p358 = pneg %p357
      // Predicated region
      $region9: #{sd1_clip_forward.1} parent=5 // pred_check
        _
      $region10: #{sd1_clip_forward.1} parent=5 // pred_check_branch
        %360 = sbr.rel (%p357) target = $region12
      $region11: #{sd1_clip_forward.1} parent=5 // pred_region
        %s361 = ssub.s32 %s39, 1
        // Predicated region
        $region13: #{sd1_clip_forward.1} parent=11 // pred_check
          %p362 = pneg %p60
        $region14: #{sd1_clip_forward.1} parent=11 // pred_check_branch
          %364 = sbr.rel (%p362) target = $region16
        $region15: #{sd1_clip_forward.1} parent=11 // pred_region
          _
        $region16: #{sd1_clip_forward.1} parent=11 // pred_fallthru
          _
        // Predicated region
        $region17: #{sd1_clip_forward.1} parent=11 // pred_check
          %p365 = pneg %p81
        $region18: #{sd1_clip_forward.1} parent=11 // pred_check_branch
          %367 = sbr.rel (%p365) target = $region20
        $region19: #{sd1_clip_forward.1} parent=11 // pred_region
          %s369 = ssub.s32 512, 512
          %370 = vsyncadd [#allocation6], %s369
          %s371 = sshll.u32 [#allocation5], 4
          %s372 = int_to_ptr.vmem [resolvable:$true] %s371
          %377 = dma.hbm_to_vmem [thread:$0]  %s2, 512, %s372, [#allocation6], 128, 128, 8
        $region20: #{sd1_clip_forward.1} parent=11 // pred_fallthru
          _
        // Predicated region
        $region21: #{sd1_clip_forward.1} parent=11 // pred_check
          %p378 = pneg %p284
        $region22: #{sd1_clip_forward.1} parent=11 // pred_check_branch
          %380 = sbr.rel (%p378) target = $region24
        $region23: #{sd1_clip_forward.1} parent=11 // pred_region
          _
        $region24: #{sd1_clip_forward.1} parent=11 // pred_fallthru
          _
        // Predicated region
        $region25: #{sd1_clip_forward.1} parent=11 // pred_check
          %p381 = pneg %p305
        $region26: #{sd1_clip_forward.1} parent=11 // pred_check_branch
          %383 = sbr.rel (%p381) target = $region28
        $region27: #{sd1_clip_forward.1} parent=11 // pred_region
          %s385 = ssub.s32 2048, 2048
          %386 = vsyncadd [#allocation18], %s385
          %s387 = sshll.u32 [#allocation17], 4
          %s388 = int_to_ptr.vmem [resolvable:$true] %s387
          %393 = dma.hbm_to_vmem [thread:$0]  %s11, 2048, %s388, [#allocation18], 128, 128, 8
        $region28: #{sd1_clip_forward.1} parent=11 // pred_fallthru
          _
      $region12: #{sd1_clip_forward.1} parent=5 // pred_fallthru
        _
      %p394 = scmp.lt.s32.totalorder %s39, 2
      // Predicated region
      $region29: #{sd1_clip_forward.1} parent=5 // pred_check
        %p395 = pneg %p394
      $region30: #{sd1_clip_forward.1} parent=5 // pred_check_branch
        %397 = sbr.rel (%p395) target = $region32
      $region31: #{sd1_clip_forward.1} parent=5 // pred_region
        // Predicated region
        $region33: #{sd1_clip_forward.1} parent=31 // pred_check
          %p398 = pneg %p101
        $region34: #{sd1_clip_forward.1} parent=31 // pred_check_branch
          %400 = sbr.rel (%p398) target = $region36
        $region35: #{sd1_clip_forward.1} parent=31 // pred_region
          %p401 = scmp.lt.s32.totalorder %s39, 1
          %s402 = scalar_select %p401, %s39, 1
          %s403 = smul.addr %s402, 48
          %s404 = smul.addr %s403, 4
          %s405 = scalar_lea.vmem %s3, %s404
        $region36: #{sd1_clip_forward.1} parent=31 // pred_fallthru
          _
        // Predicated region
        $region37: #{sd1_clip_forward.1} parent=31 // pred_check
          %p406 = pneg %p127
        $region38: #{sd1_clip_forward.1} parent=31 // pred_check_branch
          %408 = sbr.rel (%p406) target = $region40
        $region39: #{sd1_clip_forward.1} parent=31 // pred_region
          %s409 = sand.u32 %s39, 1
          %s410 = scalar_lea.sflag [#allocation9], %s409
          %s411 = sand.u32 %s117, 1
          %s412 = smul.addr %s411, 3
          %s413 = scalar_lea.vmem [#allocation8], %s412
          %s415 = ssub.s32 48, 48
          %416 = vsyncadd %s410, %s415
          %s417 = smul.addr %s39, 3
          %s418 = smul.addr %s417, 16
          %s419 = scalar_lea.hbm %s4, %s418
          %s421 = sshll.u32 %s413, 4
          %s422 = int_to_ptr.vmem [resolvable:$true] %s421
          %424 = dma.hbm_to_vmem [thread:$0]  %s419, 48, %s422, %s410
        $region40: #{sd1_clip_forward.1} parent=31 // pred_fallthru
          _
        // Predicated region
        $region41: #{sd1_clip_forward.1} parent=31 // pred_check
          %p425 = pneg %p153
        $region42: #{sd1_clip_forward.1} parent=31 // pred_check_branch
          %427 = sbr.rel (%p425) target = $region44
        $region43: #{sd1_clip_forward.1} parent=31 // pred_region
          %s428 = sand.u32 %s39, 1
          %s429 = scalar_lea.sflag [#allocation9], %s428
          %s430 = sand.u32 %s143, 1
          %s431 = smul.addr %s430, 64
          %s432 = scalar_lea.vmem [#allocation10], %s431
          %s434 = ssub.s32 1024, 1024
          %435 = vsyncadd %s429, %s434
          %s436 = smul.addr %s39, 16
          %s437 = smul.addr %s436, 64
          %s438 = scalar_lea.hbm %s5, %s437
          %s439 = sshll.u32 %s432, 4
          %s440 = int_to_ptr.vmem [resolvable:$true] %s439
          %445 = dma.hbm_to_vmem [thread:$0]  %s438, 1024, %s440, %s429, 64, 64, 4
        $region44: #{sd1_clip_forward.1} parent=31 // pred_fallthru
          _
        // Predicated region
        $region45: #{sd1_clip_forward.1} parent=31 // pred_check
          %p446 = pneg %p179
        $region46: #{sd1_clip_forward.1} parent=31 // pred_check_branch
          %448 = sbr.rel (%p446) target = $region48
        $region47: #{sd1_clip_forward.1} parent=31 // pred_region
          %s449 = sand.u32 %s39, 1
          %s450 = scalar_lea.sflag [#allocation12], %s449
          %s451 = sand.u32 %s169, 1
          %s452 = smul.addr %s451, 256
          %s453 = scalar_lea.vmem [#allocation11], %s452
          %s455 = ssub.s32 4096, 4096
          %456 = vsyncadd %s450, %s455
          %s457 = smul.addr %s39, 64
          %s458 = smul.addr %s457, 64
          %s459 = scalar_lea.hbm %s6, %s458
          %s460 = sshll.u32 %s453, 4
          %s461 = int_to_ptr.vmem [resolvable:$true] %s460
          %466 = dma.hbm_to_vmem [thread:$0]  %s459, 4096, %s461, %s450, 256, 256, 16
        $region48: #{sd1_clip_forward.1} parent=31 // pred_fallthru
          _
        // Predicated region
        $region49: #{sd1_clip_forward.1} parent=31 // pred_check
          %p467 = pneg %p205
        $region50: #{sd1_clip_forward.1} parent=31 // pred_check_branch
          %469 = sbr.rel (%p467) target = $region52
        $region51: #{sd1_clip_forward.1} parent=31 // pred_region
          %s470 = sand.u32 %s39, 1
          %s471 = scalar_lea.sflag [#allocation12], %s470
          %s472 = sand.u32 %s195, 1
          %s473 = smul.addr %s472, 4
          %s474 = scalar_lea.vmem [#allocation13], %s473
          %s476 = ssub.s32 64, 64
          %477 = vsyncadd %s471, %s476
          %s478 = smul.addr %s39, 4
          %s479 = smul.addr %s478, 16
          %s480 = scalar_lea.hbm %s7, %s479
          %s482 = sshll.u32 %s474, 4
          %s483 = int_to_ptr.vmem [resolvable:$true] %s482
          %485 = dma.hbm_to_vmem [thread:$0]  %s480, 64, %s483, %s471
        $region52: #{sd1_clip_forward.1} parent=31 // pred_fallthru
          _
        // Predicated region
        $region53: #{sd1_clip_forward.1} parent=31 // pred_check
          %p486 = pneg %p231
        $region54: #{sd1_clip_forward.1} parent=31 // pred_check_branch
          %488 = sbr.rel (%p486) target = $region56
        $region55: #{sd1_clip_forward.1} parent=31 // pred_region
          %s489 = sand.u32 %s39, 1
          %s490 = scalar_lea.sflag [#allocation15], %s489
          %s491 = sand.u32 %s221, 1
          %s492 = smul.addr %s491, 256
          %s493 = scalar_lea.vmem [#allocation14], %s492
          %s495 = ssub.s32 4096, 4096
          %496 = vsyncadd %s490, %s495
          %s497 = smul.addr %s39, 64
          %s498 = smul.addr %s497, 64
          %s499 = scalar_lea.hbm %s8, %s498
          %s500 = sshll.u32 %s493, 4
          %s501 = int_to_ptr.vmem [resolvable:$true] %s500
          %506 = dma.hbm_to_vmem [thread:$0]  %s499, 4096, %s501, %s490, 64, 64, 4
        $region56: #{sd1_clip_forward.1} parent=31 // pred_fallthru
          _
        // Predicated region
        $region57: #{sd1_clip_forward.1} parent=31 // pred_check
          %p507 = pneg %p257
        $region58: #{sd1_clip_forward.1} parent=31 // pred_check_branch
          %509 = sbr.rel (%p507) target = $region60
        $region59: #{sd1_clip_forward.1} parent=31 // pred_region
          %s510 = sand.u32 %s39, 1
          %s511 = scalar_lea.sflag [#allocation15], %s510
          %s512 = sand.u32 %s247, 1
          %s513 = smul.addr %s512, 8
          %s514 = scalar_lea.vmem [#allocation16], %s513
          %s516 = ssub.s32 128, 128
          %517 = vsyncadd %s511, %s516
          %s518 = smul.addr %s39, 128
          %s519 = scalar_lea.hbm %s9, %s518
          %s521 = sshll.u32 %s514, 4
          %s522 = int_to_ptr.vmem [resolvable:$true] %s521
          %524 = dma.hbm_to_vmem [thread:$0]  %s519, 128, %s522, %s511
        $region60: #{sd1_clip_forward.1} parent=31 // pred_fallthru
          _
      $region32: #{sd1_clip_forward.1} parent=5 // pred_fallthru
        _
      %p525 = scmp.le.s32.totalorder 1, %s39
      %p526 = scmp.lt.s32.totalorder %s39, 3
      %p527 = pnand %p525, %p526
      %p528 = pneg %p527
      // Predicated region
      $region61: #{sd1_clip_forward.1} parent=5 // pred_check
        _
      $region62: #{sd1_clip_forward.1} parent=5 // pred_check_branch
        %530 = sbr.rel (%p527) target = $region64
      $region63: #{sd1_clip_forward.1} parent=5 // pred_region
        %s531 = ssub.s32 %s39, 1
        // Predicated region
        $region65: #{sd1_clip_forward.1} parent=63 // pred_check
          %p532 = pneg %p81
        $region66: #{sd1_clip_forward.1} parent=63 // pred_check_branch
          %534 = sbr.rel (%p532) target = $region68
        $region67: #{sd1_clip_forward.1} parent=63 // pred_region
          %535 = dma.done [#allocation6], 512
        $region68: #{sd1_clip_forward.1} parent=63 // pred_fallthru
          _
        %s536 = sand.u32 %s44, 1
        %s537 = scalar_lea.sflag [#allocation9], %s536
        %s538 = sand.u32 %s120, 1
        %s539 = smul.addr %s538, 3
        %s540 = scalar_lea.vmem [#allocation8], %s539
        // Predicated region
        $region69: #{sd1_clip_forward.1} parent=63 // pred_check
          %p541 = pneg %p133
        $region70: #{sd1_clip_forward.1} parent=63 // pred_check_branch
          %543 = sbr.rel (%p541) target = $region72
        $region71: #{sd1_clip_forward.1} parent=63 // pred_region
          %544 = dma.done %s537, 48
        $region72: #{sd1_clip_forward.1} parent=63 // pred_fallthru
          _
        %s545 = sand.u32 %s44, 1
        %s546 = scalar_lea.sflag [#allocation9], %s545
        %s547 = sand.u32 %s146, 1
        %s548 = smul.addr %s547, 64
        %s549 = scalar_lea.vmem [#allocation10], %s548
        // Predicated region
        $region73: #{sd1_clip_forward.1} parent=63 // pred_check
          %p550 = pneg %p159
        $region74: #{sd1_clip_forward.1} parent=63 // pred_check_branch
          %552 = sbr.rel (%p550) target = $region76
        $region75: #{sd1_clip_forward.1} parent=63 // pred_region
          %553 = dma.done %s546, 1024
        $region76: #{sd1_clip_forward.1} parent=63 // pred_fallthru
          _
        %s554 = sand.u32 %s44, 1
        %s555 = scalar_lea.sflag [#allocation12], %s554
        %s556 = sand.u32 %s172, 1
        %s557 = smul.addr %s556, 256
        %s558 = scalar_lea.vmem [#allocation11], %s557
        // Predicated region
        $region77: #{sd1_clip_forward.1} parent=63 // pred_check
          %p559 = pneg %p185
        $region78: #{sd1_clip_forward.1} parent=63 // pred_check_branch
          %561 = sbr.rel (%p559) target = $region80
        $region79: #{sd1_clip_forward.1} parent=63 // pred_region
          %562 = dma.done %s555, 4096
        $region80: #{sd1_clip_forward.1} parent=63 // pred_fallthru
          _
        %s563 = sand.u32 %s44, 1
        %s564 = scalar_lea.sflag [#allocation12], %s563
        %s565 = sand.u32 %s198, 1
        %s566 = smul.addr %s565, 4
        %s567 = scalar_lea.vmem [#allocation13], %s566
        // Predicated region
        $region81: #{sd1_clip_forward.1} parent=63 // pred_check
          %p568 = pneg %p211
        $region82: #{sd1_clip_forward.1} parent=63 // pred_check_branch
          %570 = sbr.rel (%p568) target = $region84
        $region83: #{sd1_clip_forward.1} parent=63 // pred_region
          %571 = dma.done %s564, 64
        $region84: #{sd1_clip_forward.1} parent=63 // pred_fallthru
          _
        %s572 = sand.u32 %s44, 1
        %s573 = scalar_lea.sflag [#allocation15], %s572
        %s574 = sand.u32 %s224, 1
        %s575 = smul.addr %s574, 256
        %s576 = scalar_lea.vmem [#allocation14], %s575
        // Predicated region
        $region85: #{sd1_clip_forward.1} parent=63 // pred_check
          %p577 = pneg %p237
        $region86: #{sd1_clip_forward.1} parent=63 // pred_check_branch
          %579 = sbr.rel (%p577) target = $region88
        $region87: #{sd1_clip_forward.1} parent=63 // pred_region
          %580 = dma.done %s573, 4096
        $region88: #{sd1_clip_forward.1} parent=63 // pred_fallthru
          _
        %s581 = sand.u32 %s44, 1
        %s582 = scalar_lea.sflag [#allocation15], %s581
        %s583 = sand.u32 %s250, 1
        %s584 = smul.addr %s583, 8
        %s585 = scalar_lea.vmem [#allocation16], %s584
        // Predicated region
        $region89: #{sd1_clip_forward.1} parent=63 // pred_check
          %p586 = pneg %p263
        $region90: #{sd1_clip_forward.1} parent=63 // pred_check_branch
          %588 = sbr.rel (%p586) target = $region92
        $region91: #{sd1_clip_forward.1} parent=63 // pred_region
          %589 = dma.done %s582, 128
        $region92: #{sd1_clip_forward.1} parent=63 // pred_fallthru
          _
        // Predicated region
        $region93: #{sd1_clip_forward.1} parent=63 // pred_check
          %p590 = pneg %p305
        $region94: #{sd1_clip_forward.1} parent=63 // pred_check_branch
          %592 = sbr.rel (%p590) target = $region96
        $region95: #{sd1_clip_forward.1} parent=63 // pred_region
          %593 = dma.done [#allocation18], 2048
        $region96: #{sd1_clip_forward.1} parent=63 // pred_fallthru
          _
        %p594 = pneg %p60
        %p595 = pneg %p57
        %p596 = pneg %p81
        %p597 = pneg %p78
        %p598 = scmp.lt.s32.totalorder %s44, 1
        %s599 = scalar_select %p598, %s44, 1
        %s600 = smul.addr %s599, 48
        %s601 = smul.addr %s600, 4
        %s602 = scalar_lea.vmem %s3, %s601
        %p603 = pneg %p107
        %p604 = pneg %p104
        %s605 = sand.u32 %s44, 1
        %s606 = scalar_lea.sflag [#allocation9], %s605
        %s607 = sand.u32 %s120, 1
        %s608 = smul.addr %s607, 3
        %s609 = scalar_lea.vmem [#allocation8], %s608
        %p610 = pneg %p133
        %p611 = pneg %p130
        %s612 = sand.u32 %s44, 1
        %s613 = scalar_lea.sflag [#allocation9], %s612
        %s614 = sand.u32 %s146, 1
        %s615 = smul.addr %s614, 64
        %s616 = scalar_lea.vmem [#allocation10], %s615
        %p617 = pneg %p159
        %p618 = pneg %p156
        %s619 = sand.u32 %s44, 1
        %s620 = scalar_lea.sflag [#allocation12], %s619
        %s621 = sand.u32 %s172, 1
        %s622 = smul.addr %s621, 256
        %s623 = scalar_lea.vmem [#allocation11], %s622
        %p624 = pneg %p185
        %p625 = pneg %p182
        %s626 = sand.u32 %s44, 1
        %s627 = scalar_lea.sflag [#allocation12], %s626
        %s628 = sand.u32 %s198, 1
        %s629 = smul.addr %s628, 4
        %s630 = scalar_lea.vmem [#allocation13], %s629
        %p631 = pneg %p211
        %p632 = pneg %p208
        %s633 = sand.u32 %s44, 1
        %s634 = scalar_lea.sflag [#allocation15], %s633
        %s635 = sand.u32 %s224, 1
        %s636 = smul.addr %s635, 256
        %s637 = scalar_lea.vmem [#allocation14], %s636
        %p638 = pneg %p237
        %p639 = pneg %p234
        %s640 = sand.u32 %s44, 1
        %s641 = scalar_lea.sflag [#allocation15], %s640
        %s642 = sand.u32 %s250, 1
        %s643 = smul.addr %s642, 8
        %s644 = scalar_lea.vmem [#allocation16], %s643
        %p645 = pneg %p263
        %p646 = pneg %p260
        %p647 = pneg %p284
        %p648 = pneg %p281
        %p649 = pneg %p305
        %p650 = pneg %p302
        %p651 = pneg %p326
        %p652 = pneg %p323
        %p653 = pneg %p347
        %p654 = pneg %p344
        %p655 = scmp.lt.s32.totalorder %s44, 1
        %s656 = scalar_select %p655, %s44, 1
        %s657 = smul.addr %s656, 48
        %s658 = smul.addr %s657, 4
        %s659 = scalar_lea.vmem %s3, %s658
        %p661 = scmp.eq.s32.totalorder %s44, 0
        // Predicated region
        $region97: #{sd1_clip_forward.1} parent=63 // pred_check
          %p662 = pneg %p661
        $region98: #{sd1_clip_forward.1} parent=63 // pred_check_branch
          %664 = sbr.rel (%p662) target = $region100
        $region99: #{sd1_clip_forward.1} parent=63 // pred_region
          %v665 = vld [vmem:[%s1] sm:$0xff]
          %v666 = vld [vmem:[%s1 + $0x8] sm:$0xff]
          %v667 = vld [vmem:[%s1 + $0x10] sm:$0xff]
          %v668 = vld [vmem:[%s1 + $0x18] sm:$0xff]
          %669 = vst [vmem:[#allocation2] sm:$0xff] %v665
          %670 = vst [vmem:[#allocation2 + $0x8] sm:$0xff] %v666
          %671 = vst [vmem:[#allocation2 + $0x10] sm:$0xff] %v667
          %672 = vst [vmem:[#allocation2 + $0x18] sm:$0xff] %v668
        $region100: #{sd1_clip_forward.1} parent=63 // pred_fallthru
          _
        %v673 = vld [vmem:[#allocation2] sm:$0xff]
        %v674 = vld [vmem:[#allocation2 + $0x8] sm:$0xff]
        %v675 = vld [vmem:[#allocation2 + $0x10] sm:$0xff]
        %v676 = vld [vmem:[#allocation2 + $0x18] sm:$0xff]
        %v677 = vld [vmem:[%s585] sm:$0xff]
        %678 = vadd.xlane.f32.xlu0 %v673
        %v679 = vpop.xlane.xlu0 %678
        %680 = vadd.xlane.f32.xlu0 %v674
        %v681 = vpop.xlane.xlu0 %680
        %682 = vadd.xlane.f32.xlu0 %v675
        %v683 = vpop.xlane.xlu0 %682
        %684 = vadd.xlane.f32.xlu0 %v676
        %v685 = vpop.xlane.xlu0 %684
        %v686 = vrcp.pop 128.0
        %v687 = vmul.f32 %v679, %v686
        %v688 = vmul.f32 %v681, %v686
        %v689 = vmul.f32 %v683, %v686
        %v690 = vmul.f32 %v685, %v686
        %v691 = vsub.f32 %v673, %v687
        %v692 = vsub.f32 %v674, %v688
        %v693 = vsub.f32 %v675, %v689
        %v694 = vsub.f32 %v676, %v690
        %v695 = vmul.f32 %v691, %v691
        %v696 = vmul.f32 %v692, %v692
        %v697 = vmul.f32 %v693, %v693
        %v698 = vmul.f32 %v694, %v694
        %699 = vadd.xlane.f32.xlu0 %v695
        %v700 = vpop.xlane.xlu0 %699
        %701 = vadd.xlane.f32.xlu0 %v696
        %v702 = vpop.xlane.xlu0 %701
        %703 = vadd.xlane.f32.xlu0 %v697
        %v704 = vpop.xlane.xlu0 %703
        %705 = vadd.xlane.f32.xlu0 %v698
        %v706 = vpop.xlane.xlu0 %705
        %v707 = vmul.f32 %v700, %v686
        %v708 = vmul.f32 %v702, %v686
        %v709 = vmul.f32 %v704, %v686
        %v710 = vmul.f32 %v706, %v686
        %v711 = vadd.f32 %v707, 1e-05
        %v712 = vadd.f32 %v708, 1e-05
        %v713 = vadd.f32 %v709, 1e-05
        %v714 = vadd.f32 %v710, 1e-05
        %v715 = vrsqrt.pop %v711
        %v716 = vrsqrt.pop %v712
        %v717 = vrsqrt.pop %v713
        %v718 = vrsqrt.pop %v714
        %v719 = vmul.f32 %v691, %v715
        %v720 = vmul.f32 %v692, %v716
        %v721 = vmul.f32 %v693, %v717
        %v722 = vmul.f32 %v694, %v718
        %v723 = vlaneseq
        %v724 = vshrl.u32 %v723, 7
        %v725 = vsub.s32 0, %v724
        %v726 = vrot.slane %v677, %v725
        %v727 = vmul.f32 %v719, %v726
        %v728 = vmul.f32 %v720, %v726
        %v729 = vmul.f32 %v721, %v726
        %v730 = vmul.f32 %v722, %v726
        %v731 = vlaneseq
        %v732 = vshrl.u32 %v731, 7
        %v733 = vsub.s32 1, %v732
        %v734 = vrot.slane %v677, %v733
        %v735 = vadd.f32 %v727, %v734
        %v736 = vadd.f32 %v728, %v734
        %v737 = vadd.f32 %v729, %v734
        %v738 = vadd.f32 %v730, %v734
        %v739 = vpack.c.bf16 %v736, %v735
        %v740 = vpack.c.bf16 %v738, %v737
        %v741 = vld [vmem:[%s659] sm:$0xff]
        %v742 = vld [vmem:[%s659 + $0x8] sm:$0xf]
        %v743 = vld [vmem:[%s659 + $0xc] sm:$0xff]
        %v744 = vld [vmem:[%s659 + $0x14] sm:$0xf]
        %v745 = vld [vmem:[%s659 + $0x18] sm:$0xff]
        %v746 = vld [vmem:[%s659 + $0x20] sm:$0xf]
        %v747 = vld [vmem:[%s659 + $0x24] sm:$0xff]
        %v748 = vld [vmem:[%s659 + $0x2c] sm:$0xf]
        %v749 = vld [vmem:[%s659 + $0x30] sm:$0xff]
        %v750 = vld [vmem:[%s659 + $0x38] sm:$0xf]
        %v751 = vld [vmem:[%s659 + $0x3c] sm:$0xff]
        %v752 = vld [vmem:[%s659 + $0x44] sm:$0xf]
        %v753 = vld [vmem:[%s659 + $0x48] sm:$0xff]
        %v754 = vld [vmem:[%s659 + $0x50] sm:$0xf]
        %v755 = vld [vmem:[%s659 + $0x54] sm:$0xff]
        %v756 = vld [vmem:[%s659 + $0x5c] sm:$0xf]
        %v757 = vld [vmem:[%s659 + $0x60] sm:$0xff]
        %v758 = vld [vmem:[%s659 + $0x68] sm:$0xf]
        %v759 = vld [vmem:[%s659 + $0x6c] sm:$0xff]
        %v760 = vld [vmem:[%s659 + $0x74] sm:$0xf]
        %v761 = vld [vmem:[%s659 + $0x78] sm:$0xff]
        %v762 = vld [vmem:[%s659 + $0x80] sm:$0xf]
        %v763 = vld [vmem:[%s659 + $0x84] sm:$0xff]
        %v764 = vld [vmem:[%s659 + $0x8c] sm:$0xf]
        %v765 = vld [vmem:[%s659 + $0x90] sm:$0xff]
        %v766 = vld [vmem:[%s659 + $0x98] sm:$0xf]
        %v767 = vld [vmem:[%s659 + $0x9c] sm:$0xff]
        %v768 = vld [vmem:[%s659 + $0xa4] sm:$0xf]
        %v769 = vld [vmem:[%s659 + $0xa8] sm:$0xff]
        %v770 = vld [vmem:[%s659 + $0xb0] sm:$0xf]
        %v771 = vld [vmem:[%s659 + $0xb4] sm:$0xff]
        %v772 = vld [vmem:[%s659 + $0xbc] sm:$0xf]
        %v773 = vld [vmem:[%s540] sm:$0x7]
        %v775 = vlaneseq
        %v776 = vshrl.u32 %v775, 7
        %v777 = vsub.s32 0, %v776
        %v778 = vrot.slane %v773, %v777
        %v779 = vlaneseq
        %v780 = vshrl.u32 %v779, 7
        %v781 = vsub.s32 1, %v780
        %v782 = vrot.slane %v773, %v781
        %v783 = vlaneseq
        %v784 = vshrl.u32 %v783, 7
        %v785 = vsub.s32 2, %v784
        %v786 = vrot.slane %v773, %v785
        %v822 = vunpack.c.l.b16 %v741
        %v823 = vunpack.c.h.b16 %v741
        %v824 = vunpack.c.l.b16 %v742
        %v825 = vunpack.c.l.b16 %v743
        %v826 = vunpack.c.h.b16 %v743
        %v827 = vunpack.c.l.b16 %v744
        %v828 = vunpack.c.l.b16 %v745
        %v829 = vunpack.c.h.b16 %v745
        %v830 = vunpack.c.l.b16 %v746
        %v831 = vunpack.c.l.b16 %v747
        %v832 = vunpack.c.h.b16 %v747
        %v833 = vunpack.c.l.b16 %v748
        %v834 = vunpack.c.l.b16 %v749
        %v835 = vunpack.c.h.b16 %v749
        %v836 = vunpack.c.l.b16 %v750
        %v837 = vunpack.c.l.b16 %v751
        %v838 = vunpack.c.h.b16 %v751
        %v839 = vunpack.c.l.b16 %v752
        %v840 = vunpack.c.l.b16 %v753
        %v841 = vunpack.c.h.b16 %v753
        %v842 = vunpack.c.l.b16 %v754
        %v843 = vunpack.c.l.b16 %v755
        %v844 = vunpack.c.h.b16 %v755
        %v845 = vunpack.c.l.b16 %v756
        %v846 = vunpack.c.l.b16 %v757
        %v847 = vunpack.c.h.b16 %v757
        %v848 = vunpack.c.l.b16 %v758
        %v849 = vunpack.c.l.b16 %v759
        %v850 = vunpack.c.h.b16 %v759
        %v851 = vunpack.c.l.b16 %v760
        %v852 = vunpack.c.l.b16 %v761
        %v853 = vunpack.c.h.b16 %v761
        %v854 = vunpack.c.l.b16 %v762
        %v855 = vunpack.c.l.b16 %v763
        %v856 = vunpack.c.h.b16 %v763
        %v857 = vunpack.c.l.b16 %v764
        %v858 = vunpack.c.l.b16 %v765
        %v859 = vunpack.c.h.b16 %v765
        %v860 = vunpack.c.l.b16 %v766
        %v861 = vunpack.c.l.b16 %v767
        %v862 = vunpack.c.h.b16 %v767
        %v863 = vunpack.c.l.b16 %v768
        %v864 = vunpack.c.l.b16 %v769
        %v865 = vunpack.c.h.b16 %v769
        %v866 = vunpack.c.l.b16 %v770
        %v867 = vunpack.c.l.b16 %v771
        %v868 = vunpack.c.h.b16 %v771
        %v869 = vunpack.c.l.b16 %v772
        %v870 = vpack.c.b16 %v825, %v822
        %v871 = vpack.c.b16 %v826, %v823
        %v872 = vpack.c.b16 %v827, %v824
        %v873 = vpack.c.b16 %v831, %v828
        %v874 = vpack.c.b16 %v832, %v829
        %v875 = vpack.c.b16 %v833, %v830
        %v876 = vpack.c.b16 %v837, %v834
        %v877 = vpack.c.b16 %v838, %v835
        %v878 = vpack.c.b16 %v839, %v836
        %v879 = vpack.c.b16 %v843, %v840
        %v880 = vpack.c.b16 %v844, %v841
        %v881 = vpack.c.b16 %v845, %v842
        %v882 = vpack.c.b16 %v849, %v846
        %v883 = vpack.c.b16 %v850, %v847
        %v884 = vpack.c.b16 %v851, %v848
        %v885 = vpack.c.b16 %v855, %v852
        %v886 = vpack.c.b16 %v856, %v853
        %v887 = vpack.c.b16 %v857, %v854
        %v888 = vpack.c.b16 %v861, %v858
        %v889 = vpack.c.b16 %v862, %v859
        %v890 = vpack.c.b16 %v863, %v860
        %v891 = vpack.c.b16 %v867, %v864
        %v892 = vpack.c.b16 %v868, %v865
        %v893 = vpack.c.b16 %v869, %v866
        %918 = vmatprep.subr.bf16.mxu0 %v892
        %919 = vmatpush1.bf16.msra.mxu0 %v891
        %920 = vmatprep.subr.bf16.mxu0 %v889
        %921 = vmatpush1.bf16.msra.mxu0 %v888
        %922 = vmatprep.subr.bf16.mxu0 %v886
        %923 = vmatpush1.bf16.msra.mxu0 %v885
        %924 = vmatprep.subr.bf16.mxu0 %v883
        %925 = vmatpush1.bf16.msra.mxu0 %v882
        %926 = vmatprep.subr.bf16.mxu0 %v880
        %927 = vmatpush1.bf16.msra.mxu0 %v879
        %928 = vmatprep.subr.bf16.mxu0 %v877
        %929 = vmatpush1.bf16.msra.mxu0 %v876
        %930 = vmatprep.subr.bf16.mxu0 %v874
        %931 = vmatpush1.bf16.msra.mxu0 %v873
        %932 = vmatprep.subr.bf16.mxu0 %v871
        %933 = vmatpush1.bf16.msra.mxu0 %v870
        %934 = vmatprep.subr.bf16.mxu0 0
        %935 = vmatpush2.bf16.msra.mxu0 0
        %936 = vmatprep.subr.bf16.mxu0 0
        %937 = vmatpush2.bf16.msra.mxu0 0
        %938 = vmatprep.subr.bf16.mxu0 0
        %939 = vmatpush2.bf16.msra.mxu0 0
        %940 = vmatprep.subr.bf16.mxu0 0
        %941 = vmatpush2.bf16.msra.mxu0 0
        %942 = vmatprep.subr.bf16.mxu0 0
        %943 = vmatpush2.bf16.msra.mxu0 0
        %944 = vmatprep.subr.bf16.mxu0 0
        %945 = vmatpush2.bf16.msra.mxu0 0
        %946 = vmatprep.subr.bf16.mxu0 0
        %947 = vmatpush2.bf16.msra.mxu0 0
        %948 = vmatprep.subr.bf16.mxu0 0
        %949 = vmatpush2.bf16.msra.mxu0 0
        %950 = vmatprep.mubr.bf16.mxu0 0
        %951 = vmatmul.mubr.bf16.gmra.mxu0 %v739
        %v952 = vpop.f32.mrf.mxu0
        %v953 = vadd.f32 %v778, %v952
        %v954 = vpop.f32.mrf.mxu0
        %v955 = vadd.f32 %v782, %v954
        %v956 = vpop.f32.mrf.mxu0
        %v957 = vadd.f32 %v778, %v956
        %v958 = vpop.f32.mrf.mxu0
        %v959 = vadd.f32 %v782, %v958
        %960 = vmatprep.mubr.bf16.mxu0 0
        %961 = vmatmul.mubr.bf16.gmra.mxu0 %v740
        %v962 = vpop.f32.mrf.mxu0
        %v963 = vadd.f32 %v778, %v962
        %v964 = vpop.f32.mrf.mxu0
        %v965 = vadd.f32 %v782, %v964
        %v966 = vpop.f32.mrf.mxu0
        %v967 = vadd.f32 %v778, %v966
        %v968 = vpop.f32.mrf.mxu0
        %v969 = vadd.f32 %v782, %v968
        %970 = vdwg.mxu0
        %971 = vmatprep.subr.bf16.mxu0 0
        %972 = vmatpush1.bf16.msra.mxu0 %v893
        %973 = vmatprep.subr.bf16.mxu0 0
        %974 = vmatpush1.bf16.msra.mxu0 %v890
        %975 = vmatprep.subr.bf16.mxu0 0
        %976 = vmatpush1.bf16.msra.mxu0 %v887
        %977 = vmatprep.subr.bf16.mxu0 0
        %978 = vmatpush1.bf16.msra.mxu0 %v884
        %979 = vmatprep.subr.bf16.mxu0 0
        %980 = vmatpush1.bf16.msra.mxu0 %v881
        %981 = vmatprep.subr.bf16.mxu0 0
        %982 = vmatpush1.bf16.msra.mxu0 %v878
        %983 = vmatprep.subr.bf16.mxu0 0
        %984 = vmatpush1.bf16.msra.mxu0 %v875
        %985 = vmatprep.subr.bf16.mxu0 0
        %986 = vmatpush1.bf16.msra.mxu0 %v872
        %987 = vmatprep.subr.bf16.mxu0 0
        %988 = vmatpush2.bf16.msra.mxu0 0
        %989 = vmatprep.subr.bf16.mxu0 0
        %990 = vmatpush2.bf16.msra.mxu0 0
        %991 = vmatprep.subr.bf16.mxu0 0
        %992 = vmatpush2.bf16.msra.mxu0 0
        %993 = vmatprep.subr.bf16.mxu0 0
        %994 = vmatpush2.bf16.msra.mxu0 0
        %995 = vmatprep.subr.bf16.mxu0 0
        %996 = vmatpush2.bf16.msra.mxu0 0
        %997 = vmatprep.subr.bf16.mxu0 0
        %998 = vmatpush2.bf16.msra.mxu0 0
        %999 = vmatprep.subr.bf16.mxu0 0
        %1000 = vmatpush2.bf16.msra.mxu0 0
        %1001 = vmatprep.subr.bf16.mxu0 0
        %1002 = vmatpush2.bf16.msra.mxu0 0
        %1003 = vmatprep.mubr.bf16.mxu0 0
        %1004 = vmatmul.mubr.bf16.gmra.mxu0 %v739
        %v1005 = vpop.f32.mrf.mxu0
        %v1006 = vadd.f32 %v786, %v1005
        %v1007 = vpop.f32.mrf.mxu0
        %v1008 = vpop.f32.mrf.mxu0
        %v1009 = vadd.f32 %v786, %v1008
        %v1010 = vpop.f32.mrf.mxu0
        %1011 = vmatprep.mubr.bf16.mxu0 0
        %1012 = vmatmul.mubr.bf16.gmra.mxu0 %v740
        %v1013 = vpop.f32.mrf.mxu0
        %v1014 = vadd.f32 %v786, %v1013
        %v1015 = vpop.f32.mrf.mxu0
        %v1016 = vpop.f32.mrf.mxu0
        %v1017 = vadd.f32 %v786, %v1016
        %v1018 = vpop.f32.mrf.mxu0
        %1019 = vdwg.mxu0
        %v1020 = vmul.f32 %v953, 0.17677669
        %v1021 = vmul.f32 %v957, 0.17677669
        %v1022 = vmul.f32 %v963, 0.17677669
        %v1023 = vmul.f32 %v967, 0.17677669
        %v1024 = vld [vmem:[#allocation5] sm:$0xff]
        %v1025 = vld [vmem:[#allocation5 + $0x8] sm:$0xff]
        %v1026 = vld [vmem:[#allocation5 + $0x10] sm:$0xff]
        %v1027 = vld [vmem:[#allocation5 + $0x18] sm:$0xff]
        %vm1028 = vcmask 261120
        %v1030 = vsel %vm1028, %v1020, 0
        %v1033 = vsel %vm1028, %v1021, 0
        %v1036 = vsel %vm1028, %v1022, 0
        %v1039 = vsel %vm1028, %v1023, 0
        %v1042 = vsel %vm1028, %v955, 0
        %v1045 = vsel %vm1028, %v959, 0
        %v1048 = vsel %vm1028, %v965, 0
        %v1051 = vsel %vm1028, %v969, 0
        %1053 = vmatprep.subr.mxu0 0.0
        %1054 = vmatpush1.xpose.msra.mxu0 0.0
        %1055 = vmatprep.subr.mxu0 0.0
        %1056 = vmatpush1.xpose.msra.mxu0 0.0
        %1057 = vmatprep.subr.mxu0 0.0
        %1058 = vmatpush1.xpose.msra.mxu0 0.0
        %1059 = vmatprep.subr.mxu0 0.0
        %1060 = vmatpush1.xpose.msra.mxu0 0.0
        %1061 = vmatprep.subr.mxu0 0.0
        %1062 = vmatpush1.xpose.msra.mxu0 0.0
        %1063 = vmatprep.subr.mxu0 0.0
        %1064 = vmatpush1.xpose.msra.mxu0 0.0
        %1065 = vmatprep.subr.mxu0 0.0
        %1066 = vmatpush1.xpose.msra.mxu0 0.0
        %1067 = vmatprep.subr.mxu0 0.0
        %1068 = vmatpush1.xpose.msra.mxu0 0.0
        %1069 = vmatprep.subr.mxu0 0.0
        %1070 = vmatpush1.xpose.msra.mxu0 0.0
        %1071 = vmatprep.subr.mxu0 0.0
        %1072 = vmatpush1.xpose.msra.mxu0 0.0
        %1073 = vmatprep.subr.mxu0 0.0
        %1074 = vmatpush1.xpose.msra.mxu0 0.0
        %1075 = vmatprep.subr.mxu0 0.0
        %1076 = vmatpush1.xpose.msra.mxu0 0.0
        %1077 = vmatprep.subr.mxu0 0.0
        %1078 = vmatpush1.xpose.msra.mxu0 %v1051
        %1079 = vmatprep.subr.mxu0 0.0
        %1080 = vmatpush1.xpose.msra.mxu0 %v1048
        %1081 = vmatprep.subr.mxu0 0.0
        %1082 = vmatpush1.xpose.msra.mxu0 %v1045
        %1083 = vmatprep.subr.mxu0 0.0
        %1084 = vmatpush1.xpose.msra.mxu0 %v1042
        %1085 = vmatprep.subr.mxu0 0.0
        %1086 = vmatpush2.xpose.msra.mxu0 0.0
        %1087 = vmatprep.subr.mxu0 0.0
        %1088 = vmatpush2.xpose.msra.mxu0 0.0
        %1089 = vmatprep.subr.mxu0 0.0
        %1090 = vmatpush2.xpose.msra.mxu0 0.0
        %1091 = vmatprep.subr.mxu0 0.0
        %1092 = vmatpush2.xpose.msra.mxu0 0.0
        %1093 = vmatprep.subr.mxu0 0.0
        %1094 = vmatpush2.xpose.msra.mxu0 0.0
        %1095 = vmatprep.subr.mxu0 0.0
        %1096 = vmatpush2.xpose.msra.mxu0 0.0
        %1097 = vmatprep.subr.mxu0 0.0
        %1098 = vmatpush2.xpose.msra.mxu0 0.0
        %1099 = vmatprep.subr.mxu0 0.0
        %1100 = vmatpush2.xpose.msra.mxu0 0.0
        %1101 = vmatprep.subr.mxu0 0.0
        %1102 = vmatpush2.xpose.msra.mxu0 0.0
        %1103 = vmatprep.subr.mxu0 0.0
        %1104 = vmatpush2.xpose.msra.mxu0 0.0
        %1105 = vmatprep.subr.mxu0 0.0
        %1106 = vmatpush2.xpose.msra.mxu0 0.0
        %1107 = vmatprep.subr.mxu0 0.0
        %1108 = vmatpush2.xpose.msra.mxu0 0.0
        %1109 = vmatprep.subr.mxu0 0.0
        %1110 = vmatpush2.xpose.msra.mxu0 0.0
        %1111 = vmatprep.subr.mxu0 0.0
        %1112 = vmatpush2.xpose.msra.mxu0 0.0
        %1113 = vmatprep.subr.mxu0 0.0
        %1114 = vmatpush2.xpose.msra.mxu0 0.0
        %1115 = vmatprep.subr.mxu0 0.0
        %1116 = vmatpush2.xpose.msra.mxu0 0.0
        %1117 = vmatprep.mubr.f32.mxu0 0.0
        %1118 = vmatmul.mubr.f32.gmra.mxu0 %v1030
        %v1119 = vpop.f32.mrf.mxu0
        %v1120 = vadd.f32 %v1024, %v1119
        %v1121 = vpop.f32.mrf.mxu0
        %1122 = vmatprep.mubr.f32.mxu0 0.0
        %1123 = vmatmul.mubr.f32.gmra.mxu0 %v1033
        %v1124 = vpop.f32.mrf.mxu0
        %v1125 = vadd.f32 %v1025, %v1124
        %v1126 = vpop.f32.mrf.mxu0
        %1127 = vmatprep.mubr.f32.mxu0 0.0
        %1128 = vmatmul.mubr.f32.gmra.mxu0 %v1036
        %v1129 = vpop.f32.mrf.mxu0
        %v1130 = vadd.f32 %v1026, %v1129
        %v1131 = vpop.f32.mrf.mxu0
        %1132 = vmatprep.mubr.f32.mxu0 0.0
        %1133 = vmatmul.mubr.f32.gmra.mxu0 %v1039
        %v1134 = vpop.f32.mrf.mxu0
        %v1135 = vadd.f32 %v1027, %v1134
        %v1136 = vpop.f32.mrf.mxu0
        %1137 = vdwg.mxu0
        %v1138 = vsel %vm1028, %v1120, -inf
        %1139 = vmax.xlane.f32.xlu0 %v1138
        %v1140 = vpop.xlane.xlu0 %1139
        %v1141 = vsel %vm1028, %v1125, -inf
        %1142 = vmax.xlane.f32.xlu0 %v1141
        %v1143 = vpop.xlane.xlu0 %1142
        %v1144 = vsel %vm1028, %v1130, -inf
        %1145 = vmax.xlane.f32.xlu0 %v1144
        %v1146 = vpop.xlane.xlu0 %1145
        %v1147 = vsel %vm1028, %v1135, -inf
        %1148 = vmax.xlane.f32.xlu0 %v1147
        %v1149 = vpop.xlane.xlu0 %1148
        %v1150 = vsub.f32 %v1120, %v1140
        %v1151 = vsub.f32 %v1125, %v1143
        %v1152 = vsub.f32 %v1130, %v1146
        %v1153 = vsub.f32 %v1135, %v1149
        %v1154 = vmul.f32 %v1150, 1.442695
        %v1155 = vpow.pop %v1154
        %v1156 = vmul.f32 %v1151, 1.442695
        %v1157 = vpow.pop %v1156
        %v1158 = vmul.f32 %v1152, 1.442695
        %v1159 = vpow.pop %v1158
        %v1160 = vmul.f32 %v1153, 1.442695
        %v1161 = vpow.pop %v1160
        %v1162 = vsel %vm1028, %v1155, 0.0
        %1163 = vadd.xlane.f32.xlu0 %v1162
        %v1164 = vpop.xlane.xlu0 %1163
        %v1165 = vsel %vm1028, %v1157, 0.0
        %1166 = vadd.xlane.f32.xlu0 %v1165
        %v1167 = vpop.xlane.xlu0 %1166
        %v1168 = vsel %vm1028, %v1159, 0.0
        %1169 = vadd.xlane.f32.xlu0 %v1168
        %v1170 = vpop.xlane.xlu0 %1169
        %v1171 = vsel %vm1028, %v1161, 0.0
        %1172 = vadd.xlane.f32.xlu0 %v1171
        %v1173 = vpop.xlane.xlu0 %1172
        %v1174 = vrcp.pop %v1164
        %v1175 = vmul.f32 %v1155, %v1174
        %v1176 = vrcp.pop %v1167
        %v1177 = vmul.f32 %v1157, %v1176
        %v1178 = vrcp.pop %v1170
        %v1179 = vmul.f32 %v1159, %v1178
        %v1180 = vrcp.pop %v1173
        %v1181 = vmul.f32 %v1161, %v1180
        %v1183 = vsel %vm1028, %v1175, 0
        %v1186 = vsel %vm1028, %v1177, 0
        %v1189 = vsel %vm1028, %v1179, 0
        %v1192 = vsel %vm1028, %v1181, 0
        %1194 = vmatprep.subr.mxu0 0.0
        %1195 = vmatpush1.msra.mxu0 0.0
        %1196 = vmatprep.subr.mxu0 0.0
        %1197 = vmatpush1.msra.mxu0 0.0
        %1198 = vmatprep.subr.mxu0 0.0
        %1199 = vmatpush1.msra.mxu0 0.0
        %1200 = vmatprep.subr.mxu0 0.0
        %1201 = vmatpush1.msra.mxu0 0.0
        %1202 = vmatprep.subr.mxu0 0.0
        %1203 = vmatpush1.msra.mxu0 0.0
        %1204 = vmatprep.subr.mxu0 0.0
        %1205 = vmatpush1.msra.mxu0 0.0
        %1206 = vmatprep.subr.mxu0 0.0
        %1207 = vmatpush1.msra.mxu0 0.0
        %1208 = vmatprep.subr.mxu0 0.0
        %1209 = vmatpush1.msra.mxu0 0.0
        %1210 = vmatprep.subr.mxu0 0.0
        %1211 = vmatpush1.msra.mxu0 0.0
        %1212 = vmatprep.subr.mxu0 0.0
        %1213 = vmatpush1.msra.mxu0 0.0
        %1214 = vmatprep.subr.mxu0 0.0
        %1215 = vmatpush1.msra.mxu0 0.0
        %1216 = vmatprep.subr.mxu0 0.0
        %1217 = vmatpush1.msra.mxu0 0.0
        %1218 = vmatprep.subr.mxu0 0.0
        %1219 = vmatpush1.msra.mxu0 %v1017
        %1220 = vmatprep.subr.mxu0 0.0
        %1221 = vmatpush1.msra.mxu0 %v1014
        %1222 = vmatprep.subr.mxu0 0.0
        %1223 = vmatpush1.msra.mxu0 %v1009
        %1224 = vmatprep.subr.mxu0 0.0
        %1225 = vmatpush1.msra.mxu0 %v1006
        %1226 = vmatprep.subr.mxu0 0.0
        %1227 = vmatpush2.msra.mxu0 0.0
        %1228 = vmatprep.subr.mxu0 0.0
        %1229 = vmatpush2.msra.mxu0 0.0
        %1230 = vmatprep.subr.mxu0 0.0
        %1231 = vmatpush2.msra.mxu0 0.0
        %1232 = vmatprep.subr.mxu0 0.0
        %1233 = vmatpush2.msra.mxu0 0.0
        %1234 = vmatprep.subr.mxu0 0.0
        %1235 = vmatpush2.msra.mxu0 0.0
        %1236 = vmatprep.subr.mxu0 0.0
        %1237 = vmatpush2.msra.mxu0 0.0
        %1238 = vmatprep.subr.mxu0 0.0
        %1239 = vmatpush2.msra.mxu0 0.0
        %1240 = vmatprep.subr.mxu0 0.0
        %1241 = vmatpush2.msra.mxu0 0.0
        %1242 = vmatprep.subr.mxu0 0.0
        %1243 = vmatpush2.msra.mxu0 0.0
        %1244 = vmatprep.subr.mxu0 0.0
        %1245 = vmatpush2.msra.mxu0 0.0
        %1246 = vmatprep.subr.mxu0 0.0
        %1247 = vmatpush2.msra.mxu0 0.0
        %1248 = vmatprep.subr.mxu0 0.0
        %1249 = vmatpush2.msra.mxu0 0.0
        %1250 = vmatprep.subr.mxu0 0.0
        %1251 = vmatpush2.msra.mxu0 0.0
        %1252 = vmatprep.subr.mxu0 0.0
        %1253 = vmatpush2.msra.mxu0 0.0
        %1254 = vmatprep.subr.mxu0 0.0
        %1255 = vmatpush2.msra.mxu0 0.0
        %1256 = vmatprep.subr.mxu0 0.0
        %1257 = vmatpush2.msra.mxu0 0.0
        %1258 = vmatprep.mubr.f32.mxu0 0.0
        %1259 = vmatmul.mubr.f32.gmra.mxu0 %v1183
        %v1260 = vpop.f32.mrf.mxu0
        %v1261 = vadd.f32 0.0, %v1260
        %v1262 = vpop.f32.mrf.mxu0
        %1263 = vmatprep.mubr.f32.mxu0 0.0
        %1264 = vmatmul.mubr.f32.gmra.mxu0 %v1186
        %v1265 = vpop.f32.mrf.mxu0
        %v1266 = vadd.f32 0.0, %v1265
        %v1267 = vpop.f32.mrf.mxu0
        %1268 = vmatprep.mubr.f32.mxu0 0.0
        %1269 = vmatmul.mubr.f32.gmra.mxu0 %v1189
        %v1270 = vpop.f32.mrf.mxu0
        %v1271 = vadd.f32 0.0, %v1270
        %v1272 = vpop.f32.mrf.mxu0
        %1273 = vmatprep.mubr.f32.mxu0 0.0
        %1274 = vmatmul.mubr.f32.gmra.mxu0 %v1192
        %v1275 = vpop.f32.mrf.mxu0
        %v1276 = vadd.f32 0.0, %v1275
        %v1277 = vpop.f32.mrf.mxu0
        %1278 = vdwg.mxu0
        %1279 = vrot.lane.b32.xlu0 %v1020, 96
        %v1280 = vpop.permute.xlu0 %1279
        %1281 = vrot.lane.b32.xlu0 %v1021, 96
        %v1282 = vpop.permute.xlu0 %1281
        %1283 = vrot.lane.b32.xlu0 %v1022, 96
        %v1284 = vpop.permute.xlu0 %1283
        %1285 = vrot.lane.b32.xlu0 %v1023, 96
        %v1286 = vpop.permute.xlu0 %1285
        %1287 = vrot.lane.b32.xlu0 %v955, 96
        %v1288 = vpop.permute.xlu0 %1287
        %1289 = vrot.lane.b32.xlu0 %v959, 96
        %v1290 = vpop.permute.xlu0 %1289
        %1291 = vrot.lane.b32.xlu0 %v965, 96
        %v1292 = vpop.permute.xlu0 %1291
        %1293 = vrot.lane.b32.xlu0 %v969, 96
        %v1294 = vpop.permute.xlu0 %1293
        %v1295 = vsel %vm1028, %v1280, 0
        %v1297 = vsel %vm1028, %v1282, 0
        %v1299 = vsel %vm1028, %v1284, 0
        %v1301 = vsel %vm1028, %v1286, 0
        %v1303 = vsel %vm1028, %v1288, 0
        %v1305 = vsel %vm1028, %v1290, 0
        %v1307 = vsel %vm1028, %v1292, 0
        %v1309 = vsel %vm1028, %v1294, 0
        %1311 = vmatprep.subr.mxu0 0.0
        %1312 = vmatpush1.xpose.msra.mxu0 0.0
        %1313 = vmatprep.subr.mxu0 0.0
        %1314 = vmatpush1.xpose.msra.mxu0 0.0
        %1315 = vmatprep.subr.mxu0 0.0
        %1316 = vmatpush1.xpose.msra.mxu0 0.0
        %1317 = vmatprep.subr.mxu0 0.0
        %1318 = vmatpush1.xpose.msra.mxu0 0.0
        %1319 = vmatprep.subr.mxu0 0.0
        %1320 = vmatpush1.xpose.msra.mxu0 0.0
        %1321 = vmatprep.subr.mxu0 0.0
        %1322 = vmatpush1.xpose.msra.mxu0 0.0
        %1323 = vmatprep.subr.mxu0 0.0
        %1324 = vmatpush1.xpose.msra.mxu0 0.0
        %1325 = vmatprep.subr.mxu0 0.0
        %1326 = vmatpush1.xpose.msra.mxu0 0.0
        %1327 = vmatprep.subr.mxu0 0.0
        %1328 = vmatpush1.xpose.msra.mxu0 0.0
        %1329 = vmatprep.subr.mxu0 0.0
        %1330 = vmatpush1.xpose.msra.mxu0 0.0
        %1331 = vmatprep.subr.mxu0 0.0
        %1332 = vmatpush1.xpose.msra.mxu0 0.0
        %1333 = vmatprep.subr.mxu0 0.0
        %1334 = vmatpush1.xpose.msra.mxu0 0.0
        %1335 = vmatprep.subr.mxu0 0.0
        %1336 = vmatpush1.xpose.msra.mxu0 %v1309
        %1337 = vmatprep.subr.mxu0 0.0
        %1338 = vmatpush1.xpose.msra.mxu0 %v1307
        %1339 = vmatprep.subr.mxu0 0.0
        %1340 = vmatpush1.xpose.msra.mxu0 %v1305
        %1341 = vmatprep.subr.mxu0 0.0
        %1342 = vmatpush1.xpose.msra.mxu0 %v1303
        %1343 = vmatprep.subr.mxu0 0.0
        %1344 = vmatpush2.xpose.msra.mxu0 0.0
        %1345 = vmatprep.subr.mxu0 0.0
        %1346 = vmatpush2.xpose.msra.mxu0 0.0
        %1347 = vmatprep.subr.mxu0 0.0
        %1348 = vmatpush2.xpose.msra.mxu0 0.0
        %1349 = vmatprep.subr.mxu0 0.0
        %1350 = vmatpush2.xpose.msra.mxu0 0.0
        %1351 = vmatprep.subr.mxu0 0.0
        %1352 = vmatpush2.xpose.msra.mxu0 0.0
        %1353 = vmatprep.subr.mxu0 0.0
        %1354 = vmatpush2.xpose.msra.mxu0 0.0
        %1355 = vmatprep.subr.mxu0 0.0
        %1356 = vmatpush2.xpose.msra.mxu0 0.0
        %1357 = vmatprep.subr.mxu0 0.0
        %1358 = vmatpush2.xpose.msra.mxu0 0.0
        %1359 = vmatprep.subr.mxu0 0.0
        %1360 = vmatpush2.xpose.msra.mxu0 0.0
        %1361 = vmatprep.subr.mxu0 0.0
        %1362 = vmatpush2.xpose.msra.mxu0 0.0
        %1363 = vmatprep.subr.mxu0 0.0
        %1364 = vmatpush2.xpose.msra.mxu0 0.0
        %1365 = vmatprep.subr.mxu0 0.0
        %1366 = vmatpush2.xpose.msra.mxu0 0.0
        %1367 = vmatprep.subr.mxu0 0.0
        %1368 = vmatpush2.xpose.msra.mxu0 0.0
        %1369 = vmatprep.subr.mxu0 0.0
        %1370 = vmatpush2.xpose.msra.mxu0 0.0
        %1371 = vmatprep.subr.mxu0 0.0
        %1372 = vmatpush2.xpose.msra.mxu0 0.0
        %1373 = vmatprep.subr.mxu0 0.0
        %1374 = vmatpush2.xpose.msra.mxu0 0.0
        %1375 = vmatprep.mubr.f32.mxu0 0.0
        %1376 = vmatmul.mubr.f32.gmra.mxu0 %v1295
        %v1377 = vpop.f32.mrf.mxu0
        %v1378 = vadd.f32 %v1024, %v1377
        %v1379 = vpop.f32.mrf.mxu0
        %1380 = vmatprep.mubr.f32.mxu0 0.0
        %1381 = vmatmul.mubr.f32.gmra.mxu0 %v1297
        %v1382 = vpop.f32.mrf.mxu0
        %v1383 = vadd.f32 %v1025, %v1382
        %v1384 = vpop.f32.mrf.mxu0
        %1385 = vmatprep.mubr.f32.mxu0 0.0
        %1386 = vmatmul.mubr.f32.gmra.mxu0 %v1299
        %v1387 = vpop.f32.mrf.mxu0
        %v1388 = vadd.f32 %v1026, %v1387
        %v1389 = vpop.f32.mrf.mxu0
        %1390 = vmatprep.mubr.f32.mxu0 0.0
        %1391 = vmatmul.mubr.f32.gmra.mxu0 %v1301
        %v1392 = vpop.f32.mrf.mxu0
        %v1393 = vadd.f32 %v1027, %v1392
        %v1394 = vpop.f32.mrf.mxu0
        %1395 = vdwg.mxu0
        %v1396 = vsel %vm1028, %v1378, -inf
        %1397 = vmax.xlane.f32.xlu0 %v1396
        %v1398 = vpop.xlane.xlu0 %1397
        %v1399 = vsel %vm1028, %v1383, -inf
        %1400 = vmax.xlane.f32.xlu0 %v1399
        %v1401 = vpop.xlane.xlu0 %1400
        %v1402 = vsel %vm1028, %v1388, -inf
        %1403 = vmax.xlane.f32.xlu0 %v1402
        %v1404 = vpop.xlane.xlu0 %1403
        %v1405 = vsel %vm1028, %v1393, -inf
        %1406 = vmax.xlane.f32.xlu0 %v1405
        %v1407 = vpop.xlane.xlu0 %1406
        %v1408 = vsub.f32 %v1378, %v1398
        %v1409 = vsub.f32 %v1383, %v1401
        %v1410 = vsub.f32 %v1388, %v1404
        %v1411 = vsub.f32 %v1393, %v1407
        %v1412 = vmul.f32 %v1408, 1.442695
        %v1413 = vpow.pop %v1412
        %v1414 = vmul.f32 %v1409, 1.442695
        %v1415 = vpow.pop %v1414
        %v1416 = vmul.f32 %v1410, 1.442695
        %v1417 = vpow.pop %v1416
        %v1418 = vmul.f32 %v1411, 1.442695
        %v1419 = vpow.pop %v1418
        %v1420 = vsel %vm1028, %v1413, 0.0
        %1421 = vadd.xlane.f32.xlu0 %v1420
        %v1422 = vpop.xlane.xlu0 %1421
        %v1423 = vsel %vm1028, %v1415, 0.0
        %1424 = vadd.xlane.f32.xlu0 %v1423
        %v1425 = vpop.xlane.xlu0 %1424
        %v1426 = vsel %vm1028, %v1417, 0.0
        %1427 = vadd.xlane.f32.xlu0 %v1426
        %v1428 = vpop.xlane.xlu0 %1427
        %v1429 = vsel %vm1028, %v1419, 0.0
        %1430 = vadd.xlane.f32.xlu0 %v1429
        %v1431 = vpop.xlane.xlu0 %1430
        %v1432 = vrcp.pop %v1422
        %v1433 = vmul.f32 %v1413, %v1432
        %v1434 = vrcp.pop %v1425
        %v1435 = vmul.f32 %v1415, %v1434
        %v1436 = vrcp.pop %v1428
        %v1437 = vmul.f32 %v1417, %v1436
        %v1438 = vrcp.pop %v1431
        %v1439 = vmul.f32 %v1419, %v1438
        %1444 = vrot.lane.b32.xlu0 %v1006, 96
        %v1445 = vpop.permute.xlu0 %1444
        %1446 = vrot.lane.b32.xlu0 %v1009, 96
        %v1447 = vpop.permute.xlu0 %1446
        %1448 = vrot.lane.b32.xlu0 %v1014, 96
        %v1449 = vpop.permute.xlu0 %1448
        %1450 = vrot.lane.b32.xlu0 %v1017, 96
        %v1451 = vpop.permute.xlu0 %1450
        %v1457 = vsel %vm1028, %v1433, 0
        %v1460 = vsel %vm1028, %v1435, 0
        %v1463 = vsel %vm1028, %v1437, 0
        %v1466 = vsel %vm1028, %v1439, 0
        %1468 = vmatprep.subr.mxu0 0.0
        %1469 = vmatpush1.msra.mxu0 0.0
        %1470 = vmatprep.subr.mxu0 0.0
        %1471 = vmatpush1.msra.mxu0 0.0
        %1472 = vmatprep.subr.mxu0 0.0
        %1473 = vmatpush1.msra.mxu0 0.0
        %1474 = vmatprep.subr.mxu0 0.0
        %1475 = vmatpush1.msra.mxu0 0.0
        %1476 = vmatprep.subr.mxu0 0.0
        %1477 = vmatpush1.msra.mxu0 0.0
        %1478 = vmatprep.subr.mxu0 0.0
        %1479 = vmatpush1.msra.mxu0 0.0
        %1480 = vmatprep.subr.mxu0 0.0
        %1481 = vmatpush1.msra.mxu0 0.0
        %1482 = vmatprep.subr.mxu0 0.0
        %1483 = vmatpush1.msra.mxu0 0.0
        %1484 = vmatprep.subr.mxu0 0.0
        %1485 = vmatpush1.msra.mxu0 0.0
        %1486 = vmatprep.subr.mxu0 0.0
        %1487 = vmatpush1.msra.mxu0 0.0
        %1488 = vmatprep.subr.mxu0 0.0
        %1489 = vmatpush1.msra.mxu0 0.0
        %1490 = vmatprep.subr.mxu0 0.0
        %1491 = vmatpush1.msra.mxu0 0.0
        %1492 = vmatprep.subr.mxu0 0.0
        %1493 = vmatpush1.msra.mxu0 %v1451
        %1494 = vmatprep.subr.mxu0 0.0
        %1495 = vmatpush1.msra.mxu0 %v1449
        %1496 = vmatprep.subr.mxu0 0.0
        %1497 = vmatpush1.msra.mxu0 %v1447
        %1498 = vmatprep.subr.mxu0 0.0
        %1499 = vmatpush1.msra.mxu0 %v1445
        %1500 = vmatprep.subr.mxu0 0.0
        %1501 = vmatpush2.msra.mxu0 0.0
        %1502 = vmatprep.subr.mxu0 0.0
        %1503 = vmatpush2.msra.mxu0 0.0
        %1504 = vmatprep.subr.mxu0 0.0
        %1505 = vmatpush2.msra.mxu0 0.0
        %1506 = vmatprep.subr.mxu0 0.0
        %1507 = vmatpush2.msra.mxu0 0.0
        %1508 = vmatprep.subr.mxu0 0.0
        %1509 = vmatpush2.msra.mxu0 0.0
        %1510 = vmatprep.subr.mxu0 0.0
        %1511 = vmatpush2.msra.mxu0 0.0
        %1512 = vmatprep.subr.mxu0 0.0
        %1513 = vmatpush2.msra.mxu0 0.0
        %1514 = vmatprep.subr.mxu0 0.0
        %1515 = vmatpush2.msra.mxu0 0.0
        %1516 = vmatprep.subr.mxu0 0.0
        %1517 = vmatpush2.msra.mxu0 0.0
        %1518 = vmatprep.subr.mxu0 0.0
        %1519 = vmatpush2.msra.mxu0 0.0
        %1520 = vmatprep.subr.mxu0 0.0
        %1521 = vmatpush2.msra.mxu0 0.0
        %1522 = vmatprep.subr.mxu0 0.0
        %1523 = vmatpush2.msra.mxu0 0.0
        %1524 = vmatprep.subr.mxu0 0.0
        %1525 = vmatpush2.msra.mxu0 0.0
        %1526 = vmatprep.subr.mxu0 0.0
        %1527 = vmatpush2.msra.mxu0 0.0
        %1528 = vmatprep.subr.mxu0 0.0
        %1529 = vmatpush2.msra.mxu0 0.0
        %1530 = vmatprep.subr.mxu0 0.0
        %1531 = vmatpush2.msra.mxu0 0.0
        %1532 = vmatprep.mubr.f32.mxu0 0.0
        %1533 = vmatmul.mubr.f32.gmra.mxu0 %v1457
        %v1534 = vpop.f32.mrf.mxu0
        %v1535 = vadd.f32 0.0, %v1534
        %v1536 = vpop.f32.mrf.mxu0
        %1537 = vmatprep.mubr.f32.mxu0 0.0
        %1538 = vmatmul.mubr.f32.gmra.mxu0 %v1460
        %v1539 = vpop.f32.mrf.mxu0
        %v1540 = vadd.f32 0.0, %v1539
        %v1541 = vpop.f32.mrf.mxu0
        %1542 = vmatprep.mubr.f32.mxu0 0.0
        %1543 = vmatmul.mubr.f32.gmra.mxu0 %v1463
        %v1544 = vpop.f32.mrf.mxu0
        %v1545 = vadd.f32 0.0, %v1544
        %v1546 = vpop.f32.mrf.mxu0
        %1547 = vmatprep.mubr.f32.mxu0 0.0
        %1548 = vmatmul.mubr.f32.gmra.mxu0 %v1466
        %v1549 = vpop.f32.mrf.mxu0
        %v1550 = vadd.f32 0.0, %v1549
        %v1551 = vpop.f32.mrf.mxu0
        %1552 = vdwg.mxu0
        %1553 = vrot.lane.b32.xlu0 %v1020, 64
        %v1554 = vpop.permute.xlu0 %1553
        %1555 = vrot.lane.b32.xlu0 %v1021, 64
        %v1556 = vpop.permute.xlu0 %1555
        %1557 = vrot.lane.b32.xlu0 %v1022, 64
        %v1558 = vpop.permute.xlu0 %1557
        %1559 = vrot.lane.b32.xlu0 %v1023, 64
        %v1560 = vpop.permute.xlu0 %1559
        %1561 = vrot.lane.b32.xlu0 %v955, 64
        %v1562 = vpop.permute.xlu0 %1561
        %1563 = vrot.lane.b32.xlu0 %v959, 64
        %v1564 = vpop.permute.xlu0 %1563
        %1565 = vrot.lane.b32.xlu0 %v965, 64
        %v1566 = vpop.permute.xlu0 %1565
        %1567 = vrot.lane.b32.xlu0 %v969, 64
        %v1568 = vpop.permute.xlu0 %1567
        %v1569 = vsel %vm1028, %v1554, 0
        %v1571 = vsel %vm1028, %v1556, 0
        %v1573 = vsel %vm1028, %v1558, 0
        %v1575 = vsel %vm1028, %v1560, 0
        %v1577 = vsel %vm1028, %v1562, 0
        %v1579 = vsel %vm1028, %v1564, 0
        %v1581 = vsel %vm1028, %v1566, 0
        %v1583 = vsel %vm1028, %v1568, 0
        %1585 = vmatprep.subr.mxu0 0.0
        %1586 = vmatpush1.xpose.msra.mxu0 0.0
        %1587 = vmatprep.subr.mxu0 0.0
        %1588 = vmatpush1.xpose.msra.mxu0 0.0
        %1589 = vmatprep.subr.mxu0 0.0
        %1590 = vmatpush1.xpose.msra.mxu0 0.0
        %1591 = vmatprep.subr.mxu0 0.0
        %1592 = vmatpush1.xpose.msra.mxu0 0.0
        %1593 = vmatprep.subr.mxu0 0.0
        %1594 = vmatpush1.xpose.msra.mxu0 0.0
        %1595 = vmatprep.subr.mxu0 0.0
        %1596 = vmatpush1.xpose.msra.mxu0 0.0
        %1597 = vmatprep.subr.mxu0 0.0
        %1598 = vmatpush1.xpose.msra.mxu0 0.0
        %1599 = vmatprep.subr.mxu0 0.0
        %1600 = vmatpush1.xpose.msra.mxu0 0.0
        %1601 = vmatprep.subr.mxu0 0.0
        %1602 = vmatpush1.xpose.msra.mxu0 0.0
        %1603 = vmatprep.subr.mxu0 0.0
        %1604 = vmatpush1.xpose.msra.mxu0 0.0
        %1605 = vmatprep.subr.mxu0 0.0
        %1606 = vmatpush1.xpose.msra.mxu0 0.0
        %1607 = vmatprep.subr.mxu0 0.0
        %1608 = vmatpush1.xpose.msra.mxu0 0.0
        %1609 = vmatprep.subr.mxu0 0.0
        %1610 = vmatpush1.xpose.msra.mxu0 %v1583
        %1611 = vmatprep.subr.mxu0 0.0
        %1612 = vmatpush1.xpose.msra.mxu0 %v1581
        %1613 = vmatprep.subr.mxu0 0.0
        %1614 = vmatpush1.xpose.msra.mxu0 %v1579
        %1615 = vmatprep.subr.mxu0 0.0
        %1616 = vmatpush1.xpose.msra.mxu0 %v1577
        %1617 = vmatprep.subr.mxu0 0.0
        %1618 = vmatpush2.xpose.msra.mxu0 0.0
        %1619 = vmatprep.subr.mxu0 0.0
        %1620 = vmatpush2.xpose.msra.mxu0 0.0
        %1621 = vmatprep.subr.mxu0 0.0
        %1622 = vmatpush2.xpose.msra.mxu0 0.0
        %1623 = vmatprep.subr.mxu0 0.0
        %1624 = vmatpush2.xpose.msra.mxu0 0.0
        %1625 = vmatprep.subr.mxu0 0.0
        %1626 = vmatpush2.xpose.msra.mxu0 0.0
        %1627 = vmatprep.subr.mxu0 0.0
        %1628 = vmatpush2.xpose.msra.mxu0 0.0
        %1629 = vmatprep.subr.mxu0 0.0
        %1630 = vmatpush2.xpose.msra.mxu0 0.0
        %1631 = vmatprep.subr.mxu0 0.0
        %1632 = vmatpush2.xpose.msra.mxu0 0.0
        %1633 = vmatprep.subr.mxu0 0.0
        %1634 = vmatpush2.xpose.msra.mxu0 0.0
        %1635 = vmatprep.subr.mxu0 0.0
        %1636 = vmatpush2.xpose.msra.mxu0 0.0
        %1637 = vmatprep.subr.mxu0 0.0
        %1638 = vmatpush2.xpose.msra.mxu0 0.0
        %1639 = vmatprep.subr.mxu0 0.0
        %1640 = vmatpush2.xpose.msra.mxu0 0.0
        %1641 = vmatprep.subr.mxu0 0.0
        %1642 = vmatpush2.xpose.msra.mxu0 0.0
        %1643 = vmatprep.subr.mxu0 0.0
        %1644 = vmatpush2.xpose.msra.mxu0 0.0
        %1645 = vmatprep.subr.mxu0 0.0
        %1646 = vmatpush2.xpose.msra.mxu0 0.0
        %1647 = vmatprep.subr.mxu0 0.0
        %1648 = vmatpush2.xpose.msra.mxu0 0.0
        %1649 = vmatprep.mubr.f32.mxu0 0.0
        %1650 = vmatmul.mubr.f32.gmra.mxu0 %v1569
        %v1651 = vpop.f32.mrf.mxu0
        %v1652 = vadd.f32 %v1024, %v1651
        %v1653 = vpop.f32.mrf.mxu0
        %1654 = vmatprep.mubr.f32.mxu0 0.0
        %1655 = vmatmul.mubr.f32.gmra.mxu0 %v1571
        %v1656 = vpop.f32.mrf.mxu0
        %v1657 = vadd.f32 %v1025, %v1656
        %v1658 = vpop.f32.mrf.mxu0
        %1659 = vmatprep.mubr.f32.mxu0 0.0
        %1660 = vmatmul.mubr.f32.gmra.mxu0 %v1573
        %v1661 = vpop.f32.mrf.mxu0
        %v1662 = vadd.f32 %v1026, %v1661
        %v1663 = vpop.f32.mrf.mxu0
        %1664 = vmatprep.mubr.f32.mxu0 0.0
        %1665 = vmatmul.mubr.f32.gmra.mxu0 %v1575
        %v1666 = vpop.f32.mrf.mxu0
        %v1667 = vadd.f32 %v1027, %v1666
        %v1668 = vpop.f32.mrf.mxu0
        %1669 = vdwg.mxu0
        %v1670 = vsel %vm1028, %v1652, -inf
        %1671 = vmax.xlane.f32.xlu0 %v1670
        %v1672 = vpop.xlane.xlu0 %1671
        %v1673 = vsel %vm1028, %v1657, -inf
        %1674 = vmax.xlane.f32.xlu0 %v1673
        %v1675 = vpop.xlane.xlu0 %1674
        %v1676 = vsel %vm1028, %v1662, -inf
        %1677 = vmax.xlane.f32.xlu0 %v1676
        %v1678 = vpop.xlane.xlu0 %1677
        %v1679 = vsel %vm1028, %v1667, -inf
        %1680 = vmax.xlane.f32.xlu0 %v1679
        %v1681 = vpop.xlane.xlu0 %1680
        %v1682 = vsub.f32 %v1652, %v1672
        %v1683 = vsub.f32 %v1657, %v1675
        %v1684 = vsub.f32 %v1662, %v1678
        %v1685 = vsub.f32 %v1667, %v1681
        %v1686 = vmul.f32 %v1682, 1.442695
        %v1687 = vpow.pop %v1686
        %v1688 = vmul.f32 %v1683, 1.442695
        %v1689 = vpow.pop %v1688
        %v1690 = vmul.f32 %v1684, 1.442695
        %v1691 = vpow.pop %v1690
        %v1692 = vmul.f32 %v1685, 1.442695
        %v1693 = vpow.pop %v1692
        %v1694 = vsel %vm1028, %v1687, 0.0
        %1695 = vadd.xlane.f32.xlu0 %v1694
        %v1696 = vpop.xlane.xlu0 %1695
        %v1697 = vsel %vm1028, %v1689, 0.0
        %1698 = vadd.xlane.f32.xlu0 %v1697
        %v1699 = vpop.xlane.xlu0 %1698
        %v1700 = vsel %vm1028, %v1691, 0.0
        %1701 = vadd.xlane.f32.xlu0 %v1700
        %v1702 = vpop.xlane.xlu0 %1701
        %v1703 = vsel %vm1028, %v1693, 0.0
        %1704 = vadd.xlane.f32.xlu0 %v1703
        %v1705 = vpop.xlane.xlu0 %1704
        %v1706 = vrcp.pop %v1696
        %v1707 = vmul.f32 %v1687, %v1706
        %v1708 = vrcp.pop %v1699
        %v1709 = vmul.f32 %v1689, %v1708
        %v1710 = vrcp.pop %v1702
        %v1711 = vmul.f32 %v1691, %v1710
        %v1712 = vrcp.pop %v1705
        %v1713 = vmul.f32 %v1693, %v1712
        %1714 = vrot.lane.b32.xlu0 %v1006, 64
        %v1715 = vpop.permute.xlu0 %1714
        %1716 = vrot.lane.b32.xlu0 %v1009, 64
        %v1717 = vpop.permute.xlu0 %1716
        %1718 = vrot.lane.b32.xlu0 %v1014, 64
        %v1719 = vpop.permute.xlu0 %1718
        %1720 = vrot.lane.b32.xlu0 %v1017, 64
        %v1721 = vpop.permute.xlu0 %1720
        %v1727 = vsel %vm1028, %v1707, 0
        %v1730 = vsel %vm1028, %v1709, 0
        %v1733 = vsel %vm1028, %v1711, 0
        %v1736 = vsel %vm1028, %v1713, 0
        %1738 = vmatprep.subr.mxu0 0.0
        %1739 = vmatpush1.msra.mxu0 0.0
        %1740 = vmatprep.subr.mxu0 0.0
        %1741 = vmatpush1.msra.mxu0 0.0
        %1742 = vmatprep.subr.mxu0 0.0
        %1743 = vmatpush1.msra.mxu0 0.0
        %1744 = vmatprep.subr.mxu0 0.0
        %1745 = vmatpush1.msra.mxu0 0.0
        %1746 = vmatprep.subr.mxu0 0.0
        %1747 = vmatpush1.msra.mxu0 0.0
        %1748 = vmatprep.subr.mxu0 0.0
        %1749 = vmatpush1.msra.mxu0 0.0
        %1750 = vmatprep.subr.mxu0 0.0
        %1751 = vmatpush1.msra.mxu0 0.0
        %1752 = vmatprep.subr.mxu0 0.0
        %1753 = vmatpush1.msra.mxu0 0.0
        %1754 = vmatprep.subr.mxu0 0.0
        %1755 = vmatpush1.msra.mxu0 0.0
        %1756 = vmatprep.subr.mxu0 0.0
        %1757 = vmatpush1.msra.mxu0 0.0
        %1758 = vmatprep.subr.mxu0 0.0
        %1759 = vmatpush1.msra.mxu0 0.0
        %1760 = vmatprep.subr.mxu0 0.0
        %1761 = vmatpush1.msra.mxu0 0.0
        %1762 = vmatprep.subr.mxu0 0.0
        %1763 = vmatpush1.msra.mxu0 %v1721
        %1764 = vmatprep.subr.mxu0 0.0
        %1765 = vmatpush1.msra.mxu0 %v1719
        %1766 = vmatprep.subr.mxu0 0.0
        %1767 = vmatpush1.msra.mxu0 %v1717
        %1768 = vmatprep.subr.mxu0 0.0
        %1769 = vmatpush1.msra.mxu0 %v1715
        %1770 = vmatprep.subr.mxu0 0.0
        %1771 = vmatpush2.msra.mxu0 0.0
        %1772 = vmatprep.subr.mxu0 0.0
        %1773 = vmatpush2.msra.mxu0 0.0
        %1774 = vmatprep.subr.mxu0 0.0
        %1775 = vmatpush2.msra.mxu0 0.0
        %1776 = vmatprep.subr.mxu0 0.0
        %1777 = vmatpush2.msra.mxu0 0.0
        %1778 = vmatprep.subr.mxu0 0.0
        %1779 = vmatpush2.msra.mxu0 0.0
        %1780 = vmatprep.subr.mxu0 0.0
        %1781 = vmatpush2.msra.mxu0 0.0
        %1782 = vmatprep.subr.mxu0 0.0
        %1783 = vmatpush2.msra.mxu0 0.0
        %1784 = vmatprep.subr.mxu0 0.0
        %1785 = vmatpush2.msra.mxu0 0.0
        %1786 = vmatprep.subr.mxu0 0.0
        %1787 = vmatpush2.msra.mxu0 0.0
        %1788 = vmatprep.subr.mxu0 0.0
        %1789 = vmatpush2.msra.mxu0 0.0
        %1790 = vmatprep.subr.mxu0 0.0
        %1791 = vmatpush2.msra.mxu0 0.0
        %1792 = vmatprep.subr.mxu0 0.0
        %1793 = vmatpush2.msra.mxu0 0.0
        %1794 = vmatprep.subr.mxu0 0.0
        %1795 = vmatpush2.msra.mxu0 0.0
        %1796 = vmatprep.subr.mxu0 0.0
        %1797 = vmatpush2.msra.mxu0 0.0
        %1798 = vmatprep.subr.mxu0 0.0
        %1799 = vmatpush2.msra.mxu0 0.0
        %1800 = vmatprep.subr.mxu0 0.0
        %1801 = vmatpush2.msra.mxu0 0.0
        %1802 = vmatprep.mubr.f32.mxu0 0.0
        %1803 = vmatmul.mubr.f32.gmra.mxu0 %v1727
        %v1804 = vpop.f32.mrf.mxu0
        %v1805 = vadd.f32 0.0, %v1804
        %v1806 = vpop.f32.mrf.mxu0
        %1807 = vmatprep.mubr.f32.mxu0 0.0
        %1808 = vmatmul.mubr.f32.gmra.mxu0 %v1730
        %v1809 = vpop.f32.mrf.mxu0
        %v1810 = vadd.f32 0.0, %v1809
        %v1811 = vpop.f32.mrf.mxu0
        %1812 = vmatprep.mubr.f32.mxu0 0.0
        %1813 = vmatmul.mubr.f32.gmra.mxu0 %v1733
        %v1814 = vpop.f32.mrf.mxu0
        %v1815 = vadd.f32 0.0, %v1814
        %v1816 = vpop.f32.mrf.mxu0
        %1817 = vmatprep.mubr.f32.mxu0 0.0
        %1818 = vmatmul.mubr.f32.gmra.mxu0 %v1736
        %v1819 = vpop.f32.mrf.mxu0
        %v1820 = vadd.f32 0.0, %v1819
        %v1821 = vpop.f32.mrf.mxu0
        %1822 = vdwg.mxu0
        %1823 = vrot.lane.b32.xlu0 %v1020, 32
        %v1824 = vpop.permute.xlu0 %1823
        %1825 = vrot.lane.b32.xlu0 %v1021, 32
        %v1826 = vpop.permute.xlu0 %1825
        %1827 = vrot.lane.b32.xlu0 %v1022, 32
        %v1828 = vpop.permute.xlu0 %1827
        %1829 = vrot.lane.b32.xlu0 %v1023, 32
        %v1830 = vpop.permute.xlu0 %1829
        %1831 = vrot.lane.b32.xlu0 %v955, 32
        %v1832 = vpop.permute.xlu0 %1831
        %1833 = vrot.lane.b32.xlu0 %v959, 32
        %v1834 = vpop.permute.xlu0 %1833
        %1835 = vrot.lane.b32.xlu0 %v965, 32
        %v1836 = vpop.permute.xlu0 %1835
        %1837 = vrot.lane.b32.xlu0 %v969, 32
        %v1838 = vpop.permute.xlu0 %1837
        %v1839 = vsel %vm1028, %v1824, 0
        %v1841 = vsel %vm1028, %v1826, 0
        %v1843 = vsel %vm1028, %v1828, 0
        %v1845 = vsel %vm1028, %v1830, 0
        %v1847 = vsel %vm1028, %v1832, 0
        %v1849 = vsel %vm1028, %v1834, 0
        %v1851 = vsel %vm1028, %v1836, 0
        %v1853 = vsel %vm1028, %v1838, 0
        %1855 = vmatprep.subr.mxu0 0.0
        %1856 = vmatpush1.xpose.msra.mxu0 0.0
        %1857 = vmatprep.subr.mxu0 0.0
        %1858 = vmatpush1.xpose.msra.mxu0 0.0
        %1859 = vmatprep.subr.mxu0 0.0
        %1860 = vmatpush1.xpose.msra.mxu0 0.0
        %1861 = vmatprep.subr.mxu0 0.0
        %1862 = vmatpush1.xpose.msra.mxu0 0.0
        %1863 = vmatprep.subr.mxu0 0.0
        %1864 = vmatpush1.xpose.msra.mxu0 0.0
        %1865 = vmatprep.subr.mxu0 0.0
        %1866 = vmatpush1.xpose.msra.mxu0 0.0
        %1867 = vmatprep.subr.mxu0 0.0
        %1868 = vmatpush1.xpose.msra.mxu0 0.0
        %1869 = vmatprep.subr.mxu0 0.0
        %1870 = vmatpush1.xpose.msra.mxu0 0.0
        %1871 = vmatprep.subr.mxu0 0.0
        %1872 = vmatpush1.xpose.msra.mxu0 0.0
        %1873 = vmatprep.subr.mxu0 0.0
        %1874 = vmatpush1.xpose.msra.mxu0 0.0
        %1875 = vmatprep.subr.mxu0 0.0
        %1876 = vmatpush1.xpose.msra.mxu0 0.0
        %1877 = vmatprep.subr.mxu0 0.0
        %1878 = vmatpush1.xpose.msra.mxu0 0.0
        %1879 = vmatprep.subr.mxu0 0.0
        %1880 = vmatpush1.xpose.msra.mxu0 %v1853
        %1881 = vmatprep.subr.mxu0 0.0
        %1882 = vmatpush1.xpose.msra.mxu0 %v1851
        %1883 = vmatprep.subr.mxu0 0.0
        %1884 = vmatpush1.xpose.msra.mxu0 %v1849
        %1885 = vmatprep.subr.mxu0 0.0
        %1886 = vmatpush1.xpose.msra.mxu0 %v1847
        %1887 = vmatprep.subr.mxu0 0.0
        %1888 = vmatpush2.xpose.msra.mxu0 0.0
        %1889 = vmatprep.subr.mxu0 0.0
        %1890 = vmatpush2.xpose.msra.mxu0 0.0
        %1891 = vmatprep.subr.mxu0 0.0
        %1892 = vmatpush2.xpose.msra.mxu0 0.0
        %1893 = vmatprep.subr.mxu0 0.0
        %1894 = vmatpush2.xpose.msra.mxu0 0.0
        %1895 = vmatprep.subr.mxu0 0.0
        %1896 = vmatpush2.xpose.msra.mxu0 0.0
        %1897 = vmatprep.subr.mxu0 0.0
        %1898 = vmatpush2.xpose.msra.mxu0 0.0
        %1899 = vmatprep.subr.mxu0 0.0
        %1900 = vmatpush2.xpose.msra.mxu0 0.0
        %1901 = vmatprep.subr.mxu0 0.0
        %1902 = vmatpush2.xpose.msra.mxu0 0.0
        %1903 = vmatprep.subr.mxu0 0.0
        %1904 = vmatpush2.xpose.msra.mxu0 0.0
        %1905 = vmatprep.subr.mxu0 0.0
        %1906 = vmatpush2.xpose.msra.mxu0 0.0
        %1907 = vmatprep.subr.mxu0 0.0
        %1908 = vmatpush2.xpose.msra.mxu0 0.0
        %1909 = vmatprep.subr.mxu0 0.0
        %1910 = vmatpush2.xpose.msra.mxu0 0.0
        %1911 = vmatprep.subr.mxu0 0.0
        %1912 = vmatpush2.xpose.msra.mxu0 0.0
        %1913 = vmatprep.subr.mxu0 0.0
        %1914 = vmatpush2.xpose.msra.mxu0 0.0
        %1915 = vmatprep.subr.mxu0 0.0
        %1916 = vmatpush2.xpose.msra.mxu0 0.0
        %1917 = vmatprep.subr.mxu0 0.0
        %1918 = vmatpush2.xpose.msra.mxu0 0.0
        %1919 = vmatprep.mubr.f32.mxu0 0.0
        %1920 = vmatmul.mubr.f32.gmra.mxu0 %v1839
        %v1921 = vpop.f32.mrf.mxu0
        %v1922 = vadd.f32 %v1024, %v1921
        %v1923 = vpop.f32.mrf.mxu0
        %1924 = vmatprep.mubr.f32.mxu0 0.0
        %1925 = vmatmul.mubr.f32.gmra.mxu0 %v1841
        %v1926 = vpop.f32.mrf.mxu0
        %v1927 = vadd.f32 %v1025, %v1926
        %v1928 = vpop.f32.mrf.mxu0
        %1929 = vmatprep.mubr.f32.mxu0 0.0
        %1930 = vmatmul.mubr.f32.gmra.mxu0 %v1843
        %v1931 = vpop.f32.mrf.mxu0
        %v1932 = vadd.f32 %v1026, %v1931
        %v1933 = vpop.f32.mrf.mxu0
        %1934 = vmatprep.mubr.f32.mxu0 0.0
        %1935 = vmatmul.mubr.f32.gmra.mxu0 %v1845
        %v1936 = vpop.f32.mrf.mxu0
        %v1937 = vadd.f32 %v1027, %v1936
        %v1938 = vpop.f32.mrf.mxu0
        %1939 = vdwg.mxu0
        %v1940 = vsel %vm1028, %v1922, -inf
        %1941 = vmax.xlane.f32.xlu0 %v1940
        %v1942 = vpop.xlane.xlu0 %1941
        %v1943 = vsel %vm1028, %v1927, -inf
        %1944 = vmax.xlane.f32.xlu0 %v1943
        %v1945 = vpop.xlane.xlu0 %1944
        %v1946 = vsel %vm1028, %v1932, -inf
        %1947 = vmax.xlane.f32.xlu0 %v1946
        %v1948 = vpop.xlane.xlu0 %1947
        %v1949 = vsel %vm1028, %v1937, -inf
        %1950 = vmax.xlane.f32.xlu0 %v1949
        %v1951 = vpop.xlane.xlu0 %1950
        %v1952 = vsub.f32 %v1922, %v1942
        %v1953 = vsub.f32 %v1927, %v1945
        %v1954 = vsub.f32 %v1932, %v1948
        %v1955 = vsub.f32 %v1937, %v1951
        %v1956 = vmul.f32 %v1952, 1.442695
        %v1957 = vpow.pop %v1956
        %v1958 = vmul.f32 %v1953, 1.442695
        %v1959 = vpow.pop %v1958
        %v1960 = vmul.f32 %v1954, 1.442695
        %v1961 = vpow.pop %v1960
        %v1962 = vmul.f32 %v1955, 1.442695
        %v1963 = vpow.pop %v1962
        %v1964 = vsel %vm1028, %v1957, 0.0
        %1965 = vadd.xlane.f32.xlu0 %v1964
        %v1966 = vpop.xlane.xlu0 %1965
        %v1967 = vsel %vm1028, %v1959, 0.0
        %1968 = vadd.xlane.f32.xlu0 %v1967
        %v1969 = vpop.xlane.xlu0 %1968
        %v1970 = vsel %vm1028, %v1961, 0.0
        %1971 = vadd.xlane.f32.xlu0 %v1970
        %v1972 = vpop.xlane.xlu0 %1971
        %v1973 = vsel %vm1028, %v1963, 0.0
        %1974 = vadd.xlane.f32.xlu0 %v1973
        %v1975 = vpop.xlane.xlu0 %1974
        %v1976 = vrcp.pop %v1966
        %v1977 = vmul.f32 %v1957, %v1976
        %v1978 = vrcp.pop %v1969
        %v1979 = vmul.f32 %v1959, %v1978
        %v1980 = vrcp.pop %v1972
        %v1981 = vmul.f32 %v1961, %v1980
        %v1982 = vrcp.pop %v1975
        %v1983 = vmul.f32 %v1963, %v1982
        %1984 = vrot.lane.b32.xlu0 %v1006, 32
        %v1985 = vpop.permute.xlu0 %1984
        %1986 = vrot.lane.b32.xlu0 %v1009, 32
        %v1987 = vpop.permute.xlu0 %1986
        %1988 = vrot.lane.b32.xlu0 %v1014, 32
        %v1989 = vpop.permute.xlu0 %1988
        %1990 = vrot.lane.b32.xlu0 %v1017, 32
        %v1991 = vpop.permute.xlu0 %1990
        %v1997 = vsel %vm1028, %v1977, 0
        %v2000 = vsel %vm1028, %v1979, 0
        %v2003 = vsel %vm1028, %v1981, 0
        %v2006 = vsel %vm1028, %v1983, 0
        %2008 = vmatprep.subr.mxu0 0.0
        %2009 = vmatpush1.msra.mxu0 0.0
        %2010 = vmatprep.subr.mxu0 0.0
        %2011 = vmatpush1.msra.mxu0 0.0
        %2012 = vmatprep.subr.mxu0 0.0
        %2013 = vmatpush1.msra.mxu0 0.0
        %2014 = vmatprep.subr.mxu0 0.0
        %2015 = vmatpush1.msra.mxu0 0.0
        %2016 = vmatprep.subr.mxu0 0.0
        %2017 = vmatpush1.msra.mxu0 0.0
        %2018 = vmatprep.subr.mxu0 0.0
        %2019 = vmatpush1.msra.mxu0 0.0
        %2020 = vmatprep.subr.mxu0 0.0
        %2021 = vmatpush1.msra.mxu0 0.0
        %2022 = vmatprep.subr.mxu0 0.0
        %2023 = vmatpush1.msra.mxu0 0.0
        %2024 = vmatprep.subr.mxu0 0.0
        %2025 = vmatpush1.msra.mxu0 0.0
        %2026 = vmatprep.subr.mxu0 0.0
        %2027 = vmatpush1.msra.mxu0 0.0
        %2028 = vmatprep.subr.mxu0 0.0
        %2029 = vmatpush1.msra.mxu0 0.0
        %2030 = vmatprep.subr.mxu0 0.0
        %2031 = vmatpush1.msra.mxu0 0.0
        %2032 = vmatprep.subr.mxu0 0.0
        %2033 = vmatpush1.msra.mxu0 %v1991
        %2034 = vmatprep.subr.mxu0 0.0
        %2035 = vmatpush1.msra.mxu0 %v1989
        %2036 = vmatprep.subr.mxu0 0.0
        %2037 = vmatpush1.msra.mxu0 %v1987
        %2038 = vmatprep.subr.mxu0 0.0
        %2039 = vmatpush1.msra.mxu0 %v1985
        %2040 = vmatprep.subr.mxu0 0.0
        %2041 = vmatpush2.msra.mxu0 0.0
        %2042 = vmatprep.subr.mxu0 0.0
        %2043 = vmatpush2.msra.mxu0 0.0
        %2044 = vmatprep.subr.mxu0 0.0
        %2045 = vmatpush2.msra.mxu0 0.0
        %2046 = vmatprep.subr.mxu0 0.0
        %2047 = vmatpush2.msra.mxu0 0.0
        %2048 = vmatprep.subr.mxu0 0.0
        %2049 = vmatpush2.msra.mxu0 0.0
        %2050 = vmatprep.subr.mxu0 0.0
        %2051 = vmatpush2.msra.mxu0 0.0
        %2052 = vmatprep.subr.mxu0 0.0
        %2053 = vmatpush2.msra.mxu0 0.0
        %2054 = vmatprep.subr.mxu0 0.0
        %2055 = vmatpush2.msra.mxu0 0.0
        %2056 = vmatprep.subr.mxu0 0.0
        %2057 = vmatpush2.msra.mxu0 0.0
        %2058 = vmatprep.subr.mxu0 0.0
        %2059 = vmatpush2.msra.mxu0 0.0
        %2060 = vmatprep.subr.mxu0 0.0
        %2061 = vmatpush2.msra.mxu0 0.0
        %2062 = vmatprep.subr.mxu0 0.0
        %2063 = vmatpush2.msra.mxu0 0.0
        %2064 = vmatprep.subr.mxu0 0.0
        %2065 = vmatpush2.msra.mxu0 0.0
        %2066 = vmatprep.subr.mxu0 0.0
        %2067 = vmatpush2.msra.mxu0 0.0
        %2068 = vmatprep.subr.mxu0 0.0
        %2069 = vmatpush2.msra.mxu0 0.0
        %2070 = vmatprep.subr.mxu0 0.0
        %2071 = vmatpush2.msra.mxu0 0.0
        %2072 = vmatprep.mubr.f32.mxu0 0.0
        %2073 = vmatmul.mubr.f32.gmra.mxu0 %v1997
        %v2074 = vpop.f32.mrf.mxu0
        %v2075 = vadd.f32 0.0, %v2074
        %v2076 = vpop.f32.mrf.mxu0
        %2077 = vmatprep.mubr.f32.mxu0 0.0
        %2078 = vmatmul.mubr.f32.gmra.mxu0 %v2000
        %v2079 = vpop.f32.mrf.mxu0
        %v2080 = vadd.f32 0.0, %v2079
        %v2081 = vpop.f32.mrf.mxu0
        %2082 = vmatprep.mubr.f32.mxu0 0.0
        %2083 = vmatmul.mubr.f32.gmra.mxu0 %v2003
        %v2084 = vpop.f32.mrf.mxu0
        %v2085 = vadd.f32 0.0, %v2084
        %v2086 = vpop.f32.mrf.mxu0
        %2087 = vmatprep.mubr.f32.mxu0 0.0
        %2088 = vmatmul.mubr.f32.gmra.mxu0 %v2006
        %v2089 = vpop.f32.mrf.mxu0
        %v2090 = vadd.f32 0.0, %v2089
        %v2091 = vpop.f32.mrf.mxu0
        %2092 = vdwg.mxu0
        %2097 = vrot.lane.b32.xlu0 %v1535, 32
        %v2098 = vpop.permute.xlu0 %2097
        %2099 = vrot.lane.b32.xlu0 %v1540, 32
        %v2100 = vpop.permute.xlu0 %2099
        %2101 = vrot.lane.b32.xlu0 %v1545, 32
        %v2102 = vpop.permute.xlu0 %2101
        %2103 = vrot.lane.b32.xlu0 %v1550, 32
        %v2104 = vpop.permute.xlu0 %2103
        %2113 = vrot.lane.b32.xlu0 %v1805, 64
        %v2114 = vpop.permute.xlu0 %2113
        %2115 = vrot.lane.b32.xlu0 %v1810, 64
        %v2116 = vpop.permute.xlu0 %2115
        %2117 = vrot.lane.b32.xlu0 %v1815, 64
        %v2118 = vpop.permute.xlu0 %2117
        %2119 = vrot.lane.b32.xlu0 %v1820, 64
        %v2120 = vpop.permute.xlu0 %2119
        %2129 = vrot.lane.b32.xlu0 %v2075, 96
        %v2130 = vpop.permute.xlu0 %2129
        %2131 = vrot.lane.b32.xlu0 %v2080, 96
        %v2132 = vpop.permute.xlu0 %2131
        %2133 = vrot.lane.b32.xlu0 %v2085, 96
        %v2134 = vpop.permute.xlu0 %2133
        %2135 = vrot.lane.b32.xlu0 %v2090, 96
        %v2136 = vpop.permute.xlu0 %2135
        %v2141 = vsel %vm1028, %v1261, %v2098
        %v2142 = vsel %vm1028, %v1266, %v2100
        %v2143 = vsel %vm1028, %v1271, %v2102
        %v2144 = vsel %vm1028, %v1276, %v2104
        %vm2145 = vcmask 523264
        %v2146 = vsel %vm2145, %v2141, %v2114
        %v2147 = vsel %vm2145, %v2142, %v2116
        %v2148 = vsel %vm2145, %v2143, %v2118
        %v2149 = vsel %vm2145, %v2144, %v2120
        %vm2150 = vcmask 785408
        %v2151 = vsel %vm2150, %v2146, %v2130
        %v2152 = vsel %vm2150, %v2147, %v2132
        %v2153 = vsel %vm2150, %v2148, %v2134
        %v2154 = vsel %vm2150, %v2149, %v2136
        %v2155 = vpack.c.bf16 %v2152, %v2151
        %v2156 = vpack.c.bf16 %v2154, %v2153
        %v2157 = vld [vmem:[%s549] sm:$0xf]
        %v2158 = vld [vmem:[%s549 + $0x4] sm:$0xf]
        %v2159 = vld [vmem:[%s549 + $0x8] sm:$0xf]
        %v2160 = vld [vmem:[%s549 + $0xc] sm:$0xf]
        %v2161 = vld [vmem:[%s549 + $0x10] sm:$0xf]
        %v2162 = vld [vmem:[%s549 + $0x14] sm:$0xf]
        %v2163 = vld [vmem:[%s549 + $0x18] sm:$0xf]
        %v2164 = vld [vmem:[%s549 + $0x1c] sm:$0xf]
        %v2165 = vld [vmem:[%s549 + $0x20] sm:$0xf]
        %v2166 = vld [vmem:[%s549 + $0x24] sm:$0xf]
        %v2167 = vld [vmem:[%s549 + $0x28] sm:$0xf]
        %v2168 = vld [vmem:[%s549 + $0x2c] sm:$0xf]
        %v2169 = vld [vmem:[%s549 + $0x30] sm:$0xf]
        %v2170 = vld [vmem:[%s549 + $0x34] sm:$0xf]
        %v2171 = vld [vmem:[%s549 + $0x38] sm:$0xf]
        %v2172 = vld [vmem:[%s549 + $0x3c] sm:$0xf]
        %v2173 = vlaneseq
        %v2174 = vshrl.u32 %v2173, 7
        %v2175 = vsub.s32 4, %v2174
        %v2176 = vrot.slane %v677, %v2175
        %v2193 = vunpack.c.l.b16 %v2157
        %v2194 = vunpack.c.l.b16 %v2158
        %v2195 = vunpack.c.l.b16 %v2159
        %v2196 = vunpack.c.l.b16 %v2160
        %v2197 = vunpack.c.l.b16 %v2161
        %v2198 = vunpack.c.l.b16 %v2162
        %v2199 = vunpack.c.l.b16 %v2163
        %v2200 = vunpack.c.l.b16 %v2164
        %v2201 = vunpack.c.l.b16 %v2165
        %v2202 = vunpack.c.l.b16 %v2166
        %v2203 = vunpack.c.l.b16 %v2167
        %v2204 = vunpack.c.l.b16 %v2168
        %v2205 = vunpack.c.l.b16 %v2169
        %v2206 = vunpack.c.l.b16 %v2170
        %v2207 = vunpack.c.l.b16 %v2171
        %v2208 = vunpack.c.l.b16 %v2172
        %v2209 = vpack.c.b16 %v2194, %v2193
        %v2210 = vpack.c.b16 %v2196, %v2195
        %v2211 = vpack.c.b16 %v2198, %v2197
        %v2212 = vpack.c.b16 %v2200, %v2199
        %v2213 = vpack.c.b16 %v2202, %v2201
        %v2214 = vpack.c.b16 %v2204, %v2203
        %v2215 = vpack.c.b16 %v2206, %v2205
        %v2216 = vpack.c.b16 %v2208, %v2207
        %2225 = vmatprep.subr.bf16.mxu0 0
        %2226 = vmatpush1.bf16.msra.mxu0 %v2216
        %2227 = vmatprep.subr.bf16.mxu0 0
        %2228 = vmatpush1.bf16.msra.mxu0 %v2215
        %2229 = vmatprep.subr.bf16.mxu0 0
        %2230 = vmatpush1.bf16.msra.mxu0 %v2214
        %2231 = vmatprep.subr.bf16.mxu0 0
        %2232 = vmatpush1.bf16.msra.mxu0 %v2213
        %2233 = vmatprep.subr.bf16.mxu0 0
        %2234 = vmatpush1.bf16.msra.mxu0 %v2212
        %2235 = vmatprep.subr.bf16.mxu0 0
        %2236 = vmatpush1.bf16.msra.mxu0 %v2211
        %2237 = vmatprep.subr.bf16.mxu0 0
        %2238 = vmatpush1.bf16.msra.mxu0 %v2210
        %2239 = vmatprep.subr.bf16.mxu0 0
        %2240 = vmatpush1.bf16.msra.mxu0 %v2209
        %2241 = vmatprep.subr.bf16.mxu0 0
        %2242 = vmatpush2.bf16.msra.mxu0 0
        %2243 = vmatprep.subr.bf16.mxu0 0
        %2244 = vmatpush2.bf16.msra.mxu0 0
        %2245 = vmatprep.subr.bf16.mxu0 0
        %2246 = vmatpush2.bf16.msra.mxu0 0
        %2247 = vmatprep.subr.bf16.mxu0 0
        %2248 = vmatpush2.bf16.msra.mxu0 0
        %2249 = vmatprep.subr.bf16.mxu0 0
        %2250 = vmatpush2.bf16.msra.mxu0 0
        %2251 = vmatprep.subr.bf16.mxu0 0
        %2252 = vmatpush2.bf16.msra.mxu0 0
        %2253 = vmatprep.subr.bf16.mxu0 0
        %2254 = vmatpush2.bf16.msra.mxu0 0
        %2255 = vmatprep.subr.bf16.mxu0 0
        %2256 = vmatpush2.bf16.msra.mxu0 0
        %2257 = vmatprep.mubr.bf16.mxu0 0
        %2258 = vmatmul.mubr.bf16.gmra.mxu0 %v2155
        %v2259 = vpop.f32.mrf.mxu0
        %v2260 = vadd.f32 %v2176, %v2259
        %v2261 = vpop.f32.mrf.mxu0
        %v2262 = vpop.f32.mrf.mxu0
        %v2263 = vadd.f32 %v2176, %v2262
        %v2264 = vpop.f32.mrf.mxu0
        %2265 = vmatprep.mubr.bf16.mxu0 0
        %2266 = vmatmul.mubr.bf16.gmra.mxu0 %v2156
        %v2267 = vpop.f32.mrf.mxu0
        %v2268 = vadd.f32 %v2176, %v2267
        %v2269 = vpop.f32.mrf.mxu0
        %v2270 = vpop.f32.mrf.mxu0
        %v2271 = vadd.f32 %v2176, %v2270
        %v2272 = vpop.f32.mrf.mxu0
        %2273 = vdwg.mxu0
        %v2274 = vadd.f32 %v673, %v2260
        %v2275 = vadd.f32 %v674, %v2263
        %v2276 = vadd.f32 %v675, %v2268
        %v2277 = vadd.f32 %v676, %v2271
        %2278 = vadd.xlane.f32.xlu0 %v2274
        %v2279 = vpop.xlane.xlu0 %2278
        %2280 = vadd.xlane.f32.xlu0 %v2275
        %v2281 = vpop.xlane.xlu0 %2280
        %2282 = vadd.xlane.f32.xlu0 %v2276
        %v2283 = vpop.xlane.xlu0 %2282
        %2284 = vadd.xlane.f32.xlu0 %v2277
        %v2285 = vpop.xlane.xlu0 %2284
        %v2286 = vmul.f32 %v2279, %v686
        %v2287 = vmul.f32 %v2281, %v686
        %v2288 = vmul.f32 %v2283, %v686
        %v2289 = vmul.f32 %v2285, %v686
        %v2290 = vsub.f32 %v2274, %v2286
        %v2291 = vsub.f32 %v2275, %v2287
        %v2292 = vsub.f32 %v2276, %v2288
        %v2293 = vsub.f32 %v2277, %v2289
        %v2294 = vmul.f32 %v2290, %v2290
        %v2295 = vmul.f32 %v2291, %v2291
        %v2296 = vmul.f32 %v2292, %v2292
        %v2297 = vmul.f32 %v2293, %v2293
        %2298 = vadd.xlane.f32.xlu0 %v2294
        %v2299 = vpop.xlane.xlu0 %2298
        %2300 = vadd.xlane.f32.xlu0 %v2295
        %v2301 = vpop.xlane.xlu0 %2300
        %2302 = vadd.xlane.f32.xlu0 %v2296
        %v2303 = vpop.xlane.xlu0 %2302
        %2304 = vadd.xlane.f32.xlu0 %v2297
        %v2305 = vpop.xlane.xlu0 %2304
        %v2306 = vmul.f32 %v2299, %v686
        %v2307 = vmul.f32 %v2301, %v686
        %v2308 = vmul.f32 %v2303, %v686
        %v2309 = vmul.f32 %v2305, %v686
        %v2310 = vadd.f32 %v2306, 1e-05
        %v2311 = vadd.f32 %v2307, 1e-05
        %v2312 = vadd.f32 %v2308, 1e-05
        %v2313 = vadd.f32 %v2309, 1e-05
        %v2314 = vrsqrt.pop %v2310
        %v2315 = vrsqrt.pop %v2311
        %v2316 = vrsqrt.pop %v2312
        %v2317 = vrsqrt.pop %v2313
        %v2318 = vmul.f32 %v2290, %v2314
        %v2319 = vmul.f32 %v2291, %v2315
        %v2320 = vmul.f32 %v2292, %v2316
        %v2321 = vmul.f32 %v2293, %v2317
        %v2322 = vlaneseq
        %v2323 = vshrl.u32 %v2322, 7
        %v2324 = vsub.s32 2, %v2323
        %v2325 = vrot.slane %v677, %v2324
        %v2326 = vmul.f32 %v2318, %v2325
        %v2327 = vmul.f32 %v2319, %v2325
        %v2328 = vmul.f32 %v2320, %v2325
        %v2329 = vmul.f32 %v2321, %v2325
        %v2330 = vlaneseq
        %v2331 = vshrl.u32 %v2330, 7
        %v2332 = vsub.s32 3, %v2331
        %v2333 = vrot.slane %v677, %v2332
        %v2334 = vadd.f32 %v2326, %v2333
        %v2335 = vadd.f32 %v2327, %v2333
        %v2336 = vadd.f32 %v2328, %v2333
        %v2337 = vadd.f32 %v2329, %v2333
        %v2338 = vpack.c.bf16 %v2335, %v2334
        %v2339 = vpack.c.bf16 %v2337, %v2336
        %v2340 = vld [vmem:[%s558] sm:$0xff]
        %v2341 = vld [vmem:[%s558 + $0x8] sm:$0xff]
        %v2342 = vld [vmem:[%s558 + $0x10] sm:$0xff]
        %v2343 = vld [vmem:[%s558 + $0x18] sm:$0xff]
        %v2344 = vld [vmem:[%s558 + $0x20] sm:$0xff]
        %v2345 = vld [vmem:[%s558 + $0x28] sm:$0xff]
        %v2346 = vld [vmem:[%s558 + $0x30] sm:$0xff]
        %v2347 = vld [vmem:[%s558 + $0x38] sm:$0xff]
        %v2348 = vld [vmem:[%s558 + $0x40] sm:$0xff]
        %v2349 = vld [vmem:[%s558 + $0x48] sm:$0xff]
        %v2350 = vld [vmem:[%s558 + $0x50] sm:$0xff]
        %v2351 = vld [vmem:[%s558 + $0x58] sm:$0xff]
        %v2352 = vld [vmem:[%s558 + $0x60] sm:$0xff]
        %v2353 = vld [vmem:[%s558 + $0x68] sm:$0xff]
        %v2354 = vld [vmem:[%s558 + $0x70] sm:$0xff]
        %v2355 = vld [vmem:[%s558 + $0x78] sm:$0xff]
        %v2356 = vld [vmem:[%s558 + $0x80] sm:$0xff]
        %v2357 = vld [vmem:[%s558 + $0x88] sm:$0xff]
        %v2358 = vld [vmem:[%s558 + $0x90] sm:$0xff]
        %v2359 = vld [vmem:[%s558 + $0x98] sm:$0xff]
        %v2360 = vld [vmem:[%s558 + $0xa0] sm:$0xff]
        %v2361 = vld [vmem:[%s558 + $0xa8] sm:$0xff]
        %v2362 = vld [vmem:[%s558 + $0xb0] sm:$0xff]
        %v2363 = vld [vmem:[%s558 + $0xb8] sm:$0xff]
        %v2364 = vld [vmem:[%s558 + $0xc0] sm:$0xff]
        %v2365 = vld [vmem:[%s558 + $0xc8] sm:$0xff]
        %v2366 = vld [vmem:[%s558 + $0xd0] sm:$0xff]
        %v2367 = vld [vmem:[%s558 + $0xd8] sm:$0xff]
        %v2368 = vld [vmem:[%s558 + $0xe0] sm:$0xff]
        %v2369 = vld [vmem:[%s558 + $0xe8] sm:$0xff]
        %v2370 = vld [vmem:[%s558 + $0xf0] sm:$0xff]
        %v2371 = vld [vmem:[%s558 + $0xf8] sm:$0xff]
        %v2372 = vld [vmem:[%s567] sm:$0xf]
        %v2374 = vlaneseq
        %v2375 = vshrl.u32 %v2374, 7
        %v2376 = vsub.s32 0, %v2375
        %v2377 = vrot.slane %v2372, %v2376
        %v2378 = vlaneseq
        %v2379 = vshrl.u32 %v2378, 7
        %v2380 = vsub.s32 1, %v2379
        %v2381 = vrot.slane %v2372, %v2380
        %v2382 = vlaneseq
        %v2383 = vshrl.u32 %v2382, 7
        %v2384 = vsub.s32 2, %v2383
        %v2385 = vrot.slane %v2372, %v2384
        %v2386 = vlaneseq
        %v2387 = vshrl.u32 %v2386, 7
        %v2388 = vsub.s32 3, %v2387
        %v2389 = vrot.slane %v2372, %v2388
        %v2426 = vunpack.c.l.b16 %v2340
        %v2427 = vunpack.c.h.b16 %v2340
        %v2428 = vunpack.c.l.b16 %v2341
        %v2429 = vunpack.c.h.b16 %v2341
        %v2430 = vunpack.c.l.b16 %v2342
        %v2431 = vunpack.c.h.b16 %v2342
        %v2432 = vunpack.c.l.b16 %v2343
        %v2433 = vunpack.c.h.b16 %v2343
        %v2434 = vunpack.c.l.b16 %v2344
        %v2435 = vunpack.c.h.b16 %v2344
        %v2436 = vunpack.c.l.b16 %v2345
        %v2437 = vunpack.c.h.b16 %v2345
        %v2438 = vunpack.c.l.b16 %v2346
        %v2439 = vunpack.c.h.b16 %v2346
        %v2440 = vunpack.c.l.b16 %v2347
        %v2441 = vunpack.c.h.b16 %v2347
        %v2442 = vunpack.c.l.b16 %v2348
        %v2443 = vunpack.c.h.b16 %v2348
        %v2444 = vunpack.c.l.b16 %v2349
        %v2445 = vunpack.c.h.b16 %v2349
        %v2446 = vunpack.c.l.b16 %v2350
        %v2447 = vunpack.c.h.b16 %v2350
        %v2448 = vunpack.c.l.b16 %v2351
        %v2449 = vunpack.c.h.b16 %v2351
        %v2450 = vunpack.c.l.b16 %v2352
        %v2451 = vunpack.c.h.b16 %v2352
        %v2452 = vunpack.c.l.b16 %v2353
        %v2453 = vunpack.c.h.b16 %v2353
        %v2454 = vunpack.c.l.b16 %v2354
        %v2455 = vunpack.c.h.b16 %v2354
        %v2456 = vunpack.c.l.b16 %v2355
        %v2457 = vunpack.c.h.b16 %v2355
        %v2458 = vunpack.c.l.b16 %v2356
        %v2459 = vunpack.c.h.b16 %v2356
        %v2460 = vunpack.c.l.b16 %v2357
        %v2461 = vunpack.c.h.b16 %v2357
        %v2462 = vunpack.c.l.b16 %v2358
        %v2463 = vunpack.c.h.b16 %v2358
        %v2464 = vunpack.c.l.b16 %v2359
        %v2465 = vunpack.c.h.b16 %v2359
        %v2466 = vunpack.c.l.b16 %v2360
        %v2467 = vunpack.c.h.b16 %v2360
        %v2468 = vunpack.c.l.b16 %v2361
        %v2469 = vunpack.c.h.b16 %v2361
        %v2470 = vunpack.c.l.b16 %v2362
        %v2471 = vunpack.c.h.b16 %v2362
        %v2472 = vunpack.c.l.b16 %v2363
        %v2473 = vunpack.c.h.b16 %v2363
        %v2474 = vunpack.c.l.b16 %v2364
        %v2475 = vunpack.c.h.b16 %v2364
        %v2476 = vunpack.c.l.b16 %v2365
        %v2477 = vunpack.c.h.b16 %v2365
        %v2478 = vunpack.c.l.b16 %v2366
        %v2479 = vunpack.c.h.b16 %v2366
        %v2480 = vunpack.c.l.b16 %v2367
        %v2481 = vunpack.c.h.b16 %v2367
        %v2482 = vunpack.c.l.b16 %v2368
        %v2483 = vunpack.c.h.b16 %v2368
        %v2484 = vunpack.c.l.b16 %v2369
        %v2485 = vunpack.c.h.b16 %v2369
        %v2486 = vunpack.c.l.b16 %v2370
        %v2487 = vunpack.c.h.b16 %v2370
        %v2488 = vunpack.c.l.b16 %v2371
        %v2489 = vunpack.c.h.b16 %v2371
        %v2490 = vpack.c.b16 %v2430, %v2426
        %v2491 = vpack.c.b16 %v2431, %v2427
        %v2492 = vpack.c.b16 %v2432, %v2428
        %v2493 = vpack.c.b16 %v2433, %v2429
        %v2494 = vpack.c.b16 %v2438, %v2434
        %v2495 = vpack.c.b16 %v2439, %v2435
        %v2496 = vpack.c.b16 %v2440, %v2436
        %v2497 = vpack.c.b16 %v2441, %v2437
        %v2498 = vpack.c.b16 %v2446, %v2442
        %v2499 = vpack.c.b16 %v2447, %v2443
        %v2500 = vpack.c.b16 %v2448, %v2444
        %v2501 = vpack.c.b16 %v2449, %v2445
        %v2502 = vpack.c.b16 %v2454, %v2450
        %v2503 = vpack.c.b16 %v2455, %v2451
        %v2504 = vpack.c.b16 %v2456, %v2452
        %v2505 = vpack.c.b16 %v2457, %v2453
        %v2506 = vpack.c.b16 %v2462, %v2458
        %v2507 = vpack.c.b16 %v2463, %v2459
        %v2508 = vpack.c.b16 %v2464, %v2460
        %v2509 = vpack.c.b16 %v2465, %v2461
        %v2510 = vpack.c.b16 %v2470, %v2466
        %v2511 = vpack.c.b16 %v2471, %v2467
        %v2512 = vpack.c.b16 %v2472, %v2468
        %v2513 = vpack.c.b16 %v2473, %v2469
        %v2514 = vpack.c.b16 %v2478, %v2474
        %v2515 = vpack.c.b16 %v2479, %v2475
        %v2516 = vpack.c.b16 %v2480, %v2476
        %v2517 = vpack.c.b16 %v2481, %v2477
        %v2518 = vpack.c.b16 %v2486, %v2482
        %v2519 = vpack.c.b16 %v2487, %v2483
        %v2520 = vpack.c.b16 %v2488, %v2484
        %v2521 = vpack.c.b16 %v2489, %v2485
        %2554 = vmatprep.subr.bf16.mxu0 %v2519
        %2555 = vmatpush1.bf16.msra.mxu0 %v2518
        %2556 = vmatprep.subr.bf16.mxu0 %v2515
        %2557 = vmatpush1.bf16.msra.mxu0 %v2514
        %2558 = vmatprep.subr.bf16.mxu0 %v2511
        %2559 = vmatpush1.bf16.msra.mxu0 %v2510
        %2560 = vmatprep.subr.bf16.mxu0 %v2507
        %2561 = vmatpush1.bf16.msra.mxu0 %v2506
        %2562 = vmatprep.subr.bf16.mxu0 %v2503
        %2563 = vmatpush1.bf16.msra.mxu0 %v2502
        %2564 = vmatprep.subr.bf16.mxu0 %v2499
        %2565 = vmatpush1.bf16.msra.mxu0 %v2498
        %2566 = vmatprep.subr.bf16.mxu0 %v2495
        %2567 = vmatpush1.bf16.msra.mxu0 %v2494
        %2568 = vmatprep.subr.bf16.mxu0 %v2491
        %2569 = vmatpush1.bf16.msra.mxu0 %v2490
        %2570 = vmatprep.subr.bf16.mxu0 0
        %2571 = vmatpush2.bf16.msra.mxu0 0
        %2572 = vmatprep.subr.bf16.mxu0 0
        %2573 = vmatpush2.bf16.msra.mxu0 0
        %2574 = vmatprep.subr.bf16.mxu0 0
        %2575 = vmatpush2.bf16.msra.mxu0 0
        %2576 = vmatprep.subr.bf16.mxu0 0
        %2577 = vmatpush2.bf16.msra.mxu0 0
        %2578 = vmatprep.subr.bf16.mxu0 0
        %2579 = vmatpush2.bf16.msra.mxu0 0
        %2580 = vmatprep.subr.bf16.mxu0 0
        %2581 = vmatpush2.bf16.msra.mxu0 0
        %2582 = vmatprep.subr.bf16.mxu0 0
        %2583 = vmatpush2.bf16.msra.mxu0 0
        %2584 = vmatprep.subr.bf16.mxu0 0
        %2585 = vmatpush2.bf16.msra.mxu0 0
        %2586 = vmatprep.mubr.bf16.mxu0 0
        %2587 = vmatmul.mubr.bf16.gmra.mxu0 %v2338
        %v2588 = vpop.f32.mrf.mxu0
        %v2589 = vadd.f32 %v2377, %v2588
        %v2590 = vpop.f32.mrf.mxu0
        %v2591 = vadd.f32 %v2381, %v2590
        %v2592 = vpop.f32.mrf.mxu0
        %v2593 = vadd.f32 %v2377, %v2592
        %v2594 = vpop.f32.mrf.mxu0
        %v2595 = vadd.f32 %v2381, %v2594
        %2596 = vmatprep.mubr.bf16.mxu0 0
        %2597 = vmatmul.mubr.bf16.gmra.mxu0 %v2339
        %v2598 = vpop.f32.mrf.mxu0
        %v2599 = vadd.f32 %v2377, %v2598
        %v2600 = vpop.f32.mrf.mxu0
        %v2601 = vadd.f32 %v2381, %v2600
        %v2602 = vpop.f32.mrf.mxu0
        %v2603 = vadd.f32 %v2377, %v2602
        %v2604 = vpop.f32.mrf.mxu0
        %v2605 = vadd.f32 %v2381, %v2604
        %2606 = vdwg.mxu0
        %2607 = vmatprep.subr.bf16.mxu0 %v2521
        %2608 = vmatpush1.bf16.msra.mxu0 %v2520
        %2609 = vmatprep.subr.bf16.mxu0 %v2517
        %2610 = vmatpush1.bf16.msra.mxu0 %v2516
        %2611 = vmatprep.subr.bf16.mxu0 %v2513
        %2612 = vmatpush1.bf16.msra.mxu0 %v2512
        %2613 = vmatprep.subr.bf16.mxu0 %v2509
        %2614 = vmatpush1.bf16.msra.mxu0 %v2508
        %2615 = vmatprep.subr.bf16.mxu0 %v2505
        %2616 = vmatpush1.bf16.msra.mxu0 %v2504
        %2617 = vmatprep.subr.bf16.mxu0 %v2501
        %2618 = vmatpush1.bf16.msra.mxu0 %v2500
        %2619 = vmatprep.subr.bf16.mxu0 %v2497
        %2620 = vmatpush1.bf16.msra.mxu0 %v2496
        %2621 = vmatprep.subr.bf16.mxu0 %v2493
        %2622 = vmatpush1.bf16.msra.mxu0 %v2492
        %2623 = vmatprep.subr.bf16.mxu0 0
        %2624 = vmatpush2.bf16.msra.mxu0 0
        %2625 = vmatprep.subr.bf16.mxu0 0
        %2626 = vmatpush2.bf16.msra.mxu0 0
        %2627 = vmatprep.subr.bf16.mxu0 0
        %2628 = vmatpush2.bf16.msra.mxu0 0
        %2629 = vmatprep.subr.bf16.mxu0 0
        %2630 = vmatpush2.bf16.msra.mxu0 0
        %2631 = vmatprep.subr.bf16.mxu0 0
        %2632 = vmatpush2.bf16.msra.mxu0 0
        %2633 = vmatprep.subr.bf16.mxu0 0
        %2634 = vmatpush2.bf16.msra.mxu0 0
        %2635 = vmatprep.subr.bf16.mxu0 0
        %2636 = vmatpush2.bf16.msra.mxu0 0
        %2637 = vmatprep.subr.bf16.mxu0 0
        %2638 = vmatpush2.bf16.msra.mxu0 0
        %2639 = vmatprep.mubr.bf16.mxu0 0
        %2640 = vmatmul.mubr.bf16.gmra.mxu0 %v2338
        %v2641 = vpop.f32.mrf.mxu0
        %v2642 = vadd.f32 %v2385, %v2641
        %v2643 = vpop.f32.mrf.mxu0
        %v2644 = vadd.f32 %v2389, %v2643
        %v2645 = vpop.f32.mrf.mxu0
        %v2646 = vadd.f32 %v2385, %v2645
        %v2647 = vpop.f32.mrf.mxu0
        %v2648 = vadd.f32 %v2389, %v2647
        %2649 = vmatprep.mubr.bf16.mxu0 0
        %2650 = vmatmul.mubr.bf16.gmra.mxu0 %v2339
        %v2651 = vpop.f32.mrf.mxu0
        %v2652 = vadd.f32 %v2385, %v2651
        %v2653 = vpop.f32.mrf.mxu0
        %v2654 = vadd.f32 %v2389, %v2653
        %v2655 = vpop.f32.mrf.mxu0
        %v2656 = vadd.f32 %v2385, %v2655
        %v2657 = vpop.f32.mrf.mxu0
        %v2658 = vadd.f32 %v2389, %v2657
        %2659 = vdwg.mxu0
        %v2660 = vmul.f32 %v2589, 1.702
        %v2661 = vmul.f32 %v2591, 1.702
        %v2662 = vmul.f32 %v2642, 1.702
        %v2663 = vmul.f32 %v2644, 1.702
        %v2664 = vmul.f32 %v2593, 1.702
        %v2665 = vmul.f32 %v2595, 1.702
        %v2666 = vmul.f32 %v2646, 1.702
        %v2667 = vmul.f32 %v2648, 1.702
        %v2668 = vmul.f32 %v2599, 1.702
        %v2669 = vmul.f32 %v2601, 1.702
        %v2670 = vmul.f32 %v2652, 1.702
        %v2671 = vmul.f32 %v2654, 1.702
        %v2672 = vmul.f32 %v2603, 1.702
        %v2673 = vmul.f32 %v2605, 1.702
        %v2674 = vmul.f32 %v2656, 1.702
        %v2675 = vmul.f32 %v2658, 1.702
        %v2676 = vxor.u32 %v2660, 2147483648
        %v2677 = vxor.u32 %v2661, 2147483648
        %v2678 = vxor.u32 %v2662, 2147483648
        %v2679 = vxor.u32 %v2663, 2147483648
        %v2680 = vxor.u32 %v2664, 2147483648
        %v2681 = vxor.u32 %v2665, 2147483648
        %v2682 = vxor.u32 %v2666, 2147483648
        %v2683 = vxor.u32 %v2667, 2147483648
        %v2684 = vxor.u32 %v2668, 2147483648
        %v2685 = vxor.u32 %v2669, 2147483648
        %v2686 = vxor.u32 %v2670, 2147483648
        %v2687 = vxor.u32 %v2671, 2147483648
        %v2688 = vxor.u32 %v2672, 2147483648
        %v2689 = vxor.u32 %v2673, 2147483648
        %v2690 = vxor.u32 %v2674, 2147483648
        %v2691 = vxor.u32 %v2675, 2147483648
        %v2692 = vmul.f32 %v2676, 1.442695
        %v2693 = vpow.pop %v2692
        %v2694 = vmul.f32 %v2677, 1.442695
        %v2695 = vpow.pop %v2694
        %v2696 = vmul.f32 %v2678, 1.442695
        %v2697 = vpow.pop %v2696
        %v2698 = vmul.f32 %v2679, 1.442695
        %v2699 = vpow.pop %v2698
        %v2700 = vmul.f32 %v2680, 1.442695
        %v2701 = vpow.pop %v2700
        %v2702 = vmul.f32 %v2681, 1.442695
        %v2703 = vpow.pop %v2702
        %v2704 = vmul.f32 %v2682, 1.442695
        %v2705 = vpow.pop %v2704
        %v2706 = vmul.f32 %v2683, 1.442695
        %v2707 = vpow.pop %v2706
        %v2708 = vmul.f32 %v2684, 1.442695
        %v2709 = vpow.pop %v2708
        %v2710 = vmul.f32 %v2685, 1.442695
        %v2711 = vpow.pop %v2710
        %v2712 = vmul.f32 %v2686, 1.442695
        %v2713 = vpow.pop %v2712
        %v2714 = vmul.f32 %v2687, 1.442695
        %v2715 = vpow.pop %v2714
        %v2716 = vmul.f32 %v2688, 1.442695
        %v2717 = vpow.pop %v2716
        %v2718 = vmul.f32 %v2689, 1.442695
        %v2719 = vpow.pop %v2718
        %v2720 = vmul.f32 %v2690, 1.442695
        %v2721 = vpow.pop %v2720
        %v2722 = vmul.f32 %v2691, 1.442695
        %v2723 = vpow.pop %v2722
        %v2724 = vadd.f32 %v2693, 1.0
        %v2725 = vadd.f32 %v2695, 1.0
        %v2726 = vadd.f32 %v2697, 1.0
        %v2727 = vadd.f32 %v2699, 1.0
        %v2728 = vadd.f32 %v2701, 1.0
        %v2729 = vadd.f32 %v2703, 1.0
        %v2730 = vadd.f32 %v2705, 1.0
        %v2731 = vadd.f32 %v2707, 1.0
        %v2732 = vadd.f32 %v2709, 1.0
        %v2733 = vadd.f32 %v2711, 1.0
        %v2734 = vadd.f32 %v2713, 1.0
        %v2735 = vadd.f32 %v2715, 1.0
        %v2736 = vadd.f32 %v2717, 1.0
        %v2737 = vadd.f32 %v2719, 1.0
        %v2738 = vadd.f32 %v2721, 1.0
        %v2739 = vadd.f32 %v2723, 1.0
        %v2740 = vrcp.pop %v2724
        %v2741 = vmul.f32 1.0, %v2740
        %v2742 = vrcp.pop %v2725
        %v2743 = vmul.f32 1.0, %v2742
        %v2744 = vrcp.pop %v2726
        %v2745 = vmul.f32 1.0, %v2744
        %v2746 = vrcp.pop %v2727
        %v2747 = vmul.f32 1.0, %v2746
        %v2748 = vrcp.pop %v2728
        %v2749 = vmul.f32 1.0, %v2748
        %v2750 = vrcp.pop %v2729
        %v2751 = vmul.f32 1.0, %v2750
        %v2752 = vrcp.pop %v2730
        %v2753 = vmul.f32 1.0, %v2752
        %v2754 = vrcp.pop %v2731
        %v2755 = vmul.f32 1.0, %v2754
        %v2756 = vrcp.pop %v2732
        %v2757 = vmul.f32 1.0, %v2756
        %v2758 = vrcp.pop %v2733
        %v2759 = vmul.f32 1.0, %v2758
        %v2760 = vrcp.pop %v2734
        %v2761 = vmul.f32 1.0, %v2760
        %v2762 = vrcp.pop %v2735
        %v2763 = vmul.f32 1.0, %v2762
        %v2764 = vrcp.pop %v2736
        %v2765 = vmul.f32 1.0, %v2764
        %v2766 = vrcp.pop %v2737
        %v2767 = vmul.f32 1.0, %v2766
        %v2768 = vrcp.pop %v2738
        %v2769 = vmul.f32 1.0, %v2768
        %v2770 = vrcp.pop %v2739
        %v2771 = vmul.f32 1.0, %v2770
        %v2772 = vmul.f32 %v2589, %v2741
        %v2773 = vmul.f32 %v2591, %v2743
        %v2774 = vmul.f32 %v2642, %v2745
        %v2775 = vmul.f32 %v2644, %v2747
        %v2776 = vmul.f32 %v2593, %v2749
        %v2777 = vmul.f32 %v2595, %v2751
        %v2778 = vmul.f32 %v2646, %v2753
        %v2779 = vmul.f32 %v2648, %v2755
        %v2780 = vmul.f32 %v2599, %v2757
        %v2781 = vmul.f32 %v2601, %v2759
        %v2782 = vmul.f32 %v2652, %v2761
        %v2783 = vmul.f32 %v2654, %v2763
        %v2784 = vmul.f32 %v2603, %v2765
        %v2785 = vmul.f32 %v2605, %v2767
        %v2786 = vmul.f32 %v2656, %v2769
        %v2787 = vmul.f32 %v2658, %v2771
        %v2788 = vpack.c.bf16 %v2776, %v2772
        %v2789 = vpack.c.bf16 %v2777, %v2773
        %v2790 = vpack.c.bf16 %v2778, %v2774
        %v2791 = vpack.c.bf16 %v2779, %v2775
        %v2792 = vpack.c.bf16 %v2784, %v2780
        %v2793 = vpack.c.bf16 %v2785, %v2781
        %v2794 = vpack.c.bf16 %v2786, %v2782
        %v2795 = vpack.c.bf16 %v2787, %v2783
        %v2796 = vld [vmem:[%s576] sm:$0xf]
        %v2797 = vld [vmem:[%s576 + $0x4] sm:$0xf]
        %v2798 = vld [vmem:[%s576 + $0x8] sm:$0xf]
        %v2799 = vld [vmem:[%s576 + $0xc] sm:$0xf]
        %v2800 = vld [vmem:[%s576 + $0x10] sm:$0xf]
        %v2801 = vld [vmem:[%s576 + $0x14] sm:$0xf]
        %v2802 = vld [vmem:[%s576 + $0x18] sm:$0xf]
        %v2803 = vld [vmem:[%s576 + $0x1c] sm:$0xf]
        %v2804 = vld [vmem:[%s576 + $0x20] sm:$0xf]
        %v2805 = vld [vmem:[%s576 + $0x24] sm:$0xf]
        %v2806 = vld [vmem:[%s576 + $0x28] sm:$0xf]
        %v2807 = vld [vmem:[%s576 + $0x2c] sm:$0xf]
        %v2808 = vld [vmem:[%s576 + $0x30] sm:$0xf]
        %v2809 = vld [vmem:[%s576 + $0x34] sm:$0xf]
        %v2810 = vld [vmem:[%s576 + $0x38] sm:$0xf]
        %v2811 = vld [vmem:[%s576 + $0x3c] sm:$0xf]
        %v2812 = vld [vmem:[%s576 + $0x40] sm:$0xf]
        %v2813 = vld [vmem:[%s576 + $0x44] sm:$0xf]
        %v2814 = vld [vmem:[%s576 + $0x48] sm:$0xf]
        %v2815 = vld [vmem:[%s576 + $0x4c] sm:$0xf]
        %v2816 = vld [vmem:[%s576 + $0x50] sm:$0xf]
        %v2817 = vld [vmem:[%s576 + $0x54] sm:$0xf]
        %v2818 = vld [vmem:[%s576 + $0x58] sm:$0xf]
        %v2819 = vld [vmem:[%s576 + $0x5c] sm:$0xf]
        %v2820 = vld [vmem:[%s576 + $0x60] sm:$0xf]
        %v2821 = vld [vmem:[%s576 + $0x64] sm:$0xf]
        %v2822 = vld [vmem:[%s576 + $0x68] sm:$0xf]
        %v2823 = vld [vmem:[%s576 + $0x6c] sm:$0xf]
        %v2824 = vld [vmem:[%s576 + $0x70] sm:$0xf]
        %v2825 = vld [vmem:[%s576 + $0x74] sm:$0xf]
        %v2826 = vld [vmem:[%s576 + $0x78] sm:$0xf]
        %v2827 = vld [vmem:[%s576 + $0x7c] sm:$0xf]
        %v2828 = vld [vmem:[%s576 + $0x80] sm:$0xf]
        %v2829 = vld [vmem:[%s576 + $0x84] sm:$0xf]
        %v2830 = vld [vmem:[%s576 + $0x88] sm:$0xf]
        %v2831 = vld [vmem:[%s576 + $0x8c] sm:$0xf]
        %v2832 = vld [vmem:[%s576 + $0x90] sm:$0xf]
        %v2833 = vld [vmem:[%s576 + $0x94] sm:$0xf]
        %v2834 = vld [vmem:[%s576 + $0x98] sm:$0xf]
        %v2835 = vld [vmem:[%s576 + $0x9c] sm:$0xf]
        %v2836 = vld [vmem:[%s576 + $0xa0] sm:$0xf]
        %v2837 = vld [vmem:[%s576 + $0xa4] sm:$0xf]
        %v2838 = vld [vmem:[%s576 + $0xa8] sm:$0xf]
        %v2839 = vld [vmem:[%s576 + $0xac] sm:$0xf]
        %v2840 = vld [vmem:[%s576 + $0xb0] sm:$0xf]
        %v2841 = vld [vmem:[%s576 + $0xb4] sm:$0xf]
        %v2842 = vld [vmem:[%s576 + $0xb8] sm:$0xf]
        %v2843 = vld [vmem:[%s576 + $0xbc] sm:$0xf]
        %v2844 = vld [vmem:[%s576 + $0xc0] sm:$0xf]
        %v2845 = vld [vmem:[%s576 + $0xc4] sm:$0xf]
        %v2846 = vld [vmem:[%s576 + $0xc8] sm:$0xf]
        %v2847 = vld [vmem:[%s576 + $0xcc] sm:$0xf]
        %v2848 = vld [vmem:[%s576 + $0xd0] sm:$0xf]
        %v2849 = vld [vmem:[%s576 + $0xd4] sm:$0xf]
        %v2850 = vld [vmem:[%s576 + $0xd8] sm:$0xf]
        %v2851 = vld [vmem:[%s576 + $0xdc] sm:$0xf]
        %v2852 = vld [vmem:[%s576 + $0xe0] sm:$0xf]
        %v2853 = vld [vmem:[%s576 + $0xe4] sm:$0xf]
        %v2854 = vld [vmem:[%s576 + $0xe8] sm:$0xf]
        %v2855 = vld [vmem:[%s576 + $0xec] sm:$0xf]
        %v2856 = vld [vmem:[%s576 + $0xf0] sm:$0xf]
        %v2857 = vld [vmem:[%s576 + $0xf4] sm:$0xf]
        %v2858 = vld [vmem:[%s576 + $0xf8] sm:$0xf]
        %v2859 = vld [vmem:[%s576 + $0xfc] sm:$0xf]
        %v2860 = vlaneseq
        %v2861 = vshrl.u32 %v2860, 7
        %v2862 = vsub.s32 5, %v2861
        %v2863 = vrot.slane %v677, %v2862
        %v2928 = vunpack.c.l.b16 %v2796
        %v2929 = vunpack.c.l.b16 %v2797
        %v2930 = vunpack.c.l.b16 %v2798
        %v2931 = vunpack.c.l.b16 %v2799
        %v2932 = vunpack.c.l.b16 %v2800
        %v2933 = vunpack.c.l.b16 %v2801
        %v2934 = vunpack.c.l.b16 %v2802
        %v2935 = vunpack.c.l.b16 %v2803
        %v2936 = vunpack.c.l.b16 %v2804
        %v2937 = vunpack.c.l.b16 %v2805
        %v2938 = vunpack.c.l.b16 %v2806
        %v2939 = vunpack.c.l.b16 %v2807
        %v2940 = vunpack.c.l.b16 %v2808
        %v2941 = vunpack.c.l.b16 %v2809
        %v2942 = vunpack.c.l.b16 %v2810
        %v2943 = vunpack.c.l.b16 %v2811
        %v2944 = vunpack.c.l.b16 %v2812
        %v2945 = vunpack.c.l.b16 %v2813
        %v2946 = vunpack.c.l.b16 %v2814
        %v2947 = vunpack.c.l.b16 %v2815
        %v2948 = vunpack.c.l.b16 %v2816
        %v2949 = vunpack.c.l.b16 %v2817
        %v2950 = vunpack.c.l.b16 %v2818
        %v2951 = vunpack.c.l.b16 %v2819
        %v2952 = vunpack.c.l.b16 %v2820
        %v2953 = vunpack.c.l.b16 %v2821
        %v2954 = vunpack.c.l.b16 %v2822
        %v2955 = vunpack.c.l.b16 %v2823
        %v2956 = vunpack.c.l.b16 %v2824
        %v2957 = vunpack.c.l.b16 %v2825
        %v2958 = vunpack.c.l.b16 %v2826
        %v2959 = vunpack.c.l.b16 %v2827
        %v2960 = vunpack.c.l.b16 %v2828
        %v2961 = vunpack.c.l.b16 %v2829
        %v2962 = vunpack.c.l.b16 %v2830
        %v2963 = vunpack.c.l.b16 %v2831
        %v2964 = vunpack.c.l.b16 %v2832
        %v2965 = vunpack.c.l.b16 %v2833
        %v2966 = vunpack.c.l.b16 %v2834
        %v2967 = vunpack.c.l.b16 %v2835
        %v2968 = vunpack.c.l.b16 %v2836
        %v2969 = vunpack.c.l.b16 %v2837
        %v2970 = vunpack.c.l.b16 %v2838
        %v2971 = vunpack.c.l.b16 %v2839
        %v2972 = vunpack.c.l.b16 %v2840
        %v2973 = vunpack.c.l.b16 %v2841
        %v2974 = vunpack.c.l.b16 %v2842
        %v2975 = vunpack.c.l.b16 %v2843
        %v2976 = vunpack.c.l.b16 %v2844
        %v2977 = vunpack.c.l.b16 %v2845
        %v2978 = vunpack.c.l.b16 %v2846
        %v2979 = vunpack.c.l.b16 %v2847
        %v2980 = vunpack.c.l.b16 %v2848
        %v2981 = vunpack.c.l.b16 %v2849
        %v2982 = vunpack.c.l.b16 %v2850
        %v2983 = vunpack.c.l.b16 %v2851
        %v2984 = vunpack.c.l.b16 %v2852
        %v2985 = vunpack.c.l.b16 %v2853
        %v2986 = vunpack.c.l.b16 %v2854
        %v2987 = vunpack.c.l.b16 %v2855
        %v2988 = vunpack.c.l.b16 %v2856
        %v2989 = vunpack.c.l.b16 %v2857
        %v2990 = vunpack.c.l.b16 %v2858
        %v2991 = vunpack.c.l.b16 %v2859
        %v2992 = vpack.c.b16 %v2929, %v2928
        %v2993 = vpack.c.b16 %v2931, %v2930
        %v2994 = vpack.c.b16 %v2933, %v2932
        %v2995 = vpack.c.b16 %v2935, %v2934
        %v2996 = vpack.c.b16 %v2937, %v2936
        %v2997 = vpack.c.b16 %v2939, %v2938
        %v2998 = vpack.c.b16 %v2941, %v2940
        %v2999 = vpack.c.b16 %v2943, %v2942
        %v3000 = vpack.c.b16 %v2945, %v2944
        %v3001 = vpack.c.b16 %v2947, %v2946
        %v3002 = vpack.c.b16 %v2949, %v2948
        %v3003 = vpack.c.b16 %v2951, %v2950
        %v3004 = vpack.c.b16 %v2953, %v2952
        %v3005 = vpack.c.b16 %v2955, %v2954
        %v3006 = vpack.c.b16 %v2957, %v2956
        %v3007 = vpack.c.b16 %v2959, %v2958
        %v3008 = vpack.c.b16 %v2961, %v2960
        %v3009 = vpack.c.b16 %v2963, %v2962
        %v3010 = vpack.c.b16 %v2965, %v2964
        %v3011 = vpack.c.b16 %v2967, %v2966
        %v3012 = vpack.c.b16 %v2969, %v2968
        %v3013 = vpack.c.b16 %v2971, %v2970
        %v3014 = vpack.c.b16 %v2973, %v2972
        %v3015 = vpack.c.b16 %v2975, %v2974
        %v3016 = vpack.c.b16 %v2977, %v2976
        %v3017 = vpack.c.b16 %v2979, %v2978
        %v3018 = vpack.c.b16 %v2981, %v2980
        %v3019 = vpack.c.b16 %v2983, %v2982
        %v3020 = vpack.c.b16 %v2985, %v2984
        %v3021 = vpack.c.b16 %v2987, %v2986
        %v3022 = vpack.c.b16 %v2989, %v2988
        %v3023 = vpack.c.b16 %v2991, %v2990
        %3056 = vmatprep.subr.bf16.mxu0 0
        %3057 = vmatpush1.bf16.msra.mxu0 %v2999
        %3058 = vmatprep.subr.bf16.mxu0 0
        %3059 = vmatpush1.bf16.msra.mxu0 %v2998
        %3060 = vmatprep.subr.bf16.mxu0 0
        %3061 = vmatpush1.bf16.msra.mxu0 %v2997
        %3062 = vmatprep.subr.bf16.mxu0 0
        %3063 = vmatpush1.bf16.msra.mxu0 %v2996
        %3064 = vmatprep.subr.bf16.mxu0 0
        %3065 = vmatpush1.bf16.msra.mxu0 %v2995
        %3066 = vmatprep.subr.bf16.mxu0 0
        %3067 = vmatpush1.bf16.msra.mxu0 %v2994
        %3068 = vmatprep.subr.bf16.mxu0 0
        %3069 = vmatpush1.bf16.msra.mxu0 %v2993
        %3070 = vmatprep.subr.bf16.mxu0 0
        %3071 = vmatpush1.bf16.msra.mxu0 %v2992
        %3072 = vmatprep.subr.bf16.mxu0 0
        %3073 = vmatpush2.bf16.msra.mxu0 %v3007
        %3074 = vmatprep.subr.bf16.mxu0 0
        %3075 = vmatpush2.bf16.msra.mxu0 %v3006
        %3076 = vmatprep.subr.bf16.mxu0 0
        %3077 = vmatpush2.bf16.msra.mxu0 %v3005
        %3078 = vmatprep.subr.bf16.mxu0 0
        %3079 = vmatpush2.bf16.msra.mxu0 %v3004
        %3080 = vmatprep.subr.bf16.mxu0 0
        %3081 = vmatpush2.bf16.msra.mxu0 %v3003
        %3082 = vmatprep.subr.bf16.mxu0 0
        %3083 = vmatpush2.bf16.msra.mxu0 %v3002
        %3084 = vmatprep.subr.bf16.mxu0 0
        %3085 = vmatpush2.bf16.msra.mxu0 %v3001
        %3086 = vmatprep.subr.bf16.mxu0 0
        %3087 = vmatpush2.bf16.msra.mxu0 %v3000
        %3088 = vmatprep.mubr.bf16.mxu0 %v2789
        %3089 = vmatmul.mubr.bf16.gmra.mxu0 %v2788
        %v3090 = vpop.f32.mrf.mxu0
        %v3091 = vadd.f32 %v2863, %v3090
        %v3092 = vpop.f32.mrf.mxu0
        %v3093 = vpop.f32.mrf.mxu0
        %v3094 = vadd.f32 %v2863, %v3093
        %v3095 = vpop.f32.mrf.mxu0
        %3096 = vmatprep.mubr.bf16.mxu0 %v2793
        %3097 = vmatmul.mubr.bf16.gmra.mxu0 %v2792
        %v3098 = vpop.f32.mrf.mxu0
        %v3099 = vadd.f32 %v2863, %v3098
        %v3100 = vpop.f32.mrf.mxu0
        %v3101 = vpop.f32.mrf.mxu0
        %v3102 = vadd.f32 %v2863, %v3101
        %v3103 = vpop.f32.mrf.mxu0
        %3104 = vdwg.mxu0
        %3105 = vmatprep.subr.bf16.mxu0 0
        %3106 = vmatpush1.bf16.msra.mxu0 %v3015
        %3107 = vmatprep.subr.bf16.mxu0 0
        %3108 = vmatpush1.bf16.msra.mxu0 %v3014
        %3109 = vmatprep.subr.bf16.mxu0 0
        %3110 = vmatpush1.bf16.msra.mxu0 %v3013
        %3111 = vmatprep.subr.bf16.mxu0 0
        %3112 = vmatpush1.bf16.msra.mxu0 %v3012
        %3113 = vmatprep.subr.bf16.mxu0 0
        %3114 = vmatpush1.bf16.msra.mxu0 %v3011
        %3115 = vmatprep.subr.bf16.mxu0 0
        %3116 = vmatpush1.bf16.msra.mxu0 %v3010
        %3117 = vmatprep.subr.bf16.mxu0 0
        %3118 = vmatpush1.bf16.msra.mxu0 %v3009
        %3119 = vmatprep.subr.bf16.mxu0 0
        %3120 = vmatpush1.bf16.msra.mxu0 %v3008
        %3121 = vmatprep.subr.bf16.mxu0 0
        %3122 = vmatpush2.bf16.msra.mxu0 %v3023
        %3123 = vmatprep.subr.bf16.mxu0 0
        %3124 = vmatpush2.bf16.msra.mxu0 %v3022
        %3125 = vmatprep.subr.bf16.mxu0 0
        %3126 = vmatpush2.bf16.msra.mxu0 %v3021
        %3127 = vmatprep.subr.bf16.mxu0 0
        %3128 = vmatpush2.bf16.msra.mxu0 %v3020
        %3129 = vmatprep.subr.bf16.mxu0 0
        %3130 = vmatpush2.bf16.msra.mxu0 %v3019
        %3131 = vmatprep.subr.bf16.mxu0 0
        %3132 = vmatpush2.bf16.msra.mxu0 %v3018
        %3133 = vmatprep.subr.bf16.mxu0 0
        %3134 = vmatpush2.bf16.msra.mxu0 %v3017
        %3135 = vmatprep.subr.bf16.mxu0 0
        %3136 = vmatpush2.bf16.msra.mxu0 %v3016
        %3137 = vmatprep.mubr.bf16.mxu0 %v2791
        %3138 = vmatmul.mubr.bf16.gmra.mxu0 %v2790
        %v3139 = vpop.f32.mrf.mxu0
        %v3140 = vadd.f32 %v3091, %v3139
        %v3141 = vpop.f32.mrf.mxu0
        %v3142 = vpop.f32.mrf.mxu0
        %v3143 = vadd.f32 %v3094, %v3142
        %v3144 = vpop.f32.mrf.mxu0
        %3145 = vmatprep.mubr.bf16.mxu0 %v2795
        %3146 = vmatmul.mubr.bf16.gmra.mxu0 %v2794
        %v3147 = vpop.f32.mrf.mxu0
        %v3148 = vadd.f32 %v3099, %v3147
        %v3149 = vpop.f32.mrf.mxu0
        %v3150 = vpop.f32.mrf.mxu0
        %v3151 = vadd.f32 %v3102, %v3150
        %v3152 = vpop.f32.mrf.mxu0
        %3153 = vdwg.mxu0
        %v3154 = vadd.f32 %v2274, %v3140
        %v3155 = vadd.f32 %v2275, %v3143
        %v3156 = vadd.f32 %v2276, %v3148
        %v3157 = vadd.f32 %v2277, %v3151
        %3158 = vst [vmem:[#allocation2] sm:$0xff] %v3154
        %3159 = vst [vmem:[#allocation2 + $0x8] sm:$0xff] %v3155
        %3160 = vst [vmem:[#allocation2 + $0x10] sm:$0xff] %v3156
        %3161 = vst [vmem:[#allocation2 + $0x18] sm:$0xff] %v3157
        %p3162 = scmp.eq.s32.totalorder %s44, 1
        // Predicated region
        $region101: #{sd1_clip_forward.1} parent=63 // pred_check
          %p3163 = pneg %p3162
        $region102: #{sd1_clip_forward.1} parent=63 // pred_check_branch
          %3165 = sbr.rel (%p3163) target = $region104
        $region103: #{sd1_clip_forward.1} parent=63 // pred_region
          %v3166 = vld [vmem:[%s10] sm:$0x3]
          %3167 = vadd.xlane.f32.xlu0 %v3154
          %v3168 = vpop.xlane.xlu0 %3167
          %3169 = vadd.xlane.f32.xlu0 %v3155
          %v3170 = vpop.xlane.xlu0 %3169
          %3171 = vadd.xlane.f32.xlu0 %v3156
          %v3172 = vpop.xlane.xlu0 %3171
          %3173 = vadd.xlane.f32.xlu0 %v3157
          %v3174 = vpop.xlane.xlu0 %3173
          %v3175 = vmul.f32 %v3168, %v686
          %v3176 = vmul.f32 %v3170, %v686
          %v3177 = vmul.f32 %v3172, %v686
          %v3178 = vmul.f32 %v3174, %v686
          %v3179 = vsub.f32 %v3154, %v3175
          %v3180 = vsub.f32 %v3155, %v3176
          %v3181 = vsub.f32 %v3156, %v3177
          %v3182 = vsub.f32 %v3157, %v3178
          %v3183 = vmul.f32 %v3179, %v3179
          %v3184 = vmul.f32 %v3180, %v3180
          %v3185 = vmul.f32 %v3181, %v3181
          %v3186 = vmul.f32 %v3182, %v3182
          %3187 = vadd.xlane.f32.xlu0 %v3183
          %v3188 = vpop.xlane.xlu0 %3187
          %3189 = vadd.xlane.f32.xlu0 %v3184
          %v3190 = vpop.xlane.xlu0 %3189
          %3191 = vadd.xlane.f32.xlu0 %v3185
          %v3192 = vpop.xlane.xlu0 %3191
          %3193 = vadd.xlane.f32.xlu0 %v3186
          %v3194 = vpop.xlane.xlu0 %3193
          %v3195 = vmul.f32 %v3188, %v686
          %v3196 = vmul.f32 %v3190, %v686
          %v3197 = vmul.f32 %v3192, %v686
          %v3198 = vmul.f32 %v3194, %v686
          %v3199 = vadd.f32 %v3195, 1e-05
          %v3200 = vadd.f32 %v3196, 1e-05
          %v3201 = vadd.f32 %v3197, 1e-05
          %v3202 = vadd.f32 %v3198, 1e-05
          %v3203 = vrsqrt.pop %v3199
          %v3204 = vrsqrt.pop %v3200
          %v3205 = vrsqrt.pop %v3201
          %v3206 = vrsqrt.pop %v3202
          %v3207 = vmul.f32 %v3179, %v3203
          %v3208 = vmul.f32 %v3180, %v3204
          %v3209 = vmul.f32 %v3181, %v3205
          %v3210 = vmul.f32 %v3182, %v3206
          %v3211 = vlaneseq
          %v3212 = vshrl.u32 %v3211, 7
          %v3213 = vsub.s32 0, %v3212
          %v3214 = vrot.slane %v3166, %v3213
          %v3215 = vmul.f32 %v3207, %v3214
          %v3216 = vmul.f32 %v3208, %v3214
          %v3217 = vmul.f32 %v3209, %v3214
          %v3218 = vmul.f32 %v3210, %v3214
          %v3219 = vlaneseq
          %v3220 = vshrl.u32 %v3219, 7
          %v3221 = vsub.s32 1, %v3220
          %v3222 = vrot.slane %v3166, %v3221
          %v3223 = vadd.f32 %v3215, %v3222
          %v3224 = vadd.f32 %v3216, %v3222
          %v3225 = vadd.f32 %v3217, %v3222
          %v3226 = vadd.f32 %v3218, %v3222
          %3227 = vst [vmem:[#allocation19] sm:$0xff] %v3223
          %3228 = vst [vmem:[#allocation19 + $0x8] sm:$0xff] %v3224
          %3229 = vst [vmem:[#allocation19 + $0x10] sm:$0xff] %v3225
          %3230 = vst [vmem:[#allocation19 + $0x18] sm:$0xff] %v3226
          %s3231 = sld [smem:[#allocation4]]
          %v3232 = vlaneseq
          %v3233 = vshrl.u32 %v3232, 7
          %v3234 = vadd.s32 %v3233, 8
          %v3235 = vstv %s3231
          %vm3236 = vcmp.eq.s32.totalorder %v3233, %v3235
          %vm3237 = vcmp.eq.s32.totalorder %v3234, %v3235
          %v3238 = vsel %vm3236, 1, 0
          %v3239 = vsel %vm3237, 1, 0
          %vm3240 = vcmp.eq.s32.totalorder %v3238, 1
          %vm3241 = vcmp.eq.s32.totalorder %v3239, 1
          %v3242 = vsel %vm3240, %v3223, 0.0
          %v3243 = vsel %vm3241, %v3224, 0.0
          %v3244 = vadd.f32 %v3242, %v3243
          %v3245 = vrot.slane %v3244, 4
          %v3246 = vadd.f32 %v3244, %v3245
          %v3247 = vrot.slane %v3246, 2
          %v3248 = vadd.f32 %v3246, %v3247
          %v3249 = vrot.slane %v3248, 1
          %v3250 = vadd.f32 %v3248, %v3249
          %s3251 = sld [smem:[#allocation4 + $0x1]]
          %v3252 = vstv %s3251
          %vm3253 = vcmp.eq.s32.totalorder %v3233, %v3252
          %vm3254 = vcmp.eq.s32.totalorder %v3234, %v3252
          %v3255 = vsel %vm3253, 1, 0
          %v3256 = vsel %vm3254, 1, 0
          %vm3257 = vcmp.eq.s32.totalorder %v3255, 1
          %vm3258 = vcmp.eq.s32.totalorder %v3256, 1
          %v3259 = vsel %vm3257, %v3225, 0.0
          %v3260 = vsel %vm3258, %v3226, 0.0
          %v3261 = vadd.f32 %v3259, %v3260
          %v3262 = vrot.slane %v3261, 4
          %v3263 = vadd.f32 %v3261, %v3262
          %v3264 = vrot.slane %v3263, 2
          %v3265 = vadd.f32 %v3263, %v3264
          %v3266 = vrot.slane %v3265, 1
          %v3267 = vadd.f32 %v3265, %v3266
          %vm3268 = vcmask 1040384
          %v3269 = vsel %vm3268, %v3250, %v3267
          %v3270 = vld [vmem:[#allocation17] sm:$0xff]
          %v3271 = vld [vmem:[#allocation17 + $0x8] sm:$0xff]
          %v3272 = vld [vmem:[#allocation17 + $0x10] sm:$0xff]
          %v3273 = vld [vmem:[#allocation17 + $0x18] sm:$0xff]
          %v3274 = vld [vmem:[#allocation17 + $0x20] sm:$0xff]
          %v3275 = vld [vmem:[#allocation17 + $0x28] sm:$0xff]
          %v3276 = vld [vmem:[#allocation17 + $0x30] sm:$0xff]
          %v3277 = vld [vmem:[#allocation17 + $0x38] sm:$0xff]
          %v3278 = vld [vmem:[#allocation17 + $0x40] sm:$0xff]
          %v3279 = vld [vmem:[#allocation17 + $0x48] sm:$0xff]
          %v3280 = vld [vmem:[#allocation17 + $0x50] sm:$0xff]
          %v3281 = vld [vmem:[#allocation17 + $0x58] sm:$0xff]
          %v3282 = vld [vmem:[#allocation17 + $0x60] sm:$0xff]
          %v3283 = vld [vmem:[#allocation17 + $0x68] sm:$0xff]
          %v3284 = vld [vmem:[#allocation17 + $0x70] sm:$0xff]
          %v3285 = vld [vmem:[#allocation17 + $0x78] sm:$0xff]
          %3286 = vmatprep.subr.mxu0 0.0
          %3287 = vmatpush1.msra.mxu0 %v3285
          %3288 = vmatprep.subr.mxu0 0.0
          %3289 = vmatpush1.msra.mxu0 %v3284
          %3290 = vmatprep.subr.mxu0 0.0
          %3291 = vmatpush1.msra.mxu0 %v3283
          %3292 = vmatprep.subr.mxu0 0.0
          %3293 = vmatpush1.msra.mxu0 %v3282
          %3294 = vmatprep.subr.mxu0 0.0
          %3295 = vmatpush1.msra.mxu0 %v3281
          %3296 = vmatprep.subr.mxu0 0.0
          %3297 = vmatpush1.msra.mxu0 %v3280
          %3298 = vmatprep.subr.mxu0 0.0
          %3299 = vmatpush1.msra.mxu0 %v3279
          %3300 = vmatprep.subr.mxu0 0.0
          %3301 = vmatpush1.msra.mxu0 %v3278
          %3302 = vmatprep.subr.mxu0 0.0
          %3303 = vmatpush1.msra.mxu0 %v3277
          %3304 = vmatprep.subr.mxu0 0.0
          %3305 = vmatpush1.msra.mxu0 %v3276
          %3306 = vmatprep.subr.mxu0 0.0
          %3307 = vmatpush1.msra.mxu0 %v3275
          %3308 = vmatprep.subr.mxu0 0.0
          %3309 = vmatpush1.msra.mxu0 %v3274
          %3310 = vmatprep.subr.mxu0 0.0
          %3311 = vmatpush1.msra.mxu0 %v3273
          %3312 = vmatprep.subr.mxu0 0.0
          %3313 = vmatpush1.msra.mxu0 %v3272
          %3314 = vmatprep.subr.mxu0 0.0
          %3315 = vmatpush1.msra.mxu0 %v3271
          %3316 = vmatprep.subr.mxu0 0.0
          %3317 = vmatpush1.msra.mxu0 %v3270
          %3318 = vmatprep.subr.mxu0 0.0
          %3319 = vmatpush2.msra.mxu0 0.0
          %3320 = vmatprep.subr.mxu0 0.0
          %3321 = vmatpush2.msra.mxu0 0.0
          %3322 = vmatprep.subr.mxu0 0.0
          %3323 = vmatpush2.msra.mxu0 0.0
          %3324 = vmatprep.subr.mxu0 0.0
          %3325 = vmatpush2.msra.mxu0 0.0
          %3326 = vmatprep.subr.mxu0 0.0
          %3327 = vmatpush2.msra.mxu0 0.0
          %3328 = vmatprep.subr.mxu0 0.0
          %3329 = vmatpush2.msra.mxu0 0.0
          %3330 = vmatprep.subr.mxu0 0.0
          %3331 = vmatpush2.msra.mxu0 0.0
          %3332 = vmatprep.subr.mxu0 0.0
          %3333 = vmatpush2.msra.mxu0 0.0
          %3334 = vmatprep.subr.mxu0 0.0
          %3335 = vmatpush2.msra.mxu0 0.0
          %3336 = vmatprep.subr.mxu0 0.0
          %3337 = vmatpush2.msra.mxu0 0.0
          %3338 = vmatprep.subr.mxu0 0.0
          %3339 = vmatpush2.msra.mxu0 0.0
          %3340 = vmatprep.subr.mxu0 0.0
          %3341 = vmatpush2.msra.mxu0 0.0
          %3342 = vmatprep.subr.mxu0 0.0
          %3343 = vmatpush2.msra.mxu0 0.0
          %3344 = vmatprep.subr.mxu0 0.0
          %3345 = vmatpush2.msra.mxu0 0.0
          %3346 = vmatprep.subr.mxu0 0.0
          %3347 = vmatpush2.msra.mxu0 0.0
          %3348 = vmatprep.subr.mxu0 0.0
          %3349 = vmatpush2.msra.mxu0 0.0
          %3350 = vmatprep.mubr.f32.mxu0 0.0
          %3351 = vmatmul.mubr.f32.gmra.mxu0 %v3269
          %v3352 = vpop.f32.mrf.mxu0
          %v3353 = vadd.f32 0.0, %v3352
          %v3354 = vpop.f32.mrf.mxu0
          %3355 = vdwg.mxu0
          %3356 = vst [vmem:[#allocation20] sm:$0x3] %v3353
        $region104: #{sd1_clip_forward.1} parent=63 // pred_fallthru
          _
        // Predicated region
        $region105: #{sd1_clip_forward.1} parent=63 // pred_check
          %p3357 = pneg %p323
        $region106: #{sd1_clip_forward.1} parent=63 // pred_check_branch
          %3359 = sbr.rel (%p3357) target = $region108
        $region107: #{sd1_clip_forward.1} parent=63 // pred_region
          %s3361 = ssub.s32 512, 512
          %3362 = vsyncadd [#allocation7], %s3361
          %s3363 = sshll.u32 [#allocation19], 4
          %s3364 = int_to_ptr.vmem [resolvable:$true] %s3363
          %3369 = dma.vmem_to_hbm [thread:$0]  %s3364, 512, %s12, [#allocation7], 128, 128, 8
        $region108: #{sd1_clip_forward.1} parent=63 // pred_fallthru
          _
        // Predicated region
        $region109: #{sd1_clip_forward.1} parent=63 // pred_check
          %p3370 = pneg %p344
        $region110: #{sd1_clip_forward.1} parent=63 // pred_check_branch
          %3372 = sbr.rel (%p3370) target = $region112
        $region111: #{sd1_clip_forward.1} parent=63 // pred_region
          %s3374 = ssub.s32 32, 32
          %3375 = vsyncadd [#allocation21], %s3374
          %s3377 = sshll.u32 [#allocation20], 4
          %s3378 = int_to_ptr.vmem [resolvable:$true] %s3377
          %3380 = dma.vmem_to_hbm [thread:$0]  %s3378, 32, %s13, [#allocation21]
        $region112: #{sd1_clip_forward.1} parent=63 // pred_fallthru
          _
        // Predicated region
        $region113: #{sd1_clip_forward.1} parent=63 // pred_check
          %p3381 = pneg %p323
        $region114: #{sd1_clip_forward.1} parent=63 // pred_check_branch
          %3383 = sbr.rel (%p3381) target = $region116
        $region115: #{sd1_clip_forward.1} parent=63 // pred_region
          %3384 = dma.done [#allocation7], 512
        $region116: #{sd1_clip_forward.1} parent=63 // pred_fallthru
          _
        // Predicated region
        $region117: #{sd1_clip_forward.1} parent=63 // pred_check
          %p3385 = pneg %p344
        $region118: #{sd1_clip_forward.1} parent=63 // pred_check_branch
          %3387 = sbr.rel (%p3385) target = $region120
        $region119: #{sd1_clip_forward.1} parent=63 // pred_region
          %3388 = dma.done [#allocation21], 32
        $region120: #{sd1_clip_forward.1} parent=63 // pred_fallthru
          _
      $region64: #{sd1_clip_forward.1} parent=5 // pred_fallthru
        _
      %p3389 = scmp.le.s32.totalorder 2, %s39
      // Predicated region
      $region121: #{sd1_clip_forward.1} parent=5 // pred_check
        %p3390 = pneg %p3389
      $region122: #{sd1_clip_forward.1} parent=5 // pred_check_branch
        %3392 = sbr.rel (%p3390) target = $region124
      $region123: #{sd1_clip_forward.1} parent=5 // pred_region
        %s3393 = ssub.s32 %s39, 2
      $region124: #{sd1_clip_forward.1} parent=5 // pred_fallthru
        _
    $region6: #{sd1_clip_forward.1} parent=1 // loop_footer
      %s43 = sadd.s32 1, %s39
    $region7: #{sd1_clip_forward.1} parent=1 // loop_footer_branch
      %38 = sbr.rel target = $region3
    $region8: #{sd1_clip_forward.1} parent=1 // loop_exit
      _
    %3394 = vsyncpa [#allocation6], 1
    %s3395 = scalar_lea.sflag [#allocation6], 1
    %3396 = vsyncpa %s3395, 1
    %3397 = vsyncpa [#allocation9], 1
    %s3398 = scalar_lea.sflag [#allocation9], 1
    %3399 = vsyncpa %s3398, 1
    %3400 = vsyncpa [#allocation12], 1
    %s3401 = scalar_lea.sflag [#allocation12], 1
    %3402 = vsyncpa %s3401, 1
    %3403 = vsyncpa [#allocation15], 1
    %s3404 = scalar_lea.sflag [#allocation15], 1
    %3405 = vsyncpa %s3404, 1
    %3406 = vsyncpa [#allocation18], 1
    %3407 = vsyncpa [#allocation7], 1
    %s3408 = scalar_lea.sflag [#allocation7], 1
    %3409 = vsyncpa %s3408, 1
    %3410 = vsyncpa [#allocation21], 1

</llo_original>
